<compile_context>
chip_gen: v6e
topology: v6e:2x2x1
jax: 0.10.0
libtpu: 0.0.40
codegen_flags: <defaults>
</compile_context>

<pallas_src>
import functools

import jax
import jax.numpy as jnp
from jax.experimental import pallas as pl
from jax.experimental.pallas import tpu as pltpu

# ----- model hyperparameters (small, synthetic) -----
B = 2          # batch
SRC = 16       # encoder sequence length
TGT = 8        # decoder sequence length
H = 32         # hidden size
NH = 4         # attention heads
DH = H // NH   # head dim
FF = 64        # feed-forward size
VOCAB = 128    # vocab size (lane-dense LM head output)
MAXPOS = 32
NTYPE = 2
N_ENC = 1
N_DEC = 1

NEG = -1e9


# =====================  in-kernel helpers (traced inline)  =====================

def _ln_f32(x, g, b, eps=1e-12):
    """LayerNorm over the last axis, f32 math.  g, b are [1, D]."""
    mu = jnp.mean(x, axis=-1, keepdims=True)
    var = jnp.mean(jnp.square(x - mu), axis=-1, keepdims=True)
    return (x - mu) * jax.lax.rsqrt(var + eps) * g + b


def _attn(x, kv, add_mask, w4, v6, hms, scale):
    """Attention sub-layer: QKV proj + MHA + out proj + residual + LN.

    x: [Sq,H] f32, kv: [Skv,H] f32, add_mask broadcastable to [Sq,Skv],
    w4: [4,H,H] bf16 (q,k,v,o), v6: [6,H] f32 (bq,bk,bv,bo,ln_g,ln_b),
    hms: precomputed per-head column masks [1,H].
    """
    bq, bk, bv, bo = v6[0:1, :], v6[1:2, :], v6[2:3, :], v6[3:4, :]
    g, beta = v6[4:5, :], v6[5:6, :]
    xb = x.astype(jnp.bfloat16)
    kvb = kv.astype(jnp.bfloat16)
    q = jnp.dot(xb, w4[0], preferred_element_type=jnp.float32) + bq
    k = jnp.dot(kvb, w4[1], preferred_element_type=jnp.float32) + bk
    v = jnp.dot(kvb, w4[2], preferred_element_type=jnp.float32) + bv
    kt = k.T

    # Head selection via a column mask: (q * hm_h) @ k.T == q_h @ k_h.T, and
    # p @ (v * hm_h) places head-h context directly in its output columns.
    # Avoids 8-wide lane slices / per-head relayouts; MXU stays full-width.
    ctx = jnp.zeros_like(q)
    for hm in hms:                       # static unroll (NH = 4)
        s = jnp.dot(q * hm, kt, preferred_element_type=jnp.float32) * scale + add_mask
        s = s - jnp.max(s, axis=-1, keepdims=True)
        p = jnp.exp(s)
        p = p * pl.reciprocal(jnp.sum(p, axis=-1, keepdims=True), approx=True)
        ctx = ctx + jnp.dot(p, v * hm, preferred_element_type=jnp.float32)

    out = jnp.dot(ctx.astype(jnp.bfloat16), w4[3], preferred_element_type=jnp.float32) + bo
    return _ln_f32(x + out, g, beta)


def _ffn(x, w1, b1, w2, v3):
    """FFN sub-layer: FF1 + GELU + FF2 + residual + LN.  w1/w2 bf16, b1 [1,FF], v3 [3,H]."""
    b2, g, beta = v3[0:1, :], v3[1:2, :], v3[2:3, :]
    h = jnp.dot(x.astype(jnp.bfloat16), w1, preferred_element_type=jnp.float32) + b1
    h = jax.nn.gelu(h, approximate=True)
    y = jnp.dot(h.astype(jnp.bfloat16), w2, preferred_element_type=jnp.float32) + b2
    return _ln_f32(x + y, g, beta)


# =====================  single fused Pallas kernel  =====================

def _abs_summarizer_kernel(
    enc_x_ref, dec_x_ref, src_keep_ref, dec_keep_ref, emb_ln_ref,
    enc_attn_w_ref, enc_attn_v_ref, enc_ff1_w_ref, enc_ff1_b_ref,
    enc_ff2_w_ref, enc_ffn_v_ref,
    dec_self_w_ref, dec_self_v_ref, dec_cross_w_ref, dec_cross_v_ref,
    dec_ff1_w_ref, dec_ff1_b_ref, dec_ff2_w_ref, dec_ffn_v_ref,
    lm_w_ref, lm_b_ref,
    logits_ref,
    *, n_enc, n_dec, nh, dh, scale):
    f32 = jnp.float32

    # Per-head column masks: computed once, reused by every attention sub-layer.
    col = jax.lax.broadcasted_iota(jnp.int32, (1, nh * dh), 1)
    hms = [((col >= h * dh) & (col < (h + 1) * dh)).astype(f32) for h in range(nh)]

    # Additive masks built in-kernel from [1, Skv] key-keep masks (no HBM mask tensors).
    src_keep = src_keep_ref[0].astype(f32)                # [1, SRC]
    dec_keep = dec_keep_ref[0].astype(f32)                # [1, TGT]
    enc_mask = (1.0 - src_keep) * NEG                     # [1, SRC] -> broadcast over rows
    cross_mask = enc_mask

    stgt = dec_x_ref.shape[1]
    r = jax.lax.broadcasted_iota(jnp.int32, (stgt, stgt), 0)
    c = jax.lax.broadcasted_iota(jnp.int32, (stgt, stgt), 1)
    causal = (c <= r).astype(f32)
    dec_mask = (1.0 - causal * dec_keep) * NEG            # [TGT, TGT]

    emb_ln = emb_ln_ref[...].astype(f32)                  # [2, 2, H] (enc/dec x gamma/beta)

    # ---------------- encoder stack (VMEM-resident) ----------------
    x = _ln_f32(enc_x_ref[0].astype(f32), emb_ln[0, 0:1, :], emb_ln[0, 1:2, :])
    for li in range(n_enc):
        x = _attn(x, x, enc_mask, enc_attn_w_ref[li], enc_attn_v_ref[li].astype(f32),
                  hms, scale)
        x = _ffn(x, enc_ff1_w_ref[li], enc_ff1_b_ref[li].astype(f32),
                 enc_ff2_w_ref[li], enc_ffn_v_ref[li].astype(f32))
    mem = x                                               # encoder hidden states, stays in VMEM

    # ---------------- decoder stack + fused LM head ----------------
    y = _ln_f32(dec_x_ref[0].astype(f32), emb_ln[1, 0:1, :], emb_ln[1, 1:2, :])
    for li in range(n_dec):
        y = _attn(y, y, dec_mask, dec_self_w_ref[li], dec_self_v_ref[li].astype(f32),
                  hms, scale)
        y = _attn(y, mem, cross_mask, dec_cross_w_ref[li], dec_cross_v_ref[li].astype(f32),
                  hms, scale)
        y = _ffn(y, dec_ff1_w_ref[li], dec_ff1_b_ref[li].astype(f32),
                 dec_ff2_w_ref[li], dec_ffn_v_ref[li].astype(f32))

    logits = jnp.dot(y.astype(jnp.bfloat16), lm_w_ref[...],
                     preferred_element_type=f32) + lm_b_ref[...].astype(f32)
    logits_ref[0] = logits.astype(logits_ref.dtype)       # [TGT, VOCAB=128] lane-dense store


# =====================  pallas_call wrapper  =====================

def _const_spec(shape):
    nd = len(shape)
    return pl.BlockSpec(tuple(shape), lambda b, _n=nd: (0,) * _n)


def _batch_spec(full_shape):
    nd = len(full_shape)
    return pl.BlockSpec((1,) + tuple(full_shape[1:]),
                        lambda b, _n=nd: (b,) + (0,) * (_n - 1))


def abs_summarizer_fused(p, enc_x0, dec_x0, src_keep, dec_keep):
    bsz, _, _ = enc_x0.shape
    stgt = dec_x0.shape[1]
    vocab = p["lm_w"].shape[1]

    kernel = functools.partial(_abs_summarizer_kernel, n_enc=N_ENC, n_dec=N_DEC,
                               nh=NH, dh=DH, scale=1.0 / float(DH) ** 0.5)

    operands = [
        enc_x0, dec_x0, src_keep, dec_keep, p["emb_ln"],
        p["enc_attn_w"], p["enc_attn_v"], p["enc_ff1_w"], p["enc_ff1_b"],
        p["enc_ff2_w"], p["enc_ffn_v"],
        p["dec_self_w"], p["dec_self_v"], p["dec_cross_w"], p["dec_cross_v"],
        p["dec_ff1_w"], p["dec_ff1_b"], p["dec_ff2_w"], p["dec_ffn_v"],
        p["lm_w"], p["lm_b"],
    ]
    in_specs = ([_batch_spec(enc_x0.shape), _batch_spec(dec_x0.shape),
                 _batch_spec(src_keep.shape), _batch_spec(dec_keep.shape)]
                + [_const_spec(a.shape) for a in operands[4:]])

    return pl.pallas_call(
        kernel,
        out_shape=jax.ShapeDtypeStruct((bsz, stgt, vocab), jnp.float32),
        grid=(bsz,),
        in_specs=in_specs,
        out_specs=pl.BlockSpec((1, stgt, vocab), lambda b: (b, 0, 0)),
        compiler_params=pltpu.CompilerParams(dimension_semantics=("parallel",)),
    )(*operands)


# =====================  model glue (XLA only for tiny gathers)  =====================

def abs_summarizer_forward(p, input_ids, attention_mask, token_type_ids,
                           decoder_input_ids, decoder_attention_mask):
    bsz, ssrc = input_ids.shape
    stgt = decoder_input_ids.shape[1]
    # Embedding gathers (+ adds) stay in XLA; decoder shares word embeddings with encoder.
    enc_x0 = (p["word_emb"][input_ids] + p["type_emb"][token_type_ids]
              + p["enc_pos_emb"][:ssrc][None, :, :])
    dec_x0 = p["word_emb"][decoder_input_ids] + p["dec_pos_emb"][:stgt][None, :, :]
    src_keep = attention_mask.astype(jnp.float32).reshape(bsz, 1, ssrc)
    dec_keep = decoder_attention_mask.astype(jnp.float32).reshape(bsz, 1, stgt)
    return abs_summarizer_fused(p, enc_x0, dec_x0, src_keep, dec_keep)


# =====================  deterministic parameter init  =====================

def _attn_pack(key):
    ks = jax.random.split(key, 4)
    w = jnp.stack([jax.random.normal(ks[i], (H, H), jnp.float32) * 0.02
                   for i in range(4)]).astype(jnp.bfloat16)            # [4,H,H] (q,k,v,o)
    v = jnp.concatenate([jnp.zeros((4, H), jnp.float32),               # bq,bk,bv,bo
                         jnp.ones((1, H), jnp.float32),                # ln gamma
                         jnp.zeros((1, H), jnp.float32)], axis=0)      # ln beta
    return w, v


def _ffn_pack(key):
    k1, k2 = jax.random.split(key)
    w1 = (jax.random.normal(k1, (H, FF), jnp.float32) * 0.02).astype(jnp.bfloat16)
    w2 = (jax.random.normal(k2, (FF, H), jnp.float32) * 0.02).astype(jnp.bfloat16)
    b1 = jnp.zeros((1, FF), jnp.float32)
    v3 = jnp.concatenate([jnp.zeros((1, H), jnp.float32),              # b2
                          jnp.ones((1, H), jnp.float32),               # ln gamma
                          jnp.zeros((1, H), jnp.float32)], axis=0)     # ln beta
    return w1, b1, w2, v3


def init_params(key):
    keys = jax.random.split(key, 8)
    p = {
        "word_emb": jax.random.normal(keys[0], (VOCAB, H), jnp.float32) * 0.02,
        "type_emb": jax.random.normal(keys[1], (NTYPE, H), jnp.float32) * 0.02,
        "enc_pos_emb": jax.random.normal(keys[2], (MAXPOS, H), jnp.float32) * 0.02,
        "dec_pos_emb": jax.random.normal(keys[3], (MAXPOS, H), jnp.float32) * 0.02,
        "emb_ln": jnp.stack([jnp.stack([jnp.ones((H,)), jnp.zeros((H,))]),
                             jnp.stack([jnp.ones((H,)), jnp.zeros((H,))])]).astype(jnp.float32),
        "lm_w": (jax.random.normal(keys[4], (H, VOCAB), jnp.float32) * 0.02).astype(jnp.bfloat16),
        "lm_b": jnp.zeros((1, VOCAB), jnp.float32),
    }

    enc_aw, enc_av, enc_f1w, enc_f1b, enc_f2w, enc_fv = [], [], [], [], [], []
    for li in range(N_ENC):
        ka, kf = jax.random.split(jax.random.fold_in(keys[5], li))
        w, v = _attn_pack(ka)
        w1, b1, w2, v3 = _ffn_pack(kf)
        enc_aw.append(w); enc_av.append(v)
        enc_f1w.append(w1); enc_f1b.append(b1); enc_f2w.append(w2); enc_fv.append(v3)
    p["enc_attn_w"] = jnp.stack(enc_aw)
    p["enc_attn_v"] = jnp.stack(enc_av)
    p["enc_ff1_w"] = jnp.stack(enc_f1w)
    p["enc_ff1_b"] = jnp.stack(enc_f1b)
    p["enc_ff2_w"] = jnp.stack(enc_f2w)
    p["enc_ffn_v"] = jnp.stack(enc_fv)

    ds_w, ds_v, dc_w, dc_v, d_f1w, d_f1b, d_f2w, d_fv = [], [], [], [], [], [], [], []
    for li in range(N_DEC):
        ks_, kc_, kf_ = jax.random.split(jax.random.fold_in(keys[6], li), 3)
        w, v = _attn_pack(ks_); ds_w.append(w); ds_v.append(v)
        w, v = _attn_pack(kc_); dc_w.append(w); dc_v.append(v)
        w1, b1, w2, v3 = _ffn_pack(kf_)
        d_f1w.append(w1); d_f1b.append(b1); d_f2w.append(w2); d_fv.append(v3)
    p["dec_self_w"] = jnp.stack(ds_w)
    p["dec_self_v"] = jnp.stack(ds_v)
    p["dec_cross_w"] = jnp.stack(dc_w)
    p["dec_cross_v"] = jnp.stack(dc_v)
    p["dec_ff1_w"] = jnp.stack(d_f1w)
    p["dec_ff1_b"] = jnp.stack(d_f1b)
    p["dec_ff2_w"] = jnp.stack(d_f2w)
    p["dec_ffn_v"] = jnp.stack(d_fv)
    return p


# =====================  main  =====================

if __name__ == "__main__":
    key = jax.random.PRNGKey(0)
    k_param, k_src, k_tgt = jax.random.split(key, 3)

    params = init_params(k_param)

    input_ids = jax.random.randint(k_src, (B, SRC), 0, VOCAB, dtype=jnp.int32)
    attention_mask = jnp.ones((B, SRC), jnp.int32).at[1, SRC - 4:].set(0)  # pad tail of sample 1
    token_type_ids = jnp.zeros((B, SRC), jnp.int32)
    decoder_input_ids = jax.random.randint(k_tgt, (B, TGT), 0, VOCAB, dtype=jnp.int32)
    decoder_attention_mask = jnp.ones((B, TGT), jnp.int32)

    logits = abs_summarizer_forward(params, input_ids, attention_mask, token_type_ids,
                                    decoder_input_ids, decoder_attention_mask)
    logits = jax.block_until_ready(logits)

    assert logits.shape == (B, TGT, VOCAB), logits.shape
    assert bool(jnp.all(jnp.isfinite(logits)))
    print("KERNEL_OK")
</pallas_src>

<mosaic_0001>
module attributes {stable_mosaic.version = 11 : i64} {
  func.func @_abs_summarizer_kernel(%arg0: i32, %arg1: memref<1x16x32xf32, #tpu.memory_space<vmem>>, %arg2: memref<1x8x32xf32, #tpu.memory_space<vmem>>, %arg3: memref<1x1x16xf32, #tpu.memory_space<vmem>>, %arg4: memref<1x1x8xf32, #tpu.memory_space<vmem>>, %arg5: memref<2x2x32xf32, #tpu.memory_space<vmem>>, %arg6: memref<1x4x32x32xbf16, #tpu.memory_space<vmem>>, %arg7: memref<1x6x32xf32, #tpu.memory_space<vmem>>, %arg8: memref<1x32x64xbf16, #tpu.memory_space<vmem>>, %arg9: memref<1x1x64xf32, #tpu.memory_space<vmem>>, %arg10: memref<1x64x32xbf16, #tpu.memory_space<vmem>>, %arg11: memref<1x3x32xf32, #tpu.memory_space<vmem>>, %arg12: memref<1x4x32x32xbf16, #tpu.memory_space<vmem>>, %arg13: memref<1x6x32xf32, #tpu.memory_space<vmem>>, %arg14: memref<1x4x32x32xbf16, #tpu.memory_space<vmem>>, %arg15: memref<1x6x32xf32, #tpu.memory_space<vmem>>, %arg16: memref<1x32x64xbf16, #tpu.memory_space<vmem>>, %arg17: memref<1x1x64xf32, #tpu.memory_space<vmem>>, %arg18: memref<1x64x32xbf16, #tpu.memory_space<vmem>>, %arg19: memref<1x3x32xf32, #tpu.memory_space<vmem>>, %arg20: memref<32x128xbf16, #tpu.memory_space<vmem>>, %arg21: memref<1x128xf32, #tpu.memory_space<vmem>>, %arg22: memref<1x8x128xf32, #tpu.memory_space<vmem>>) attributes {dimension_semantics = [#tpu.dimension_semantics<parallel>], iteration_bounds = array<i64: 2>, scalar_prefetch = 0 : i64, scratch_operands = 0 : i64, tpu.core_type = #tpu.core_type<tc>, window_params = [{transform_indices = @transform_0, window_bounds = array<i64: 1, 16, 32>}, {transform_indices = @transform_1, window_bounds = array<i64: 1, 8, 32>}, {transform_indices = @transform_2, window_bounds = array<i64: 1, 1, 16>}, {transform_indices = @transform_3, window_bounds = array<i64: 1, 1, 8>}, {pipeline_mode = #tpu.pipeline_mode<synchronous>, transform_indices = @transform_4, window_bounds = array<i64: 2, 2, 32>}, {pipeline_mode = #tpu.pipeline_mode<synchronous>, transform_indices = @transform_5, window_bounds = array<i64: 1, 4, 32, 32>}, {pipeline_mode = #tpu.pipeline_mode<synchronous>, transform_indices = @transform_6, window_bounds = array<i64: 1, 6, 32>}, {pipeline_mode = #tpu.pipeline_mode<synchronous>, transform_indices = @transform_7, window_bounds = array<i64: 1, 32, 64>}, {pipeline_mode = #tpu.pipeline_mode<synchronous>, transform_indices = @transform_8, window_bounds = array<i64: 1, 1, 64>}, {pipeline_mode = #tpu.pipeline_mode<synchronous>, transform_indices = @transform_9, window_bounds = array<i64: 1, 64, 32>}, {pipeline_mode = #tpu.pipeline_mode<synchronous>, transform_indices = @transform_10, window_bounds = array<i64: 1, 3, 32>}, {pipeline_mode = #tpu.pipeline_mode<synchronous>, transform_indices = @transform_11, window_bounds = array<i64: 1, 4, 32, 32>}, {pipeline_mode = #tpu.pipeline_mode<synchronous>, transform_indices = @transform_12, window_bounds = array<i64: 1, 6, 32>}, {pipeline_mode = #tpu.pipeline_mode<synchronous>, transform_indices = @transform_13, window_bounds = array<i64: 1, 4, 32, 32>}, {pipeline_mode = #tpu.pipeline_mode<synchronous>, transform_indices = @transform_14, window_bounds = array<i64: 1, 6, 32>}, {pipeline_mode = #tpu.pipeline_mode<synchronous>, transform_indices = @transform_15, window_bounds = array<i64: 1, 32, 64>}, {pipeline_mode = #tpu.pipeline_mode<synchronous>, transform_indices = @transform_16, window_bounds = array<i64: 1, 1, 64>}, {pipeline_mode = #tpu.pipeline_mode<synchronous>, transform_indices = @transform_17, window_bounds = array<i64: 1, 64, 32>}, {pipeline_mode = #tpu.pipeline_mode<synchronous>, transform_indices = @transform_18, window_bounds = array<i64: 1, 3, 32>}, {pipeline_mode = #tpu.pipeline_mode<synchronous>, transform_indices = @transform_19, window_bounds = array<i64: 32, 128>}, {pipeline_mode = #tpu.pipeline_mode<synchronous>, transform_indices = @transform_20, window_bounds = array<i64: 1, 128>}, {transform_indices = @transform_21, window_bounds = array<i64: 1, 8, 128>}]} {
    %0 = tpu.iota {dimensions = array<i32: 1>} : vector<1x32xi32>
    %c0_i32 = arith.constant 0 : i32
    %1 = vector.broadcast %c0_i32 : i32 to vector<1x32xi32>
    %2 = arith.cmpi sge, %0, %1 : vector<1x32xi32>
    %c8_i32 = arith.constant 8 : i32
    %3 = vector.broadcast %c8_i32 : i32 to vector<1x32xi32>
    %4 = arith.cmpi slt, %0, %3 : vector<1x32xi32>
    %5 = arith.andi %2, %4 : vector<1x32xi1>
    %6 = arith.extui %5 : vector<1x32xi1> to vector<1x32xi32>
    %7 = arith.sitofp %6 : vector<1x32xi32> to vector<1x32xf32>
    %c8_i32_0 = arith.constant 8 : i32
    %8 = vector.broadcast %c8_i32_0 : i32 to vector<1x32xi32>
    %9 = arith.cmpi sge, %0, %8 : vector<1x32xi32>
    %c16_i32 = arith.constant 16 : i32
    %10 = vector.broadcast %c16_i32 : i32 to vector<1x32xi32>
    %11 = arith.cmpi slt, %0, %10 : vector<1x32xi32>
    %12 = arith.andi %9, %11 : vector<1x32xi1>
    %13 = arith.extui %12 : vector<1x32xi1> to vector<1x32xi32>
    %14 = arith.sitofp %13 : vector<1x32xi32> to vector<1x32xf32>
    %c16_i32_1 = arith.constant 16 : i32
    %15 = vector.broadcast %c16_i32_1 : i32 to vector<1x32xi32>
    %16 = arith.cmpi sge, %0, %15 : vector<1x32xi32>
    %c24_i32 = arith.constant 24 : i32
    %17 = vector.broadcast %c24_i32 : i32 to vector<1x32xi32>
    %18 = arith.cmpi slt, %0, %17 : vector<1x32xi32>
    %19 = arith.andi %16, %18 : vector<1x32xi1>
    %20 = arith.extui %19 : vector<1x32xi1> to vector<1x32xi32>
    %21 = arith.sitofp %20 : vector<1x32xi32> to vector<1x32xf32>
    %c24_i32_2 = arith.constant 24 : i32
    %22 = vector.broadcast %c24_i32_2 : i32 to vector<1x32xi32>
    %23 = arith.cmpi sge, %0, %22 : vector<1x32xi32>
    %c32_i32 = arith.constant 32 : i32
    %24 = vector.broadcast %c32_i32 : i32 to vector<1x32xi32>
    %25 = arith.cmpi slt, %0, %24 : vector<1x32xi32>
    %26 = arith.andi %23, %25 : vector<1x32xi1>
    %27 = arith.extui %26 : vector<1x32xi1> to vector<1x32xi32>
    %28 = arith.sitofp %27 : vector<1x32xi32> to vector<1x32xf32>
    %c0 = arith.constant 0 : index
    %c0_3 = arith.constant 0 : index
    %c0_4 = arith.constant 0 : index
    %29 = vector.load %arg3[%c0, %c0_3, %c0_4] : memref<1x1x16xf32, #tpu.memory_space<vmem>>, vector<1x1x16xf32>
    %30 = vector.shape_cast %29 : vector<1x1x16xf32> to vector<1x16xf32>
    %c0_5 = arith.constant 0 : index
    %c0_6 = arith.constant 0 : index
    %c0_7 = arith.constant 0 : index
    %31 = vector.load %arg4[%c0_5, %c0_6, %c0_7] : memref<1x1x8xf32, #tpu.memory_space<vmem>>, vector<1x1x8xf32>
    %32 = vector.shape_cast %31 : vector<1x1x8xf32> to vector<1x8xf32>
    %cst = arith.constant 1.000000e+00 : f32
    %33 = vector.broadcast %cst : f32 to vector<1x16xf32>
    %34 = arith.subf %33, %30 : vector<1x16xf32>
    %cst_8 = arith.constant -1.000000e+09 : f32
    %35 = vector.broadcast %cst_8 : f32 to vector<1x16xf32>
    %36 = arith.mulf %34, %35 : vector<1x16xf32>
    %37 = tpu.iota {dimensions = array<i32: 0>} : vector<8x8xi32>
    %38 = tpu.iota {dimensions = array<i32: 1>} : vector<8x8xi32>
    %39 = arith.cmpi sle, %38, %37 : vector<8x8xi32>
    %40 = arith.extui %39 : vector<8x8xi1> to vector<8x8xi32>
    %41 = arith.sitofp %40 : vector<8x8xi32> to vector<8x8xf32>
    %42 = vector.broadcast %32 : vector<1x8xf32> to vector<8x8xf32>
    %43 = arith.mulf %41, %42 : vector<8x8xf32>
    %cst_9 = arith.constant 1.000000e+00 : f32
    %44 = vector.broadcast %cst_9 : f32 to vector<8x8xf32>
    %45 = arith.subf %44, %43 : vector<8x8xf32>
    %cst_10 = arith.constant -1.000000e+09 : f32
    %46 = vector.broadcast %cst_10 : f32 to vector<8x8xf32>
    %47 = arith.mulf %45, %46 : vector<8x8xf32>
    %c0_11 = arith.constant 0 : index
    %c0_12 = arith.constant 0 : index
    %c0_13 = arith.constant 0 : index
    %48 = vector.load %arg5[%c0_11, %c0_12, %c0_13] : memref<2x2x32xf32, #tpu.memory_space<vmem>>, vector<2x2x32xf32>
    %c0_14 = arith.constant 0 : index
    %c0_15 = arith.constant 0 : index
    %c0_16 = arith.constant 0 : index
    %49 = vector.load %arg1[%c0_14, %c0_15, %c0_16] : memref<1x16x32xf32, #tpu.memory_space<vmem>>, vector<1x16x32xf32>
    %50 = vector.shape_cast %49 : vector<1x16x32xf32> to vector<16x32xf32>
    %51 = vector.extract_strided_slice %48 {offsets = [0, 0, 0], sizes = [1, 1, 32], strides = [1, 1, 1]} : vector<2x2x32xf32> to vector<1x1x32xf32>
    %52 = vector.shape_cast %51 : vector<1x1x32xf32> to vector<1x32xf32>
    %53 = vector.extract_strided_slice %48 {offsets = [0, 1, 0], sizes = [1, 1, 32], strides = [1, 1, 1]} : vector<2x2x32xf32> to vector<1x1x32xf32>
    %54 = vector.shape_cast %53 : vector<1x1x32xf32> to vector<1x32xf32>
    %cst_17 = arith.constant dense<0.000000e+00> : vector<16xf32>
    %55 = vector.multi_reduction <add>, %50, %cst_17 [1] : vector<16x32xf32> to vector<16xf32>
    %56 = vector.shape_cast %55 : vector<16xf32> to vector<16x1xf32>
    %cst_18 = arith.constant 3.200000e+01 : f32
    %57 = vector.broadcast %cst_18 : f32 to vector<16x1xf32>
    %58 = arith.divf %56, %57 : vector<16x1xf32>
    %59 = vector.broadcast %58 : vector<16x1xf32> to vector<16x32xf32>
    %60 = arith.subf %50, %59 : vector<16x32xf32>
    %61 = arith.mulf %60, %60 : vector<16x32xf32>
    %cst_19 = arith.constant dense<0.000000e+00> : vector<16xf32>
    %62 = vector.multi_reduction <add>, %61, %cst_19 [1] : vector<16x32xf32> to vector<16xf32>
    %63 = vector.shape_cast %62 : vector<16xf32> to vector<16x1xf32>
    %cst_20 = arith.constant 3.200000e+01 : f32
    %64 = vector.broadcast %cst_20 : f32 to vector<16x1xf32>
    %65 = arith.divf %63, %64 : vector<16x1xf32>
    %66 = vector.broadcast %58 : vector<16x1xf32> to vector<16x32xf32>
    %67 = arith.subf %50, %66 : vector<16x32xf32>
    %cst_21 = arith.constant 9.99999996E-13 : f32
    %68 = vector.broadcast %cst_21 : f32 to vector<16x1xf32>
    %69 = arith.addf %65, %68 : vector<16x1xf32>
    %70 = math.rsqrt %69 : vector<16x1xf32>
    %71 = vector.broadcast %70 : vector<16x1xf32> to vector<16x32xf32>
    %72 = arith.mulf %67, %71 : vector<16x32xf32>
    %73 = vector.broadcast %52 : vector<1x32xf32> to vector<16x32xf32>
    %74 = arith.mulf %72, %73 : vector<16x32xf32>
    %75 = vector.broadcast %54 : vector<1x32xf32> to vector<16x32xf32>
    %76 = arith.addf %74, %75 : vector<16x32xf32>
    %c0_22 = arith.constant 0 : index
    %c0_23 = arith.constant 0 : index
    %c0_24 = arith.constant 0 : index
    %c0_25 = arith.constant 0 : index
    %77 = vector.load %arg6[%c0_22, %c0_23, %c0_24, %c0_25] : memref<1x4x32x32xbf16, #tpu.memory_space<vmem>>, vector<1x4x32x32xbf16>
    %78 = vector.shape_cast %77 : vector<1x4x32x32xbf16> to vector<4x32x32xbf16>
    %c0_26 = arith.constant 0 : index
    %c0_27 = arith.constant 0 : index
    %c0_28 = arith.constant 0 : index
    %79 = vector.load %arg7[%c0_26, %c0_27, %c0_28] : memref<1x6x32xf32, #tpu.memory_space<vmem>>, vector<1x6x32xf32>
    %80 = vector.shape_cast %79 : vector<1x6x32xf32> to vector<6x32xf32>
    %81 = vector.extract_strided_slice %80 {offsets = [0, 0], sizes = [1, 32], strides = [1, 1]} : vector<6x32xf32> to vector<1x32xf32>
    %82 = vector.extract_strided_slice %80 {offsets = [1, 0], sizes = [1, 32], strides = [1, 1]} : vector<6x32xf32> to vector<1x32xf32>
    %83 = vector.extract_strided_slice %80 {offsets = [2, 0], sizes = [1, 32], strides = [1, 1]} : vector<6x32xf32> to vector<1x32xf32>
    %84 = vector.extract_strided_slice %80 {offsets = [3, 0], sizes = [1, 32], strides = [1, 1]} : vector<6x32xf32> to vector<1x32xf32>
    %85 = vector.extract_strided_slice %80 {offsets = [4, 0], sizes = [1, 32], strides = [1, 1]} : vector<6x32xf32> to vector<1x32xf32>
    %86 = vector.extract_strided_slice %80 {offsets = [5, 0], sizes = [1, 32], strides = [1, 1]} : vector<6x32xf32> to vector<1x32xf32>
    %87 = arith.truncf %76 : vector<16x32xf32> to vector<16x32xbf16>
    %88 = arith.truncf %76 : vector<16x32xf32> to vector<16x32xbf16>
    %89 = vector.extract_strided_slice %78 {offsets = [0, 0, 0], sizes = [1, 32, 32], strides = [1, 1, 1]} : vector<4x32x32xbf16> to vector<1x32x32xbf16>
    %90 = vector.shape_cast %89 : vector<1x32x32xbf16> to vector<32x32xbf16>
    %cst_29 = arith.constant dense<0.000000e+00> : vector<16x32xf32>
    %91 = tpu.matmul %87, %90, %cst_29 {dimension_numbers = #tpu.dot_dimension_numbers<[1], [0], [0], [1], [0, 0, 1, 1], [], []>} : vector<16x32xbf16>, vector<32x32xbf16>, vector<16x32xf32> -> vector<16x32xf32>
    %92 = vector.broadcast %81 : vector<1x32xf32> to vector<16x32xf32>
    %93 = arith.addf %91, %92 : vector<16x32xf32>
    %94 = vector.extract_strided_slice %78 {offsets = [1, 0, 0], sizes = [1, 32, 32], strides = [1, 1, 1]} : vector<4x32x32xbf16> to vector<1x32x32xbf16>
    %95 = vector.shape_cast %94 : vector<1x32x32xbf16> to vector<32x32xbf16>
    %cst_30 = arith.constant dense<0.000000e+00> : vector<16x32xf32>
    %96 = tpu.matmul %88, %95, %cst_30 {dimension_numbers = #tpu.dot_dimension_numbers<[1], [0], [0], [1], [0, 0, 1, 1], [], []>} : vector<16x32xbf16>, vector<32x32xbf16>, vector<16x32xf32> -> vector<16x32xf32>
    %97 = vector.broadcast %82 : vector<1x32xf32> to vector<16x32xf32>
    %98 = arith.addf %96, %97 : vector<16x32xf32>
    %99 = vector.extract_strided_slice %78 {offsets = [2, 0, 0], sizes = [1, 32, 32], strides = [1, 1, 1]} : vector<4x32x32xbf16> to vector<1x32x32xbf16>
    %100 = vector.shape_cast %99 : vector<1x32x32xbf16> to vector<32x32xbf16>
    %cst_31 = arith.constant dense<0.000000e+00> : vector<16x32xf32>
    %101 = tpu.matmul %88, %100, %cst_31 {dimension_numbers = #tpu.dot_dimension_numbers<[1], [0], [0], [1], [0, 0, 1, 1], [], []>} : vector<16x32xbf16>, vector<32x32xbf16>, vector<16x32xf32> -> vector<16x32xf32>
    %102 = vector.broadcast %83 : vector<1x32xf32> to vector<16x32xf32>
    %103 = arith.addf %101, %102 : vector<16x32xf32>
    %104 = tpu.transpose %98, [1, 0] : vector<16x32xf32> -> vector<32x16xf32>
    %cst_32 = arith.constant 0.000000e+00 : f32
    %105 = vector.broadcast %cst_32 : f32 to vector<16x32xf32>
    %106 = vector.broadcast %7 : vector<1x32xf32> to vector<16x32xf32>
    %107 = arith.mulf %93, %106 : vector<16x32xf32>
    %cst_33 = arith.constant dense<0.000000e+00> : vector<16x16xf32>
    %108 = tpu.matmul %107, %104, %cst_33 {dimension_numbers = #tpu.dot_dimension_numbers<[1], [0], [0], [1], [0, 0, 1, 1], [], []>} : vector<16x32xf32>, vector<32x16xf32>, vector<16x16xf32> -> vector<16x16xf32>
    %cst_34 = arith.constant 0.353553385 : f32
    %109 = vector.broadcast %cst_34 : f32 to vector<16x16xf32>
    %110 = arith.mulf %108, %109 : vector<16x16xf32>
    %111 = vector.broadcast %36 : vector<1x16xf32> to vector<16x16xf32>
    %112 = arith.addf %110, %111 : vector<16x16xf32>
    %cst_35 = arith.constant dense<0xFF800000> : vector<16xf32>
    %113 = vector.multi_reduction <maximumf>, %112, %cst_35 [1] : vector<16x16xf32> to vector<16xf32>
    %114 = vector.shape_cast %113 : vector<16xf32> to vector<16x1xf32>
    %115 = vector.broadcast %114 : vector<16x1xf32> to vector<16x16xf32>
    %116 = arith.subf %112, %115 : vector<16x16xf32>
    %117 = math.exp %116 : vector<16x16xf32>
    %cst_36 = arith.constant dense<0.000000e+00> : vector<16xf32>
    %118 = vector.multi_reduction <add>, %117, %cst_36 [1] : vector<16x16xf32> to vector<16xf32>
    %119 = vector.shape_cast %118 : vector<16xf32> to vector<16x1xf32>
    %120 = tpu.reciprocal %119 {approx = true} : vector<16x1xf32> -> vector<16x1xf32>
    %121 = vector.broadcast %120 : vector<16x1xf32> to vector<16x16xf32>
    %122 = arith.mulf %117, %121 : vector<16x16xf32>
    %123 = vector.broadcast %7 : vector<1x32xf32> to vector<16x32xf32>
    %124 = arith.mulf %103, %123 : vector<16x32xf32>
    %cst_37 = arith.constant dense<0.000000e+00> : vector<16x32xf32>
    %125 = tpu.matmul %122, %124, %cst_37 {dimension_numbers = #tpu.dot_dimension_numbers<[1], [0], [0], [1], [0, 0, 1, 1], [], []>} : vector<16x16xf32>, vector<16x32xf32>, vector<16x32xf32> -> vector<16x32xf32>
    %126 = arith.addf %105, %125 : vector<16x32xf32>
    %127 = vector.broadcast %14 : vector<1x32xf32> to vector<16x32xf32>
    %128 = arith.mulf %93, %127 : vector<16x32xf32>
    %cst_38 = arith.constant dense<0.000000e+00> : vector<16x16xf32>
    %129 = tpu.matmul %128, %104, %cst_38 {dimension_numbers = #tpu.dot_dimension_numbers<[1], [0], [0], [1], [0, 0, 1, 1], [], []>} : vector<16x32xf32>, vector<32x16xf32>, vector<16x16xf32> -> vector<16x16xf32>
    %cst_39 = arith.constant 0.353553385 : f32
    %130 = vector.broadcast %cst_39 : f32 to vector<16x16xf32>
    %131 = arith.mulf %129, %130 : vector<16x16xf32>
    %132 = vector.broadcast %36 : vector<1x16xf32> to vector<16x16xf32>
    %133 = arith.addf %131, %132 : vector<16x16xf32>
    %cst_40 = arith.constant dense<0xFF800000> : vector<16xf32>
    %134 = vector.multi_reduction <maximumf>, %133, %cst_40 [1] : vector<16x16xf32> to vector<16xf32>
    %135 = vector.shape_cast %134 : vector<16xf32> to vector<16x1xf32>
    %136 = vector.broadcast %135 : vector<16x1xf32> to vector<16x16xf32>
    %137 = arith.subf %133, %136 : vector<16x16xf32>
    %138 = math.exp %137 : vector<16x16xf32>
    %cst_41 = arith.constant dense<0.000000e+00> : vector<16xf32>
    %139 = vector.multi_reduction <add>, %138, %cst_41 [1] : vector<16x16xf32> to vector<16xf32>
    %140 = vector.shape_cast %139 : vector<16xf32> to vector<16x1xf32>
    %141 = tpu.reciprocal %140 {approx = true} : vector<16x1xf32> -> vector<16x1xf32>
    %142 = vector.broadcast %141 : vector<16x1xf32> to vector<16x16xf32>
    %143 = arith.mulf %138, %142 : vector<16x16xf32>
    %144 = vector.broadcast %14 : vector<1x32xf32> to vector<16x32xf32>
    %145 = arith.mulf %103, %144 : vector<16x32xf32>
    %cst_42 = arith.constant dense<0.000000e+00> : vector<16x32xf32>
    %146 = tpu.matmul %143, %145, %cst_42 {dimension_numbers = #tpu.dot_dimension_numbers<[1], [0], [0], [1], [0, 0, 1, 1], [], []>} : vector<16x16xf32>, vector<16x32xf32>, vector<16x32xf32> -> vector<16x32xf32>
    %147 = arith.addf %126, %146 : vector<16x32xf32>
    %148 = vector.broadcast %21 : vector<1x32xf32> to vector<16x32xf32>
    %149 = arith.mulf %93, %148 : vector<16x32xf32>
    %cst_43 = arith.constant dense<0.000000e+00> : vector<16x16xf32>
    %150 = tpu.matmul %149, %104, %cst_43 {dimension_numbers = #tpu.dot_dimension_numbers<[1], [0], [0], [1], [0, 0, 1, 1], [], []>} : vector<16x32xf32>, vector<32x16xf32>, vector<16x16xf32> -> vector<16x16xf32>
    %cst_44 = arith.constant 0.353553385 : f32
    %151 = vector.broadcast %cst_44 : f32 to vector<16x16xf32>
    %152 = arith.mulf %150, %151 : vector<16x16xf32>
    %153 = vector.broadcast %36 : vector<1x16xf32> to vector<16x16xf32>
    %154 = arith.addf %152, %153 : vector<16x16xf32>
    %cst_45 = arith.constant dense<0xFF800000> : vector<16xf32>
    %155 = vector.multi_reduction <maximumf>, %154, %cst_45 [1] : vector<16x16xf32> to vector<16xf32>
    %156 = vector.shape_cast %155 : vector<16xf32> to vector<16x1xf32>
    %157 = vector.broadcast %156 : vector<16x1xf32> to vector<16x16xf32>
    %158 = arith.subf %154, %157 : vector<16x16xf32>
    %159 = math.exp %158 : vector<16x16xf32>
    %cst_46 = arith.constant dense<0.000000e+00> : vector<16xf32>
    %160 = vector.multi_reduction <add>, %159, %cst_46 [1] : vector<16x16xf32> to vector<16xf32>
    %161 = vector.shape_cast %160 : vector<16xf32> to vector<16x1xf32>
    %162 = tpu.reciprocal %161 {approx = true} : vector<16x1xf32> -> vector<16x1xf32>
    %163 = vector.broadcast %162 : vector<16x1xf32> to vector<16x16xf32>
    %164 = arith.mulf %159, %163 : vector<16x16xf32>
    %165 = vector.broadcast %21 : vector<1x32xf32> to vector<16x32xf32>
    %166 = arith.mulf %103, %165 : vector<16x32xf32>
    %cst_47 = arith.constant dense<0.000000e+00> : vector<16x32xf32>
    %167 = tpu.matmul %164, %166, %cst_47 {dimension_numbers = #tpu.dot_dimension_numbers<[1], [0], [0], [1], [0, 0, 1, 1], [], []>} : vector<16x16xf32>, vector<16x32xf32>, vector<16x32xf32> -> vector<16x32xf32>
    %168 = arith.addf %147, %167 : vector<16x32xf32>
    %169 = vector.broadcast %28 : vector<1x32xf32> to vector<16x32xf32>
    %170 = arith.mulf %93, %169 : vector<16x32xf32>
    %cst_48 = arith.constant dense<0.000000e+00> : vector<16x16xf32>
    %171 = tpu.matmul %170, %104, %cst_48 {dimension_numbers = #tpu.dot_dimension_numbers<[1], [0], [0], [1], [0, 0, 1, 1], [], []>} : vector<16x32xf32>, vector<32x16xf32>, vector<16x16xf32> -> vector<16x16xf32>
    %cst_49 = arith.constant 0.353553385 : f32
    %172 = vector.broadcast %cst_49 : f32 to vector<16x16xf32>
    %173 = arith.mulf %171, %172 : vector<16x16xf32>
    %174 = vector.broadcast %36 : vector<1x16xf32> to vector<16x16xf32>
    %175 = arith.addf %173, %174 : vector<16x16xf32>
    %cst_50 = arith.constant dense<0xFF800000> : vector<16xf32>
    %176 = vector.multi_reduction <maximumf>, %175, %cst_50 [1] : vector<16x16xf32> to vector<16xf32>
    %177 = vector.shape_cast %176 : vector<16xf32> to vector<16x1xf32>
    %178 = vector.broadcast %177 : vector<16x1xf32> to vector<16x16xf32>
    %179 = arith.subf %175, %178 : vector<16x16xf32>
    %180 = math.exp %179 : vector<16x16xf32>
    %cst_51 = arith.constant dense<0.000000e+00> : vector<16xf32>
    %181 = vector.multi_reduction <add>, %180, %cst_51 [1] : vector<16x16xf32> to vector<16xf32>
    %182 = vector.shape_cast %181 : vector<16xf32> to vector<16x1xf32>
    %183 = tpu.reciprocal %182 {approx = true} : vector<16x1xf32> -> vector<16x1xf32>
    %184 = vector.broadcast %183 : vector<16x1xf32> to vector<16x16xf32>
    %185 = arith.mulf %180, %184 : vector<16x16xf32>
    %186 = vector.broadcast %28 : vector<1x32xf32> to vector<16x32xf32>
    %187 = arith.mulf %103, %186 : vector<16x32xf32>
    %cst_52 = arith.constant dense<0.000000e+00> : vector<16x32xf32>
    %188 = tpu.matmul %185, %187, %cst_52 {dimension_numbers = #tpu.dot_dimension_numbers<[1], [0], [0], [1], [0, 0, 1, 1], [], []>} : vector<16x16xf32>, vector<16x32xf32>, vector<16x32xf32> -> vector<16x32xf32>
    %189 = arith.addf %168, %188 : vector<16x32xf32>
    %190 = arith.truncf %189 : vector<16x32xf32> to vector<16x32xbf16>
    %191 = vector.extract_strided_slice %78 {offsets = [3, 0, 0], sizes = [1, 32, 32], strides = [1, 1, 1]} : vector<4x32x32xbf16> to vector<1x32x32xbf16>
    %192 = vector.shape_cast %191 : vector<1x32x32xbf16> to vector<32x32xbf16>
    %cst_53 = arith.constant dense<0.000000e+00> : vector<16x32xf32>
    %193 = tpu.matmul %190, %192, %cst_53 {dimension_numbers = #tpu.dot_dimension_numbers<[1], [0], [0], [1], [0, 0, 1, 1], [], []>} : vector<16x32xbf16>, vector<32x32xbf16>, vector<16x32xf32> -> vector<16x32xf32>
    %194 = vector.broadcast %84 : vector<1x32xf32> to vector<16x32xf32>
    %195 = arith.addf %193, %194 : vector<16x32xf32>
    %196 = arith.addf %76, %195 : vector<16x32xf32>
    %cst_54 = arith.constant dense<0.000000e+00> : vector<16xf32>
    %197 = vector.multi_reduction <add>, %196, %cst_54 [1] : vector<16x32xf32> to vector<16xf32>
    %198 = vector.shape_cast %197 : vector<16xf32> to vector<16x1xf32>
    %cst_55 = arith.constant 3.200000e+01 : f32
    %199 = vector.broadcast %cst_55 : f32 to vector<16x1xf32>
    %200 = arith.divf %198, %199 : vector<16x1xf32>
    %201 = vector.broadcast %200 : vector<16x1xf32> to vector<16x32xf32>
    %202 = arith.subf %196, %201 : vector<16x32xf32>
    %203 = arith.mulf %202, %202 : vector<16x32xf32>
    %cst_56 = arith.constant dense<0.000000e+00> : vector<16xf32>
    %204 = vector.multi_reduction <add>, %203, %cst_56 [1] : vector<16x32xf32> to vector<16xf32>
    %205 = vector.shape_cast %204 : vector<16xf32> to vector<16x1xf32>
    %cst_57 = arith.constant 3.200000e+01 : f32
    %206 = vector.broadcast %cst_57 : f32 to vector<16x1xf32>
    %207 = arith.divf %205, %206 : vector<16x1xf32>
    %208 = vector.broadcast %200 : vector<16x1xf32> to vector<16x32xf32>
    %209 = arith.subf %196, %208 : vector<16x32xf32>
    %cst_58 = arith.constant 9.99999996E-13 : f32
    %210 = vector.broadcast %cst_58 : f32 to vector<16x1xf32>
    %211 = arith.addf %207, %210 : vector<16x1xf32>
    %212 = math.rsqrt %211 : vector<16x1xf32>
    %213 = vector.broadcast %212 : vector<16x1xf32> to vector<16x32xf32>
    %214 = arith.mulf %209, %213 : vector<16x32xf32>
    %215 = vector.broadcast %85 : vector<1x32xf32> to vector<16x32xf32>
    %216 = arith.mulf %214, %215 : vector<16x32xf32>
    %217 = vector.broadcast %86 : vector<1x32xf32> to vector<16x32xf32>
    %218 = arith.addf %216, %217 : vector<16x32xf32>
    %c0_59 = arith.constant 0 : index
    %c0_60 = arith.constant 0 : index
    %c0_61 = arith.constant 0 : index
    %219 = vector.load %arg8[%c0_59, %c0_60, %c0_61] : memref<1x32x64xbf16, #tpu.memory_space<vmem>>, vector<1x32x64xbf16>
    %220 = vector.shape_cast %219 : vector<1x32x64xbf16> to vector<32x64xbf16>
    %c0_62 = arith.constant 0 : index
    %c0_63 = arith.constant 0 : index
    %c0_64 = arith.constant 0 : index
    %221 = vector.load %arg9[%c0_62, %c0_63, %c0_64] : memref<1x1x64xf32, #tpu.memory_space<vmem>>, vector<1x1x64xf32>
    %222 = vector.shape_cast %221 : vector<1x1x64xf32> to vector<1x64xf32>
    %c0_65 = arith.constant 0 : index
    %c0_66 = arith.constant 0 : index
    %c0_67 = arith.constant 0 : index
    %223 = vector.load %arg10[%c0_65, %c0_66, %c0_67] : memref<1x64x32xbf16, #tpu.memory_space<vmem>>, vector<1x64x32xbf16>
    %224 = vector.shape_cast %223 : vector<1x64x32xbf16> to vector<64x32xbf16>
    %c0_68 = arith.constant 0 : index
    %c0_69 = arith.constant 0 : index
    %c0_70 = arith.constant 0 : index
    %225 = vector.load %arg11[%c0_68, %c0_69, %c0_70] : memref<1x3x32xf32, #tpu.memory_space<vmem>>, vector<1x3x32xf32>
    %226 = vector.shape_cast %225 : vector<1x3x32xf32> to vector<3x32xf32>
    %227 = vector.extract_strided_slice %226 {offsets = [0, 0], sizes = [1, 32], strides = [1, 1]} : vector<3x32xf32> to vector<1x32xf32>
    %228 = vector.extract_strided_slice %226 {offsets = [1, 0], sizes = [1, 32], strides = [1, 1]} : vector<3x32xf32> to vector<1x32xf32>
    %229 = vector.extract_strided_slice %226 {offsets = [2, 0], sizes = [1, 32], strides = [1, 1]} : vector<3x32xf32> to vector<1x32xf32>
    %230 = arith.truncf %218 : vector<16x32xf32> to vector<16x32xbf16>
    %cst_71 = arith.constant dense<0.000000e+00> : vector<16x64xf32>
    %231 = tpu.matmul %230, %220, %cst_71 {dimension_numbers = #tpu.dot_dimension_numbers<[1], [0], [0], [1], [0, 0, 1, 1], [], []>} : vector<16x32xbf16>, vector<32x64xbf16>, vector<16x64xf32> -> vector<16x64xf32>
    %232 = vector.broadcast %222 : vector<1x64xf32> to vector<16x64xf32>
    %233 = arith.addf %231, %232 : vector<16x64xf32>
    %234 = arith.mulf %233, %233 : vector<16x64xf32>
    %235 = arith.mulf %233, %234 : vector<16x64xf32>
    %cst_72 = arith.constant 4.471500e-02 : f32
    %236 = vector.broadcast %cst_72 : f32 to vector<16x64xf32>
    %237 = arith.mulf %236, %235 : vector<16x64xf32>
    %238 = arith.addf %233, %237 : vector<16x64xf32>
    %cst_73 = arith.constant 0.797884583 : f32
    %239 = vector.broadcast %cst_73 : f32 to vector<16x64xf32>
    %240 = arith.mulf %239, %238 : vector<16x64xf32>
    %241 = math.tanh %240 : vector<16x64xf32>
    %cst_74 = arith.constant 1.000000e+00 : f32
    %242 = vector.broadcast %cst_74 : f32 to vector<16x64xf32>
    %243 = arith.addf %242, %241 : vector<16x64xf32>
    %cst_75 = arith.constant 5.000000e-01 : f32
    %244 = vector.broadcast %cst_75 : f32 to vector<16x64xf32>
    %245 = arith.mulf %244, %243 : vector<16x64xf32>
    %246 = arith.mulf %233, %245 : vector<16x64xf32>
    %247 = arith.truncf %246 : vector<16x64xf32> to vector<16x64xbf16>
    %cst_76 = arith.constant dense<0.000000e+00> : vector<16x32xf32>
    %248 = tpu.matmul %247, %224, %cst_76 {dimension_numbers = #tpu.dot_dimension_numbers<[1], [0], [0], [1], [0, 0, 1, 1], [], []>} : vector<16x64xbf16>, vector<64x32xbf16>, vector<16x32xf32> -> vector<16x32xf32>
    %249 = vector.broadcast %227 : vector<1x32xf32> to vector<16x32xf32>
    %250 = arith.addf %248, %249 : vector<16x32xf32>
    %251 = arith.addf %218, %250 : vector<16x32xf32>
    %cst_77 = arith.constant dense<0.000000e+00> : vector<16xf32>
    %252 = vector.multi_reduction <add>, %251, %cst_77 [1] : vector<16x32xf32> to vector<16xf32>
    %253 = vector.shape_cast %252 : vector<16xf32> to vector<16x1xf32>
    %cst_78 = arith.constant 3.200000e+01 : f32
    %254 = vector.broadcast %cst_78 : f32 to vector<16x1xf32>
    %255 = arith.divf %253, %254 : vector<16x1xf32>
    %256 = vector.broadcast %255 : vector<16x1xf32> to vector<16x32xf32>
    %257 = arith.subf %251, %256 : vector<16x32xf32>
    %258 = arith.mulf %257, %257 : vector<16x32xf32>
    %cst_79 = arith.constant dense<0.000000e+00> : vector<16xf32>
    %259 = vector.multi_reduction <add>, %258, %cst_79 [1] : vector<16x32xf32> to vector<16xf32>
    %260 = vector.shape_cast %259 : vector<16xf32> to vector<16x1xf32>
    %cst_80 = arith.constant 3.200000e+01 : f32
    %261 = vector.broadcast %cst_80 : f32 to vector<16x1xf32>
    %262 = arith.divf %260, %261 : vector<16x1xf32>
    %263 = vector.broadcast %255 : vector<16x1xf32> to vector<16x32xf32>
    %264 = arith.subf %251, %263 : vector<16x32xf32>
    %cst_81 = arith.constant 9.99999996E-13 : f32
    %265 = vector.broadcast %cst_81 : f32 to vector<16x1xf32>
    %266 = arith.addf %262, %265 : vector<16x1xf32>
    %267 = math.rsqrt %266 : vector<16x1xf32>
    %268 = vector.broadcast %267 : vector<16x1xf32> to vector<16x32xf32>
    %269 = arith.mulf %264, %268 : vector<16x32xf32>
    %270 = vector.broadcast %228 : vector<1x32xf32> to vector<16x32xf32>
    %271 = arith.mulf %269, %270 : vector<16x32xf32>
    %272 = vector.broadcast %229 : vector<1x32xf32> to vector<16x32xf32>
    %273 = arith.addf %271, %272 : vector<16x32xf32>
    %c0_82 = arith.constant 0 : index
    %c0_83 = arith.constant 0 : index
    %c0_84 = arith.constant 0 : index
    %274 = vector.load %arg2[%c0_82, %c0_83, %c0_84] : memref<1x8x32xf32, #tpu.memory_space<vmem>>, vector<1x8x32xf32>
    %275 = vector.shape_cast %274 : vector<1x8x32xf32> to vector<8x32xf32>
    %276 = vector.extract_strided_slice %48 {offsets = [1, 0, 0], sizes = [1, 1, 32], strides = [1, 1, 1]} : vector<2x2x32xf32> to vector<1x1x32xf32>
    %277 = vector.shape_cast %276 : vector<1x1x32xf32> to vector<1x32xf32>
    %278 = vector.extract_strided_slice %48 {offsets = [1, 1, 0], sizes = [1, 1, 32], strides = [1, 1, 1]} : vector<2x2x32xf32> to vector<1x1x32xf32>
    %279 = vector.shape_cast %278 : vector<1x1x32xf32> to vector<1x32xf32>
    %cst_85 = arith.constant dense<0.000000e+00> : vector<8xf32>
    %280 = vector.multi_reduction <add>, %275, %cst_85 [1] : vector<8x32xf32> to vector<8xf32>
    %281 = vector.shape_cast %280 : vector<8xf32> to vector<8x1xf32>
    %cst_86 = arith.constant 3.200000e+01 : f32
    %282 = vector.broadcast %cst_86 : f32 to vector<8x1xf32>
    %283 = arith.divf %281, %282 : vector<8x1xf32>
    %284 = vector.broadcast %283 : vector<8x1xf32> to vector<8x32xf32>
    %285 = arith.subf %275, %284 : vector<8x32xf32>
    %286 = arith.mulf %285, %285 : vector<8x32xf32>
    %cst_87 = arith.constant dense<0.000000e+00> : vector<8xf32>
    %287 = vector.multi_reduction <add>, %286, %cst_87 [1] : vector<8x32xf32> to vector<8xf32>
    %288 = vector.shape_cast %287 : vector<8xf32> to vector<8x1xf32>
    %cst_88 = arith.constant 3.200000e+01 : f32
    %289 = vector.broadcast %cst_88 : f32 to vector<8x1xf32>
    %290 = arith.divf %288, %289 : vector<8x1xf32>
    %291 = vector.broadcast %283 : vector<8x1xf32> to vector<8x32xf32>
    %292 = arith.subf %275, %291 : vector<8x32xf32>
    %cst_89 = arith.constant 9.99999996E-13 : f32
    %293 = vector.broadcast %cst_89 : f32 to vector<8x1xf32>
    %294 = arith.addf %290, %293 : vector<8x1xf32>
    %295 = math.rsqrt %294 : vector<8x1xf32>
    %296 = vector.broadcast %295 : vector<8x1xf32> to vector<8x32xf32>
    %297 = arith.mulf %292, %296 : vector<8x32xf32>
    %298 = vector.broadcast %277 : vector<1x32xf32> to vector<8x32xf32>
    %299 = arith.mulf %297, %298 : vector<8x32xf32>
    %300 = vector.broadcast %279 : vector<1x32xf32> to vector<8x32xf32>
    %301 = arith.addf %299, %300 : vector<8x32xf32>
    %c0_90 = arith.constant 0 : index
    %c0_91 = arith.constant 0 : index
    %c0_92 = arith.constant 0 : index
    %c0_93 = arith.constant 0 : index
    %302 = vector.load %arg12[%c0_90, %c0_91, %c0_92, %c0_93] : memref<1x4x32x32xbf16, #tpu.memory_space<vmem>>, vector<1x4x32x32xbf16>
    %303 = vector.shape_cast %302 : vector<1x4x32x32xbf16> to vector<4x32x32xbf16>
    %c0_94 = arith.constant 0 : index
    %c0_95 = arith.constant 0 : index
    %c0_96 = arith.constant 0 : index
    %304 = vector.load %arg13[%c0_94, %c0_95, %c0_96] : memref<1x6x32xf32, #tpu.memory_space<vmem>>, vector<1x6x32xf32>
    %305 = vector.shape_cast %304 : vector<1x6x32xf32> to vector<6x32xf32>
    %306 = vector.extract_strided_slice %305 {offsets = [0, 0], sizes = [1, 32], strides = [1, 1]} : vector<6x32xf32> to vector<1x32xf32>
    %307 = vector.extract_strided_slice %305 {offsets = [1, 0], sizes = [1, 32], strides = [1, 1]} : vector<6x32xf32> to vector<1x32xf32>
    %308 = vector.extract_strided_slice %305 {offsets = [2, 0], sizes = [1, 32], strides = [1, 1]} : vector<6x32xf32> to vector<1x32xf32>
    %309 = vector.extract_strided_slice %305 {offsets = [3, 0], sizes = [1, 32], strides = [1, 1]} : vector<6x32xf32> to vector<1x32xf32>
    %310 = vector.extract_strided_slice %305 {offsets = [4, 0], sizes = [1, 32], strides = [1, 1]} : vector<6x32xf32> to vector<1x32xf32>
    %311 = vector.extract_strided_slice %305 {offsets = [5, 0], sizes = [1, 32], strides = [1, 1]} : vector<6x32xf32> to vector<1x32xf32>
    %312 = arith.truncf %301 : vector<8x32xf32> to vector<8x32xbf16>
    %313 = arith.truncf %301 : vector<8x32xf32> to vector<8x32xbf16>
    %314 = vector.extract_strided_slice %303 {offsets = [0, 0, 0], sizes = [1, 32, 32], strides = [1, 1, 1]} : vector<4x32x32xbf16> to vector<1x32x32xbf16>
    %315 = vector.shape_cast %314 : vector<1x32x32xbf16> to vector<32x32xbf16>
    %cst_97 = arith.constant dense<0.000000e+00> : vector<8x32xf32>
    %316 = tpu.matmul %312, %315, %cst_97 {dimension_numbers = #tpu.dot_dimension_numbers<[1], [0], [0], [1], [0, 0, 1, 1], [], []>} : vector<8x32xbf16>, vector<32x32xbf16>, vector<8x32xf32> -> vector<8x32xf32>
    %317 = vector.broadcast %306 : vector<1x32xf32> to vector<8x32xf32>
    %318 = arith.addf %316, %317 : vector<8x32xf32>
    %319 = vector.extract_strided_slice %303 {offsets = [1, 0, 0], sizes = [1, 32, 32], strides = [1, 1, 1]} : vector<4x32x32xbf16> to vector<1x32x32xbf16>
    %320 = vector.shape_cast %319 : vector<1x32x32xbf16> to vector<32x32xbf16>
    %cst_98 = arith.constant dense<0.000000e+00> : vector<8x32xf32>
    %321 = tpu.matmul %313, %320, %cst_98 {dimension_numbers = #tpu.dot_dimension_numbers<[1], [0], [0], [1], [0, 0, 1, 1], [], []>} : vector<8x32xbf16>, vector<32x32xbf16>, vector<8x32xf32> -> vector<8x32xf32>
    %322 = vector.broadcast %307 : vector<1x32xf32> to vector<8x32xf32>
    %323 = arith.addf %321, %322 : vector<8x32xf32>
    %324 = vector.extract_strided_slice %303 {offsets = [2, 0, 0], sizes = [1, 32, 32], strides = [1, 1, 1]} : vector<4x32x32xbf16> to vector<1x32x32xbf16>
    %325 = vector.shape_cast %324 : vector<1x32x32xbf16> to vector<32x32xbf16>
    %cst_99 = arith.constant dense<0.000000e+00> : vector<8x32xf32>
    %326 = tpu.matmul %313, %325, %cst_99 {dimension_numbers = #tpu.dot_dimension_numbers<[1], [0], [0], [1], [0, 0, 1, 1], [], []>} : vector<8x32xbf16>, vector<32x32xbf16>, vector<8x32xf32> -> vector<8x32xf32>
    %327 = vector.broadcast %308 : vector<1x32xf32> to vector<8x32xf32>
    %328 = arith.addf %326, %327 : vector<8x32xf32>
    %329 = tpu.transpose %323, [1, 0] : vector<8x32xf32> -> vector<32x8xf32>
    %cst_100 = arith.constant 0.000000e+00 : f32
    %330 = vector.broadcast %cst_100 : f32 to vector<8x32xf32>
    %331 = vector.broadcast %7 : vector<1x32xf32> to vector<8x32xf32>
    %332 = arith.mulf %318, %331 : vector<8x32xf32>
    %cst_101 = arith.constant dense<0.000000e+00> : vector<8x8xf32>
    %333 = tpu.matmul %332, %329, %cst_101 {dimension_numbers = #tpu.dot_dimension_numbers<[1], [0], [0], [1], [0, 0, 1, 1], [], []>} : vector<8x32xf32>, vector<32x8xf32>, vector<8x8xf32> -> vector<8x8xf32>
    %cst_102 = arith.constant 0.353553385 : f32
    %334 = vector.broadcast %cst_102 : f32 to vector<8x8xf32>
    %335 = arith.mulf %333, %334 : vector<8x8xf32>
    %336 = arith.addf %335, %47 : vector<8x8xf32>
    %cst_103 = arith.constant dense<0xFF800000> : vector<8xf32>
    %337 = vector.multi_reduction <maximumf>, %336, %cst_103 [1] : vector<8x8xf32> to vector<8xf32>
    %338 = vector.shape_cast %337 : vector<8xf32> to vector<8x1xf32>
    %339 = vector.broadcast %338 : vector<8x1xf32> to vector<8x8xf32>
    %340 = arith.subf %336, %339 : vector<8x8xf32>
    %341 = math.exp %340 : vector<8x8xf32>
    %cst_104 = arith.constant dense<0.000000e+00> : vector<8xf32>
    %342 = vector.multi_reduction <add>, %341, %cst_104 [1] : vector<8x8xf32> to vector<8xf32>
    %343 = vector.shape_cast %342 : vector<8xf32> to vector<8x1xf32>
    %344 = tpu.reciprocal %343 {approx = true} : vector<8x1xf32> -> vector<8x1xf32>
    %345 = vector.broadcast %344 : vector<8x1xf32> to vector<8x8xf32>
    %346 = arith.mulf %341, %345 : vector<8x8xf32>
    %347 = vector.broadcast %7 : vector<1x32xf32> to vector<8x32xf32>
    %348 = arith.mulf %328, %347 : vector<8x32xf32>
    %cst_105 = arith.constant dense<0.000000e+00> : vector<8x32xf32>
    %349 = tpu.matmul %346, %348, %cst_105 {dimension_numbers = #tpu.dot_dimension_numbers<[1], [0], [0], [1], [0, 0, 1, 1], [], []>} : vector<8x8xf32>, vector<8x32xf32>, vector<8x32xf32> -> vector<8x32xf32>
    %350 = arith.addf %330, %349 : vector<8x32xf32>
    %351 = vector.broadcast %14 : vector<1x32xf32> to vector<8x32xf32>
    %352 = arith.mulf %318, %351 : vector<8x32xf32>
    %cst_106 = arith.constant dense<0.000000e+00> : vector<8x8xf32>
    %353 = tpu.matmul %352, %329, %cst_106 {dimension_numbers = #tpu.dot_dimension_numbers<[1], [0], [0], [1], [0, 0, 1, 1], [], []>} : vector<8x32xf32>, vector<32x8xf32>, vector<8x8xf32> -> vector<8x8xf32>
    %cst_107 = arith.constant 0.353553385 : f32
    %354 = vector.broadcast %cst_107 : f32 to vector<8x8xf32>
    %355 = arith.mulf %353, %354 : vector<8x8xf32>
    %356 = arith.addf %355, %47 : vector<8x8xf32>
    %cst_108 = arith.constant dense<0xFF800000> : vector<8xf32>
    %357 = vector.multi_reduction <maximumf>, %356, %cst_108 [1] : vector<8x8xf32> to vector<8xf32>
    %358 = vector.shape_cast %357 : vector<8xf32> to vector<8x1xf32>
    %359 = vector.broadcast %358 : vector<8x1xf32> to vector<8x8xf32>
    %360 = arith.subf %356, %359 : vector<8x8xf32>
    %361 = math.exp %360 : vector<8x8xf32>
    %cst_109 = arith.constant dense<0.000000e+00> : vector<8xf32>
    %362 = vector.multi_reduction <add>, %361, %cst_109 [1] : vector<8x8xf32> to vector<8xf32>
    %363 = vector.shape_cast %362 : vector<8xf32> to vector<8x1xf32>
    %364 = tpu.reciprocal %363 {approx = true} : vector<8x1xf32> -> vector<8x1xf32>
    %365 = vector.broadcast %364 : vector<8x1xf32> to vector<8x8xf32>
    %366 = arith.mulf %361, %365 : vector<8x8xf32>
    %367 = vector.broadcast %14 : vector<1x32xf32> to vector<8x32xf32>
    %368 = arith.mulf %328, %367 : vector<8x32xf32>
    %cst_110 = arith.constant dense<0.000000e+00> : vector<8x32xf32>
    %369 = tpu.matmul %366, %368, %cst_110 {dimension_numbers = #tpu.dot_dimension_numbers<[1], [0], [0], [1], [0, 0, 1, 1], [], []>} : vector<8x8xf32>, vector<8x32xf32>, vector<8x32xf32> -> vector<8x32xf32>
    %370 = arith.addf %350, %369 : vector<8x32xf32>
    %371 = vector.broadcast %21 : vector<1x32xf32> to vector<8x32xf32>
    %372 = arith.mulf %318, %371 : vector<8x32xf32>
    %cst_111 = arith.constant dense<0.000000e+00> : vector<8x8xf32>
    %373 = tpu.matmul %372, %329, %cst_111 {dimension_numbers = #tpu.dot_dimension_numbers<[1], [0], [0], [1], [0, 0, 1, 1], [], []>} : vector<8x32xf32>, vector<32x8xf32>, vector<8x8xf32> -> vector<8x8xf32>
    %cst_112 = arith.constant 0.353553385 : f32
    %374 = vector.broadcast %cst_112 : f32 to vector<8x8xf32>
    %375 = arith.mulf %373, %374 : vector<8x8xf32>
    %376 = arith.addf %375, %47 : vector<8x8xf32>
    %cst_113 = arith.constant dense<0xFF800000> : vector<8xf32>
    %377 = vector.multi_reduction <maximumf>, %376, %cst_113 [1] : vector<8x8xf32> to vector<8xf32>
    %378 = vector.shape_cast %377 : vector<8xf32> to vector<8x1xf32>
    %379 = vector.broadcast %378 : vector<8x1xf32> to vector<8x8xf32>
    %380 = arith.subf %376, %379 : vector<8x8xf32>
    %381 = math.exp %380 : vector<8x8xf32>
    %cst_114 = arith.constant dense<0.000000e+00> : vector<8xf32>
    %382 = vector.multi_reduction <add>, %381, %cst_114 [1] : vector<8x8xf32> to vector<8xf32>
    %383 = vector.shape_cast %382 : vector<8xf32> to vector<8x1xf32>
    %384 = tpu.reciprocal %383 {approx = true} : vector<8x1xf32> -> vector<8x1xf32>
    %385 = vector.broadcast %384 : vector<8x1xf32> to vector<8x8xf32>
    %386 = arith.mulf %381, %385 : vector<8x8xf32>
    %387 = vector.broadcast %21 : vector<1x32xf32> to vector<8x32xf32>
    %388 = arith.mulf %328, %387 : vector<8x32xf32>
    %cst_115 = arith.constant dense<0.000000e+00> : vector<8x32xf32>
    %389 = tpu.matmul %386, %388, %cst_115 {dimension_numbers = #tpu.dot_dimension_numbers<[1], [0], [0], [1], [0, 0, 1, 1], [], []>} : vector<8x8xf32>, vector<8x32xf32>, vector<8x32xf32> -> vector<8x32xf32>
    %390 = arith.addf %370, %389 : vector<8x32xf32>
    %391 = vector.broadcast %28 : vector<1x32xf32> to vector<8x32xf32>
    %392 = arith.mulf %318, %391 : vector<8x32xf32>
    %cst_116 = arith.constant dense<0.000000e+00> : vector<8x8xf32>
    %393 = tpu.matmul %392, %329, %cst_116 {dimension_numbers = #tpu.dot_dimension_numbers<[1], [0], [0], [1], [0, 0, 1, 1], [], []>} : vector<8x32xf32>, vector<32x8xf32>, vector<8x8xf32> -> vector<8x8xf32>
    %cst_117 = arith.constant 0.353553385 : f32
    %394 = vector.broadcast %cst_117 : f32 to vector<8x8xf32>
    %395 = arith.mulf %393, %394 : vector<8x8xf32>
    %396 = arith.addf %395, %47 : vector<8x8xf32>
    %cst_118 = arith.constant dense<0xFF800000> : vector<8xf32>
    %397 = vector.multi_reduction <maximumf>, %396, %cst_118 [1] : vector<8x8xf32> to vector<8xf32>
    %398 = vector.shape_cast %397 : vector<8xf32> to vector<8x1xf32>
    %399 = vector.broadcast %398 : vector<8x1xf32> to vector<8x8xf32>
    %400 = arith.subf %396, %399 : vector<8x8xf32>
    %401 = math.exp %400 : vector<8x8xf32>
    %cst_119 = arith.constant dense<0.000000e+00> : vector<8xf32>
    %402 = vector.multi_reduction <add>, %401, %cst_119 [1] : vector<8x8xf32> to vector<8xf32>
    %403 = vector.shape_cast %402 : vector<8xf32> to vector<8x1xf32>
    %404 = tpu.reciprocal %403 {approx = true} : vector<8x1xf32> -> vector<8x1xf32>
    %405 = vector.broadcast %404 : vector<8x1xf32> to vector<8x8xf32>
    %406 = arith.mulf %401, %405 : vector<8x8xf32>
    %407 = vector.broadcast %28 : vector<1x32xf32> to vector<8x32xf32>
    %408 = arith.mulf %328, %407 : vector<8x32xf32>
    %cst_120 = arith.constant dense<0.000000e+00> : vector<8x32xf32>
    %409 = tpu.matmul %406, %408, %cst_120 {dimension_numbers = #tpu.dot_dimension_numbers<[1], [0], [0], [1], [0, 0, 1, 1], [], []>} : vector<8x8xf32>, vector<8x32xf32>, vector<8x32xf32> -> vector<8x32xf32>
    %410 = arith.addf %390, %409 : vector<8x32xf32>
    %411 = arith.truncf %410 : vector<8x32xf32> to vector<8x32xbf16>
    %412 = vector.extract_strided_slice %303 {offsets = [3, 0, 0], sizes = [1, 32, 32], strides = [1, 1, 1]} : vector<4x32x32xbf16> to vector<1x32x32xbf16>
    %413 = vector.shape_cast %412 : vector<1x32x32xbf16> to vector<32x32xbf16>
    %cst_121 = arith.constant dense<0.000000e+00> : vector<8x32xf32>
    %414 = tpu.matmul %411, %413, %cst_121 {dimension_numbers = #tpu.dot_dimension_numbers<[1], [0], [0], [1], [0, 0, 1, 1], [], []>} : vector<8x32xbf16>, vector<32x32xbf16>, vector<8x32xf32> -> vector<8x32xf32>
    %415 = vector.broadcast %309 : vector<1x32xf32> to vector<8x32xf32>
    %416 = arith.addf %414, %415 : vector<8x32xf32>
    %417 = arith.addf %301, %416 : vector<8x32xf32>
    %cst_122 = arith.constant dense<0.000000e+00> : vector<8xf32>
    %418 = vector.multi_reduction <add>, %417, %cst_122 [1] : vector<8x32xf32> to vector<8xf32>
    %419 = vector.shape_cast %418 : vector<8xf32> to vector<8x1xf32>
    %cst_123 = arith.constant 3.200000e+01 : f32
    %420 = vector.broadcast %cst_123 : f32 to vector<8x1xf32>
    %421 = arith.divf %419, %420 : vector<8x1xf32>
    %422 = vector.broadcast %421 : vector<8x1xf32> to vector<8x32xf32>
    %423 = arith.subf %417, %422 : vector<8x32xf32>
    %424 = arith.mulf %423, %423 : vector<8x32xf32>
    %cst_124 = arith.constant dense<0.000000e+00> : vector<8xf32>
    %425 = vector.multi_reduction <add>, %424, %cst_124 [1] : vector<8x32xf32> to vector<8xf32>
    %426 = vector.shape_cast %425 : vector<8xf32> to vector<8x1xf32>
    %cst_125 = arith.constant 3.200000e+01 : f32
    %427 = vector.broadcast %cst_125 : f32 to vector<8x1xf32>
    %428 = arith.divf %426, %427 : vector<8x1xf32>
    %429 = vector.broadcast %421 : vector<8x1xf32> to vector<8x32xf32>
    %430 = arith.subf %417, %429 : vector<8x32xf32>
    %cst_126 = arith.constant 9.99999996E-13 : f32
    %431 = vector.broadcast %cst_126 : f32 to vector<8x1xf32>
    %432 = arith.addf %428, %431 : vector<8x1xf32>
    %433 = math.rsqrt %432 : vector<8x1xf32>
    %434 = vector.broadcast %433 : vector<8x1xf32> to vector<8x32xf32>
    %435 = arith.mulf %430, %434 : vector<8x32xf32>
    %436 = vector.broadcast %310 : vector<1x32xf32> to vector<8x32xf32>
    %437 = arith.mulf %435, %436 : vector<8x32xf32>
    %438 = vector.broadcast %311 : vector<1x32xf32> to vector<8x32xf32>
    %439 = arith.addf %437, %438 : vector<8x32xf32>
    %c0_127 = arith.constant 0 : index
    %c0_128 = arith.constant 0 : index
    %c0_129 = arith.constant 0 : index
    %c0_130 = arith.constant 0 : index
    %440 = vector.load %arg14[%c0_127, %c0_128, %c0_129, %c0_130] : memref<1x4x32x32xbf16, #tpu.memory_space<vmem>>, vector<1x4x32x32xbf16>
    %441 = vector.shape_cast %440 : vector<1x4x32x32xbf16> to vector<4x32x32xbf16>
    %c0_131 = arith.constant 0 : index
    %c0_132 = arith.constant 0 : index
    %c0_133 = arith.constant 0 : index
    %442 = vector.load %arg15[%c0_131, %c0_132, %c0_133] : memref<1x6x32xf32, #tpu.memory_space<vmem>>, vector<1x6x32xf32>
    %443 = vector.shape_cast %442 : vector<1x6x32xf32> to vector<6x32xf32>
    %444 = vector.extract_strided_slice %443 {offsets = [0, 0], sizes = [1, 32], strides = [1, 1]} : vector<6x32xf32> to vector<1x32xf32>
    %445 = vector.extract_strided_slice %443 {offsets = [1, 0], sizes = [1, 32], strides = [1, 1]} : vector<6x32xf32> to vector<1x32xf32>
    %446 = vector.extract_strided_slice %443 {offsets = [2, 0], sizes = [1, 32], strides = [1, 1]} : vector<6x32xf32> to vector<1x32xf32>
    %447 = vector.extract_strided_slice %443 {offsets = [3, 0], sizes = [1, 32], strides = [1, 1]} : vector<6x32xf32> to vector<1x32xf32>
    %448 = vector.extract_strided_slice %443 {offsets = [4, 0], sizes = [1, 32], strides = [1, 1]} : vector<6x32xf32> to vector<1x32xf32>
    %449 = vector.extract_strided_slice %443 {offsets = [5, 0], sizes = [1, 32], strides = [1, 1]} : vector<6x32xf32> to vector<1x32xf32>
    %450 = arith.truncf %439 : vector<8x32xf32> to vector<8x32xbf16>
    %451 = arith.truncf %273 : vector<16x32xf32> to vector<16x32xbf16>
    %452 = vector.extract_strided_slice %441 {offsets = [0, 0, 0], sizes = [1, 32, 32], strides = [1, 1, 1]} : vector<4x32x32xbf16> to vector<1x32x32xbf16>
    %453 = vector.shape_cast %452 : vector<1x32x32xbf16> to vector<32x32xbf16>
    %cst_134 = arith.constant dense<0.000000e+00> : vector<8x32xf32>
    %454 = tpu.matmul %450, %453, %cst_134 {dimension_numbers = #tpu.dot_dimension_numbers<[1], [0], [0], [1], [0, 0, 1, 1], [], []>} : vector<8x32xbf16>, vector<32x32xbf16>, vector<8x32xf32> -> vector<8x32xf32>
    %455 = vector.broadcast %444 : vector<1x32xf32> to vector<8x32xf32>
    %456 = arith.addf %454, %455 : vector<8x32xf32>
    %457 = vector.extract_strided_slice %441 {offsets = [1, 0, 0], sizes = [1, 32, 32], strides = [1, 1, 1]} : vector<4x32x32xbf16> to vector<1x32x32xbf16>
    %458 = vector.shape_cast %457 : vector<1x32x32xbf16> to vector<32x32xbf16>
    %cst_135 = arith.constant dense<0.000000e+00> : vector<16x32xf32>
    %459 = tpu.matmul %451, %458, %cst_135 {dimension_numbers = #tpu.dot_dimension_numbers<[1], [0], [0], [1], [0, 0, 1, 1], [], []>} : vector<16x32xbf16>, vector<32x32xbf16>, vector<16x32xf32> -> vector<16x32xf32>
    %460 = vector.broadcast %445 : vector<1x32xf32> to vector<16x32xf32>
    %461 = arith.addf %459, %460 : vector<16x32xf32>
    %462 = vector.extract_strided_slice %441 {offsets = [2, 0, 0], sizes = [1, 32, 32], strides = [1, 1, 1]} : vector<4x32x32xbf16> to vector<1x32x32xbf16>
    %463 = vector.shape_cast %462 : vector<1x32x32xbf16> to vector<32x32xbf16>
    %cst_136 = arith.constant dense<0.000000e+00> : vector<16x32xf32>
    %464 = tpu.matmul %451, %463, %cst_136 {dimension_numbers = #tpu.dot_dimension_numbers<[1], [0], [0], [1], [0, 0, 1, 1], [], []>} : vector<16x32xbf16>, vector<32x32xbf16>, vector<16x32xf32> -> vector<16x32xf32>
    %465 = vector.broadcast %446 : vector<1x32xf32> to vector<16x32xf32>
    %466 = arith.addf %464, %465 : vector<16x32xf32>
    %467 = tpu.transpose %461, [1, 0] : vector<16x32xf32> -> vector<32x16xf32>
    %cst_137 = arith.constant 0.000000e+00 : f32
    %468 = vector.broadcast %cst_137 : f32 to vector<8x32xf32>
    %469 = vector.broadcast %7 : vector<1x32xf32> to vector<8x32xf32>
    %470 = arith.mulf %456, %469 : vector<8x32xf32>
    %cst_138 = arith.constant dense<0.000000e+00> : vector<8x16xf32>
    %471 = tpu.matmul %470, %467, %cst_138 {dimension_numbers = #tpu.dot_dimension_numbers<[1], [0], [0], [1], [0, 0, 1, 1], [], []>} : vector<8x32xf32>, vector<32x16xf32>, vector<8x16xf32> -> vector<8x16xf32>
    %cst_139 = arith.constant 0.353553385 : f32
    %472 = vector.broadcast %cst_139 : f32 to vector<8x16xf32>
    %473 = arith.mulf %471, %472 : vector<8x16xf32>
    %474 = vector.broadcast %36 : vector<1x16xf32> to vector<8x16xf32>
    %475 = arith.addf %473, %474 : vector<8x16xf32>
    %cst_140 = arith.constant dense<0xFF800000> : vector<8xf32>
    %476 = vector.multi_reduction <maximumf>, %475, %cst_140 [1] : vector<8x16xf32> to vector<8xf32>
    %477 = vector.shape_cast %476 : vector<8xf32> to vector<8x1xf32>
    %478 = vector.broadcast %477 : vector<8x1xf32> to vector<8x16xf32>
    %479 = arith.subf %475, %478 : vector<8x16xf32>
    %480 = math.exp %479 : vector<8x16xf32>
    %cst_141 = arith.constant dense<0.000000e+00> : vector<8xf32>
    %481 = vector.multi_reduction <add>, %480, %cst_141 [1] : vector<8x16xf32> to vector<8xf32>
    %482 = vector.shape_cast %481 : vector<8xf32> to vector<8x1xf32>
    %483 = tpu.reciprocal %482 {approx = true} : vector<8x1xf32> -> vector<8x1xf32>
    %484 = vector.broadcast %483 : vector<8x1xf32> to vector<8x16xf32>
    %485 = arith.mulf %480, %484 : vector<8x16xf32>
    %486 = vector.broadcast %7 : vector<1x32xf32> to vector<16x32xf32>
    %487 = arith.mulf %466, %486 : vector<16x32xf32>
    %cst_142 = arith.constant dense<0.000000e+00> : vector<8x32xf32>
    %488 = tpu.matmul %485, %487, %cst_142 {dimension_numbers = #tpu.dot_dimension_numbers<[1], [0], [0], [1], [0, 0, 1, 1], [], []>} : vector<8x16xf32>, vector<16x32xf32>, vector<8x32xf32> -> vector<8x32xf32>
    %489 = arith.addf %468, %488 : vector<8x32xf32>
    %490 = vector.broadcast %14 : vector<1x32xf32> to vector<8x32xf32>
    %491 = arith.mulf %456, %490 : vector<8x32xf32>
    %cst_143 = arith.constant dense<0.000000e+00> : vector<8x16xf32>
    %492 = tpu.matmul %491, %467, %cst_143 {dimension_numbers = #tpu.dot_dimension_numbers<[1], [0], [0], [1], [0, 0, 1, 1], [], []>} : vector<8x32xf32>, vector<32x16xf32>, vector<8x16xf32> -> vector<8x16xf32>
    %cst_144 = arith.constant 0.353553385 : f32
    %493 = vector.broadcast %cst_144 : f32 to vector<8x16xf32>
    %494 = arith.mulf %492, %493 : vector<8x16xf32>
    %495 = vector.broadcast %36 : vector<1x16xf32> to vector<8x16xf32>
    %496 = arith.addf %494, %495 : vector<8x16xf32>
    %cst_145 = arith.constant dense<0xFF800000> : vector<8xf32>
    %497 = vector.multi_reduction <maximumf>, %496, %cst_145 [1] : vector<8x16xf32> to vector<8xf32>
    %498 = vector.shape_cast %497 : vector<8xf32> to vector<8x1xf32>
    %499 = vector.broadcast %498 : vector<8x1xf32> to vector<8x16xf32>
    %500 = arith.subf %496, %499 : vector<8x16xf32>
    %501 = math.exp %500 : vector<8x16xf32>
    %cst_146 = arith.constant dense<0.000000e+00> : vector<8xf32>
    %502 = vector.multi_reduction <add>, %501, %cst_146 [1] : vector<8x16xf32> to vector<8xf32>
    %503 = vector.shape_cast %502 : vector<8xf32> to vector<8x1xf32>
    %504 = tpu.reciprocal %503 {approx = true} : vector<8x1xf32> -> vector<8x1xf32>
    %505 = vector.broadcast %504 : vector<8x1xf32> to vector<8x16xf32>
    %506 = arith.mulf %501, %505 : vector<8x16xf32>
    %507 = vector.broadcast %14 : vector<1x32xf32> to vector<16x32xf32>
    %508 = arith.mulf %466, %507 : vector<16x32xf32>
    %cst_147 = arith.constant dense<0.000000e+00> : vector<8x32xf32>
    %509 = tpu.matmul %506, %508, %cst_147 {dimension_numbers = #tpu.dot_dimension_numbers<[1], [0], [0], [1], [0, 0, 1, 1], [], []>} : vector<8x16xf32>, vector<16x32xf32>, vector<8x32xf32> -> vector<8x32xf32>
    %510 = arith.addf %489, %509 : vector<8x32xf32>
    %511 = vector.broadcast %21 : vector<1x32xf32> to vector<8x32xf32>
    %512 = arith.mulf %456, %511 : vector<8x32xf32>
    %cst_148 = arith.constant dense<0.000000e+00> : vector<8x16xf32>
    %513 = tpu.matmul %512, %467, %cst_148 {dimension_numbers = #tpu.dot_dimension_numbers<[1], [0], [0], [1], [0, 0, 1, 1], [], []>} : vector<8x32xf32>, vector<32x16xf32>, vector<8x16xf32> -> vector<8x16xf32>
    %cst_149 = arith.constant 0.353553385 : f32
    %514 = vector.broadcast %cst_149 : f32 to vector<8x16xf32>
    %515 = arith.mulf %513, %514 : vector<8x16xf32>
    %516 = vector.broadcast %36 : vector<1x16xf32> to vector<8x16xf32>
    %517 = arith.addf %515, %516 : vector<8x16xf32>
    %cst_150 = arith.constant dense<0xFF800000> : vector<8xf32>
    %518 = vector.multi_reduction <maximumf>, %517, %cst_150 [1] : vector<8x16xf32> to vector<8xf32>
    %519 = vector.shape_cast %518 : vector<8xf32> to vector<8x1xf32>
    %520 = vector.broadcast %519 : vector<8x1xf32> to vector<8x16xf32>
    %521 = arith.subf %517, %520 : vector<8x16xf32>
    %522 = math.exp %521 : vector<8x16xf32>
    %cst_151 = arith.constant dense<0.000000e+00> : vector<8xf32>
    %523 = vector.multi_reduction <add>, %522, %cst_151 [1] : vector<8x16xf32> to vector<8xf32>
    %524 = vector.shape_cast %523 : vector<8xf32> to vector<8x1xf32>
    %525 = tpu.reciprocal %524 {approx = true} : vector<8x1xf32> -> vector<8x1xf32>
    %526 = vector.broadcast %525 : vector<8x1xf32> to vector<8x16xf32>
    %527 = arith.mulf %522, %526 : vector<8x16xf32>
    %528 = vector.broadcast %21 : vector<1x32xf32> to vector<16x32xf32>
    %529 = arith.mulf %466, %528 : vector<16x32xf32>
    %cst_152 = arith.constant dense<0.000000e+00> : vector<8x32xf32>
    %530 = tpu.matmul %527, %529, %cst_152 {dimension_numbers = #tpu.dot_dimension_numbers<[1], [0], [0], [1], [0, 0, 1, 1], [], []>} : vector<8x16xf32>, vector<16x32xf32>, vector<8x32xf32> -> vector<8x32xf32>
    %531 = arith.addf %510, %530 : vector<8x32xf32>
    %532 = vector.broadcast %28 : vector<1x32xf32> to vector<8x32xf32>
    %533 = arith.mulf %456, %532 : vector<8x32xf32>
    %cst_153 = arith.constant dense<0.000000e+00> : vector<8x16xf32>
    %534 = tpu.matmul %533, %467, %cst_153 {dimension_numbers = #tpu.dot_dimension_numbers<[1], [0], [0], [1], [0, 0, 1, 1], [], []>} : vector<8x32xf32>, vector<32x16xf32>, vector<8x16xf32> -> vector<8x16xf32>
    %cst_154 = arith.constant 0.353553385 : f32
    %535 = vector.broadcast %cst_154 : f32 to vector<8x16xf32>
    %536 = arith.mulf %534, %535 : vector<8x16xf32>
    %537 = vector.broadcast %36 : vector<1x16xf32> to vector<8x16xf32>
    %538 = arith.addf %536, %537 : vector<8x16xf32>
    %cst_155 = arith.constant dense<0xFF800000> : vector<8xf32>
    %539 = vector.multi_reduction <maximumf>, %538, %cst_155 [1] : vector<8x16xf32> to vector<8xf32>
    %540 = vector.shape_cast %539 : vector<8xf32> to vector<8x1xf32>
    %541 = vector.broadcast %540 : vector<8x1xf32> to vector<8x16xf32>
    %542 = arith.subf %538, %541 : vector<8x16xf32>
    %543 = math.exp %542 : vector<8x16xf32>
    %cst_156 = arith.constant dense<0.000000e+00> : vector<8xf32>
    %544 = vector.multi_reduction <add>, %543, %cst_156 [1] : vector<8x16xf32> to vector<8xf32>
    %545 = vector.shape_cast %544 : vector<8xf32> to vector<8x1xf32>
    %546 = tpu.reciprocal %545 {approx = true} : vector<8x1xf32> -> vector<8x1xf32>
    %547 = vector.broadcast %546 : vector<8x1xf32> to vector<8x16xf32>
    %548 = arith.mulf %543, %547 : vector<8x16xf32>
    %549 = vector.broadcast %28 : vector<1x32xf32> to vector<16x32xf32>
    %550 = arith.mulf %466, %549 : vector<16x32xf32>
    %cst_157 = arith.constant dense<0.000000e+00> : vector<8x32xf32>
    %551 = tpu.matmul %548, %550, %cst_157 {dimension_numbers = #tpu.dot_dimension_numbers<[1], [0], [0], [1], [0, 0, 1, 1], [], []>} : vector<8x16xf32>, vector<16x32xf32>, vector<8x32xf32> -> vector<8x32xf32>
    %552 = arith.addf %531, %551 : vector<8x32xf32>
    %553 = arith.truncf %552 : vector<8x32xf32> to vector<8x32xbf16>
    %554 = vector.extract_strided_slice %441 {offsets = [3, 0, 0], sizes = [1, 32, 32], strides = [1, 1, 1]} : vector<4x32x32xbf16> to vector<1x32x32xbf16>
    %555 = vector.shape_cast %554 : vector<1x32x32xbf16> to vector<32x32xbf16>
    %cst_158 = arith.constant dense<0.000000e+00> : vector<8x32xf32>
    %556 = tpu.matmul %553, %555, %cst_158 {dimension_numbers = #tpu.dot_dimension_numbers<[1], [0], [0], [1], [0, 0, 1, 1], [], []>} : vector<8x32xbf16>, vector<32x32xbf16>, vector<8x32xf32> -> vector<8x32xf32>
    %557 = vector.broadcast %447 : vector<1x32xf32> to vector<8x32xf32>
    %558 = arith.addf %556, %557 : vector<8x32xf32>
    %559 = arith.addf %439, %558 : vector<8x32xf32>
    %cst_159 = arith.constant dense<0.000000e+00> : vector<8xf32>
    %560 = vector.multi_reduction <add>, %559, %cst_159 [1] : vector<8x32xf32> to vector<8xf32>
    %561 = vector.shape_cast %560 : vector<8xf32> to vector<8x1xf32>
    %cst_160 = arith.constant 3.200000e+01 : f32
    %562 = vector.broadcast %cst_160 : f32 to vector<8x1xf32>
    %563 = arith.divf %561, %562 : vector<8x1xf32>
    %564 = vector.broadcast %563 : vector<8x1xf32> to vector<8x32xf32>
    %565 = arith.subf %559, %564 : vector<8x32xf32>
    %566 = arith.mulf %565, %565 : vector<8x32xf32>
    %cst_161 = arith.constant dense<0.000000e+00> : vector<8xf32>
    %567 = vector.multi_reduction <add>, %566, %cst_161 [1] : vector<8x32xf32> to vector<8xf32>
    %568 = vector.shape_cast %567 : vector<8xf32> to vector<8x1xf32>
    %cst_162 = arith.constant 3.200000e+01 : f32
    %569 = vector.broadcast %cst_162 : f32 to vector<8x1xf32>
    %570 = arith.divf %568, %569 : vector<8x1xf32>
    %571 = vector.broadcast %563 : vector<8x1xf32> to vector<8x32xf32>
    %572 = arith.subf %559, %571 : vector<8x32xf32>
    %cst_163 = arith.constant 9.99999996E-13 : f32
    %573 = vector.broadcast %cst_163 : f32 to vector<8x1xf32>
    %574 = arith.addf %570, %573 : vector<8x1xf32>
    %575 = math.rsqrt %574 : vector<8x1xf32>
    %576 = vector.broadcast %575 : vector<8x1xf32> to vector<8x32xf32>
    %577 = arith.mulf %572, %576 : vector<8x32xf32>
    %578 = vector.broadcast %448 : vector<1x32xf32> to vector<8x32xf32>
    %579 = arith.mulf %577, %578 : vector<8x32xf32>
    %580 = vector.broadcast %449 : vector<1x32xf32> to vector<8x32xf32>
    %581 = arith.addf %579, %580 : vector<8x32xf32>
    %c0_164 = arith.constant 0 : index
    %c0_165 = arith.constant 0 : index
    %c0_166 = arith.constant 0 : index
    %582 = vector.load %arg16[%c0_164, %c0_165, %c0_166] : memref<1x32x64xbf16, #tpu.memory_space<vmem>>, vector<1x32x64xbf16>
    %583 = vector.shape_cast %582 : vector<1x32x64xbf16> to vector<32x64xbf16>
    %c0_167 = arith.constant 0 : index
    %c0_168 = arith.constant 0 : index
    %c0_169 = arith.constant 0 : index
    %584 = vector.load %arg17[%c0_167, %c0_168, %c0_169] : memref<1x1x64xf32, #tpu.memory_space<vmem>>, vector<1x1x64xf32>
    %585 = vector.shape_cast %584 : vector<1x1x64xf32> to vector<1x64xf32>
    %c0_170 = arith.constant 0 : index
    %c0_171 = arith.constant 0 : index
    %c0_172 = arith.constant 0 : index
    %586 = vector.load %arg18[%c0_170, %c0_171, %c0_172] : memref<1x64x32xbf16, #tpu.memory_space<vmem>>, vector<1x64x32xbf16>
    %587 = vector.shape_cast %586 : vector<1x64x32xbf16> to vector<64x32xbf16>
    %c0_173 = arith.constant 0 : index
    %c0_174 = arith.constant 0 : index
    %c0_175 = arith.constant 0 : index
    %588 = vector.load %arg19[%c0_173, %c0_174, %c0_175] : memref<1x3x32xf32, #tpu.memory_space<vmem>>, vector<1x3x32xf32>
    %589 = vector.shape_cast %588 : vector<1x3x32xf32> to vector<3x32xf32>
    %590 = vector.extract_strided_slice %589 {offsets = [0, 0], sizes = [1, 32], strides = [1, 1]} : vector<3x32xf32> to vector<1x32xf32>
    %591 = vector.extract_strided_slice %589 {offsets = [1, 0], sizes = [1, 32], strides = [1, 1]} : vector<3x32xf32> to vector<1x32xf32>
    %592 = vector.extract_strided_slice %589 {offsets = [2, 0], sizes = [1, 32], strides = [1, 1]} : vector<3x32xf32> to vector<1x32xf32>
    %593 = arith.truncf %581 : vector<8x32xf32> to vector<8x32xbf16>
    %cst_176 = arith.constant dense<0.000000e+00> : vector<8x64xf32>
    %594 = tpu.matmul %593, %583, %cst_176 {dimension_numbers = #tpu.dot_dimension_numbers<[1], [0], [0], [1], [0, 0, 1, 1], [], []>} : vector<8x32xbf16>, vector<32x64xbf16>, vector<8x64xf32> -> vector<8x64xf32>
    %595 = vector.broadcast %585 : vector<1x64xf32> to vector<8x64xf32>
    %596 = arith.addf %594, %595 : vector<8x64xf32>
    %597 = arith.mulf %596, %596 : vector<8x64xf32>
    %598 = arith.mulf %596, %597 : vector<8x64xf32>
    %cst_177 = arith.constant 4.471500e-02 : f32
    %599 = vector.broadcast %cst_177 : f32 to vector<8x64xf32>
    %600 = arith.mulf %599, %598 : vector<8x64xf32>
    %601 = arith.addf %596, %600 : vector<8x64xf32>
    %cst_178 = arith.constant 0.797884583 : f32
    %602 = vector.broadcast %cst_178 : f32 to vector<8x64xf32>
    %603 = arith.mulf %602, %601 : vector<8x64xf32>
    %604 = math.tanh %603 : vector<8x64xf32>
    %cst_179 = arith.constant 1.000000e+00 : f32
    %605 = vector.broadcast %cst_179 : f32 to vector<8x64xf32>
    %606 = arith.addf %605, %604 : vector<8x64xf32>
    %cst_180 = arith.constant 5.000000e-01 : f32
    %607 = vector.broadcast %cst_180 : f32 to vector<8x64xf32>
    %608 = arith.mulf %607, %606 : vector<8x64xf32>
    %609 = arith.mulf %596, %608 : vector<8x64xf32>
    %610 = arith.truncf %609 : vector<8x64xf32> to vector<8x64xbf16>
    %cst_181 = arith.constant dense<0.000000e+00> : vector<8x32xf32>
    %611 = tpu.matmul %610, %587, %cst_181 {dimension_numbers = #tpu.dot_dimension_numbers<[1], [0], [0], [1], [0, 0, 1, 1], [], []>} : vector<8x64xbf16>, vector<64x32xbf16>, vector<8x32xf32> -> vector<8x32xf32>
    %612 = vector.broadcast %590 : vector<1x32xf32> to vector<8x32xf32>
    %613 = arith.addf %611, %612 : vector<8x32xf32>
    %614 = arith.addf %581, %613 : vector<8x32xf32>
    %cst_182 = arith.constant dense<0.000000e+00> : vector<8xf32>
    %615 = vector.multi_reduction <add>, %614, %cst_182 [1] : vector<8x32xf32> to vector<8xf32>
    %616 = vector.shape_cast %615 : vector<8xf32> to vector<8x1xf32>
    %cst_183 = arith.constant 3.200000e+01 : f32
    %617 = vector.broadcast %cst_183 : f32 to vector<8x1xf32>
    %618 = arith.divf %616, %617 : vector<8x1xf32>
    %619 = vector.broadcast %618 : vector<8x1xf32> to vector<8x32xf32>
    %620 = arith.subf %614, %619 : vector<8x32xf32>
    %621 = arith.mulf %620, %620 : vector<8x32xf32>
    %cst_184 = arith.constant dense<0.000000e+00> : vector<8xf32>
    %622 = vector.multi_reduction <add>, %621, %cst_184 [1] : vector<8x32xf32> to vector<8xf32>
    %623 = vector.shape_cast %622 : vector<8xf32> to vector<8x1xf32>
    %cst_185 = arith.constant 3.200000e+01 : f32
    %624 = vector.broadcast %cst_185 : f32 to vector<8x1xf32>
    %625 = arith.divf %623, %624 : vector<8x1xf32>
    %626 = vector.broadcast %618 : vector<8x1xf32> to vector<8x32xf32>
    %627 = arith.subf %614, %626 : vector<8x32xf32>
    %cst_186 = arith.constant 9.99999996E-13 : f32
    %628 = vector.broadcast %cst_186 : f32 to vector<8x1xf32>
    %629 = arith.addf %625, %628 : vector<8x1xf32>
    %630 = math.rsqrt %629 : vector<8x1xf32>
    %631 = vector.broadcast %630 : vector<8x1xf32> to vector<8x32xf32>
    %632 = arith.mulf %627, %631 : vector<8x32xf32>
    %633 = vector.broadcast %591 : vector<1x32xf32> to vector<8x32xf32>
    %634 = arith.mulf %632, %633 : vector<8x32xf32>
    %635 = vector.broadcast %592 : vector<1x32xf32> to vector<8x32xf32>
    %636 = arith.addf %634, %635 : vector<8x32xf32>
    %637 = arith.truncf %636 : vector<8x32xf32> to vector<8x32xbf16>
    %c0_187 = arith.constant 0 : index
    %c0_188 = arith.constant 0 : index
    %638 = vector.load %arg20[%c0_187, %c0_188] : memref<32x128xbf16, #tpu.memory_space<vmem>>, vector<32x128xbf16>
    %cst_189 = arith.constant dense<0.000000e+00> : vector<8x128xf32>
    %639 = tpu.matmul %637, %638, %cst_189 {dimension_numbers = #tpu.dot_dimension_numbers<[1], [0], [0], [1], [0, 0, 1, 1], [], []>} : vector<8x32xbf16>, vector<32x128xbf16>, vector<8x128xf32> -> vector<8x128xf32>
    %c0_190 = arith.constant 0 : index
    %c0_191 = arith.constant 0 : index
    %640 = vector.load %arg21[%c0_190, %c0_191] : memref<1x128xf32, #tpu.memory_space<vmem>>, vector<1x128xf32>
    %641 = vector.broadcast %640 : vector<1x128xf32> to vector<8x128xf32>
    %642 = arith.addf %639, %641 : vector<8x128xf32>
    %c0_192 = arith.constant 0 : index
    %c0_193 = arith.constant 0 : index
    %c0_194 = arith.constant 0 : index
    %643 = vector.load %arg22[%c0_192, %c0_193, %c0_194] : memref<1x8x128xf32, #tpu.memory_space<vmem>>, vector<1x8x128xf32>
    %644 = vector.shape_cast %643 : vector<1x8x128xf32> to vector<8x128xf32>
    %645 = vector.shape_cast %642 : vector<8x128xf32> to vector<1x8x128xf32>
    tpu.vector_store %arg22[%c0_192, %c0_193, %c0_194], %645 {strides = array<i32>} : memref<1x8x128xf32, #tpu.memory_space<vmem>>, vector<1x8x128xf32>,
    return
  }
  func.func @transform_0(%arg0: i32) -> (i32, i32, i32) {
    %c0_i32 = arith.constant 0 : i32
    %c0_i32_0 = arith.constant 0 : i32
    %c0_i32_1 = arith.constant 0 : i32
    return %arg0, %c0_i32, %c0_i32_0 : i32, i32, i32
  }
  func.func @transform_1(%arg0: i32) -> (i32, i32, i32) {
    %c0_i32 = arith.constant 0 : i32
    %c0_i32_0 = arith.constant 0 : i32
    %c0_i32_1 = arith.constant 0 : i32
    return %arg0, %c0_i32, %c0_i32_0 : i32, i32, i32
  }
  func.func @transform_2(%arg0: i32) -> (i32, i32, i32) {
    %c0_i32 = arith.constant 0 : i32
    %c0_i32_0 = arith.constant 0 : i32
    %c0_i32_1 = arith.constant 0 : i32
    return %arg0, %c0_i32, %c0_i32_0 : i32, i32, i32
  }
  func.func @transform_3(%arg0: i32) -> (i32, i32, i32) {
    %c0_i32 = arith.constant 0 : i32
    %c0_i32_0 = arith.constant 0 : i32
    %c0_i32_1 = arith.constant 0 : i32
    return %arg0, %c0_i32, %c0_i32_0 : i32, i32, i32
  }
  func.func @transform_4(%arg0: i32) -> (i32, i32, i32) {
    %c0_i32 = arith.constant 0 : i32
    %c0_i32_0 = arith.constant 0 : i32
    %c0_i32_1 = arith.constant 0 : i32
    %c0_i32_2 = arith.constant 0 : i32
    return %c0_i32, %c0_i32_0, %c0_i32_1 : i32, i32, i32
  }
  func.func @transform_5(%arg0: i32) -> (i32, i32, i32, i32) {
    %c0_i32 = arith.constant 0 : i32
    %c0_i32_0 = arith.constant 0 : i32
    %c0_i32_1 = arith.constant 0 : i32
    %c0_i32_2 = arith.constant 0 : i32
    %c0_i32_3 = arith.constant 0 : i32
    return %c0_i32, %c0_i32_0, %c0_i32_1, %c0_i32_2 : i32, i32, i32, i32
  }
  func.func @transform_6(%arg0: i32) -> (i32, i32, i32) {
    %c0_i32 = arith.constant 0 : i32
    %c0_i32_0 = arith.constant 0 : i32
    %c0_i32_1 = arith.constant 0 : i32
    %c0_i32_2 = arith.constant 0 : i32
    return %c0_i32, %c0_i32_0, %c0_i32_1 : i32, i32, i32
  }
  func.func @transform_7(%arg0: i32) -> (i32, i32, i32) {
    %c0_i32 = arith.constant 0 : i32
    %c0_i32_0 = arith.constant 0 : i32
    %c0_i32_1 = arith.constant 0 : i32
    %c0_i32_2 = arith.constant 0 : i32
    return %c0_i32, %c0_i32_0, %c0_i32_1 : i32, i32, i32
  }
  func.func @transform_8(%arg0: i32) -> (i32, i32, i32) {
    %c0_i32 = arith.constant 0 : i32
    %c0_i32_0 = arith.constant 0 : i32
    %c0_i32_1 = arith.constant 0 : i32
    %c0_i32_2 = arith.constant 0 : i32
    return %c0_i32, %c0_i32_0, %c0_i32_1 : i32, i32, i32
  }
  func.func @transform_9(%arg0: i32) -> (i32, i32, i32) {
    %c0_i32 = arith.constant 0 : i32
    %c0_i32_0 = arith.constant 0 : i32
    %c0_i32_1 = arith.constant 0 : i32
    %c0_i32_2 = arith.constant 0 : i32
    return %c0_i32, %c0_i32_0, %c0_i32_1 : i32, i32, i32
  }
  func.func @transform_10(%arg0: i32) -> (i32, i32, i32) {
    %c0_i32 = arith.constant 0 : i32
    %c0_i32_0 = arith.constant 0 : i32
    %c0_i32_1 = arith.constant 0 : i32
    %c0_i32_2 = arith.constant 0 : i32
    return %c0_i32, %c0_i32_0, %c0_i32_1 : i32, i32, i32
  }
  func.func @transform_11(%arg0: i32) -> (i32, i32, i32, i32) {
    %c0_i32 = arith.constant 0 : i32
    %c0_i32_0 = arith.constant 0 : i32
    %c0_i32_1 = arith.constant 0 : i32
    %c0_i32_2 = arith.constant 0 : i32
    %c0_i32_3 = arith.constant 0 : i32
    return %c0_i32, %c0_i32_0, %c0_i32_1, %c0_i32_2 : i32, i32, i32, i32
  }
  func.func @transform_12(%arg0: i32) -> (i32, i32, i32) {
    %c0_i32 = arith.constant 0 : i32
    %c0_i32_0 = arith.constant 0 : i32
    %c0_i32_1 = arith.constant 0 : i32
    %c0_i32_2 = arith.constant 0 : i32
    return %c0_i32, %c0_i32_0, %c0_i32_1 : i32, i32, i32
  }
  func.func @transform_13(%arg0: i32) -> (i32, i32, i32, i32) {
    %c0_i32 = arith.constant 0 : i32
    %c0_i32_0 = arith.constant 0 : i32
    %c0_i32_1 = arith.constant 0 : i32
    %c0_i32_2 = arith.constant 0 : i32
    %c0_i32_3 = arith.constant 0 : i32
    return %c0_i32, %c0_i32_0, %c0_i32_1, %c0_i32_2 : i32, i32, i32, i32
  }
  func.func @transform_14(%arg0: i32) -> (i32, i32, i32) {
    %c0_i32 = arith.constant 0 : i32
    %c0_i32_0 = arith.constant 0 : i32
    %c0_i32_1 = arith.constant 0 : i32
    %c0_i32_2 = arith.constant 0 : i32
    return %c0_i32, %c0_i32_0, %c0_i32_1 : i32, i32, i32
  }
  func.func @transform_15(%arg0: i32) -> (i32, i32, i32) {
    %c0_i32 = arith.constant 0 : i32
    %c0_i32_0 = arith.constant 0 : i32
    %c0_i32_1 = arith.constant 0 : i32
    %c0_i32_2 = arith.constant 0 : i32
    return %c0_i32, %c0_i32_0, %c0_i32_1 : i32, i32, i32
  }
  func.func @transform_16(%arg0: i32) -> (i32, i32, i32) {
    %c0_i32 = arith.constant 0 : i32
    %c0_i32_0 = arith.constant 0 : i32
    %c0_i32_1 = arith.constant 0 : i32
    %c0_i32_2 = arith.constant 0 : i32
    return %c0_i32, %c0_i32_0, %c0_i32_1 : i32, i32, i32
  }
  func.func @transform_17(%arg0: i32) -> (i32, i32, i32) {
    %c0_i32 = arith.constant 0 : i32
    %c0_i32_0 = arith.constant 0 : i32
    %c0_i32_1 = arith.constant 0 : i32
    %c0_i32_2 = arith.constant 0 : i32
    return %c0_i32, %c0_i32_0, %c0_i32_1 : i32, i32, i32
  }
  func.func @transform_18(%arg0: i32) -> (i32, i32, i32) {
    %c0_i32 = arith.constant 0 : i32
    %c0_i32_0 = arith.constant 0 : i32
    %c0_i32_1 = arith.constant 0 : i32
    %c0_i32_2 = arith.constant 0 : i32
    return %c0_i32, %c0_i32_0, %c0_i32_1 : i32, i32, i32
  }
  func.func @transform_19(%arg0: i32) -> (i32, i32) {
    %c0_i32 = arith.constant 0 : i32
    %c0_i32_0 = arith.constant 0 : i32
    %c0_i32_1 = arith.constant 0 : i32
    return %c0_i32, %c0_i32_0 : i32, i32
  }
  func.func @transform_20(%arg0: i32) -> (i32, i32) {
    %c0_i32 = arith.constant 0 : i32
    %c0_i32_0 = arith.constant 0 : i32
    %c0_i32_1 = arith.constant 0 : i32
    return %c0_i32, %c0_i32_0 : i32, i32
  }
  func.func @transform_21(%arg0: i32) -> (i32, i32, i32) {
    %c0_i32 = arith.constant 0 : i32
    %c0_i32_0 = arith.constant 0 : i32
    %c0_i32_1 = arith.constant 0 : i32
    return %arg0, %c0_i32, %c0_i32_0 : i32, i32, i32
  }
}

</mosaic_0001>

<llo_original>
// kernel: tpu_custom_call.1
$region0: #{tpu_custom_call.1}
  #allocation0 [shape = 'u32[]', space=smem, size = 0x4, offset = 0x4, fixed_abs, tag = 'smem constant byte address 0x4 - core index']
  #allocation1 [shape = 'u32[144,128]{1,0:T(1,128)}', space=vmem, size = 0x12000, scoped, tag = 'internal scratch']
  %s0 = inlined_call_operand.hbm [shape: f32[2,16,32], index: 0, kind: input, shape index: {}]
  %s1 = inlined_call_operand.hbm [shape: f32[2,8,32], index: 1, kind: input, shape index: {}]
  %s2 = inlined_call_operand.hbm [shape: f32[2,1,16], index: 2, kind: input, shape index: {}]
  %s3 = inlined_call_operand.hbm [shape: f32[2,1,8], index: 3, kind: input, shape index: {}]
  %s4 = inlined_call_operand.hbm [shape: f32[2,2,32], index: 4, kind: input, shape index: {}]
  %s5 = inlined_call_operand.vmem [shape: bf16[1,4,32,32], index: 5, kind: input, shape index: {}]
  %s6 = inlined_call_operand.vmem [shape: f32[1,6,32], index: 6, kind: input, shape index: {}]
  %s7 = inlined_call_operand.hbm [shape: bf16[1,32,64], index: 7, kind: input, shape index: {}]
  %s8 = inlined_call_operand.hbm [shape: f32[1,1,64], index: 8, kind: input, shape index: {}]
  %s9 = inlined_call_operand.vmem [shape: bf16[1,64,32], index: 9, kind: input, shape index: {}]
  %s10 = inlined_call_operand.vmem [shape: f32[1,3,32], index: 10, kind: input, shape index: {}]
  %s11 = inlined_call_operand.vmem [shape: bf16[1,4,32,32], index: 11, kind: input, shape index: {}]
  %s12 = inlined_call_operand.vmem [shape: f32[1,6,32], index: 12, kind: input, shape index: {}]
  %s13 = inlined_call_operand.hbm [shape: bf16[1,4,32,32], index: 13, kind: input, shape index: {}]
  %s14 = inlined_call_operand.vmem [shape: f32[1,6,32], index: 14, kind: input, shape index: {}]
  %s15 = inlined_call_operand.vmem [shape: bf16[1,32,64], index: 15, kind: input, shape index: {}]
  %s16 = inlined_call_operand.vmem [shape: f32[1,1,64], index: 16, kind: input, shape index: {}]
  %s17 = inlined_call_operand.vmem [shape: bf16[1,64,32], index: 17, kind: input, shape index: {}]
  %s18 = inlined_call_operand.vmem [shape: f32[1,3,32], index: 18, kind: input, shape index: {}]
  %s19 = inlined_call_operand.hbm [shape: bf16[32,128], index: 19, kind: input, shape index: {}]
  %s20 = inlined_call_operand.vmem [shape: f32[1,128], index: 20, kind: input, shape index: {}]
  %s21 = inlined_call_operand.hbm [shape: f32[2,8,128], index: 21, kind: output, shape index: {}]
  %s22 = sld [smem:[#allocation0]]
  $region153: #{tpu_custom_call.1} parent=0
    _
  %s24 = ssub.s32 1, %s22
  %s25 = scalar_select 0, %s24, %s22
  $region1: #{tpu_custom_call.1} parent=0
    #allocation2 [shape = 'u8[16384]{0}', space=vmem, size = 0x4000, scoped, tag = 'input window, operand 0']
    #allocation3 [shape = 's32[2]{0}', space=sflag, size = 0x8, scoped, tag = 'scoped memory for tpu_custom_call.1']
    #allocation4 [shape = 's32[2]{0}', space=sflag, size = 0x8, scoped, tag = 'scoped memory for tpu_custom_call.1']
    #allocation5 [shape = 'u8[8192]{0}', space=vmem, size = 0x2000, scoped, tag = 'input window, operand 1']
    #allocation6 [shape = 's32[2]{0}', space=sflag, size = 0x8, scoped, tag = 'scoped memory for tpu_custom_call.1']
    #allocation7 [shape = 'u8[1024]{0}', space=vmem, size = 0x400, scoped, tag = 'input window, operand 2']
    #allocation8 [shape = 'u8[1024]{0}', space=vmem, size = 0x400, scoped, tag = 'input window, operand 3']
    #allocation9 [shape = 's32[2]{0}', space=sflag, size = 0x8, scoped, tag = 'scoped memory for tpu_custom_call.1']
    #allocation10 [shape = 'u8[2048]{0}', space=vmem, size = 0x800, scoped, tag = 'input window, operand 4, single buffered']
    #allocation11 [shape = 'u8[8192]{0}', space=vmem, size = 0x2000, scoped, tag = 'input window, operand 7, single buffered']
    #allocation12 [shape = 's32[1]{0}', space=sflag, size = 0x4, scoped, tag = 'scoped memory for tpu_custom_call.1']
    #allocation13 [shape = 'u8[512]{0}', space=vmem, size = 0x400, scoped, tag = 'input window, operand 8, single buffered']
    #allocation14 [shape = 'u8[32768]{0}', space=vmem, size = 0x8000, scoped, tag = 'input window, operand 13, single buffered']
    #allocation15 [shape = 's32[1]{0}', space=sflag, size = 0x4, scoped, tag = 'scoped memory for tpu_custom_call.1']
    #allocation16 [shape = 'u8[8192]{0}', space=vmem, size = 0x2000, scoped, tag = 'input window, operand 19, single buffered']
    #allocation17 [shape = 'u8[8192]{0}', space=vmem, size = 0x2000, scoped, tag = 'output window, operand 0']
    %26 = vsyncpa [#allocation3], 0
    %s27 = scalar_lea.sflag [#allocation3], 1
    %28 = vsyncpa %s27, 0
    %29 = vsyncpa [#allocation6], 0
    %s30 = scalar_lea.sflag [#allocation6], 1
    %31 = vsyncpa %s30, 0
    %32 = vsyncpa [#allocation9], 0
    %s33 = scalar_lea.sflag [#allocation9], 1
    %34 = vsyncpa %s33, 0
    %35 = vsyncpa [#allocation12], 0
    %36 = vsyncpa [#allocation15], 0
    %37 = vsyncpa [#allocation4], 0
    %s38 = scalar_lea.sflag [#allocation4], 1
    %39 = vsyncpa %s38, 0
    loop: start=0, step=1, limit=4
    $region2: #{tpu_custom_call.1} parent=1 // loop_pre_header
      _
    $region3: #{tpu_custom_call.1} parent=1 // loop_header
      %s41 = sphi 0, %s45
      %p42 = scmp.ge.s32.totalorder %s41, 4
      %s51 = sphi 0, %s53
      %s54 = sphi 0, %s51
      %s55 = sphi 0, %s54
      %s71 = sphi 0, %s55
      %s77 = sphi 0, %s79
      %s80 = sphi 0, %s77
      %s81 = sphi 0, %s80
      %s97 = sphi 0, %s81
      %s103 = sphi 0, %s105
      %s106 = sphi 0, %s103
      %s107 = sphi 0, %s106
      %s123 = sphi 0, %s107
      %s129 = sphi 0, %s131
      %s132 = sphi 0, %s129
      %s133 = sphi 0, %s132
      %s149 = sphi 0, %s133
      %s153 = sphi 0, %s153
      %s155 = sphi 0, %s153
      %s156 = sphi 0, %s155
      %s170 = sphi 0, %s156
      %s174 = sphi 0, %s174
      %s176 = sphi 0, %s174
      %s177 = sphi 0, %s176
      %s191 = sphi 0, %s177
      %s195 = sphi 0, %s195
      %s197 = sphi 0, %s195
      %s198 = sphi 0, %s197
      %s212 = sphi 0, %s198
      %s216 = sphi 0, %s216
      %s218 = sphi 0, %s216
      %s219 = sphi 0, %s218
      %s233 = sphi 0, %s219
      %s237 = sphi 0, %s237
      %s239 = sphi 0, %s237
      %s240 = sphi 0, %s239
      %s254 = sphi 0, %s240
      %s258 = sphi 0, %s258
      %s260 = sphi 0, %s258
      %s261 = sphi 0, %s260
      %s275 = sphi 0, %s261
      %s279 = sphi 0, %s279
      %s281 = sphi 0, %s279
      %s282 = sphi 0, %s281
      %s296 = sphi 0, %s282
      %s300 = sphi 0, %s300
      %s302 = sphi 0, %s300
      %s303 = sphi 0, %s302
      %s317 = sphi 0, %s303
      %s321 = sphi 0, %s321
      %s323 = sphi 0, %s321
      %s324 = sphi 0, %s323
      %s338 = sphi 0, %s324
      %s342 = sphi 0, %s342
      %s344 = sphi 0, %s342
      %s345 = sphi 0, %s344
      %s359 = sphi 0, %s345
      %s363 = sphi 0, %s363
      %s365 = sphi 0, %s363
      %s366 = sphi 0, %s365
      %s380 = sphi 0, %s366
      %s384 = sphi 0, %s384
      %s386 = sphi 0, %s384
      %s387 = sphi 0, %s386
      %s401 = sphi 0, %s387
      %s405 = sphi 0, %s405
      %s407 = sphi 0, %s405
      %s408 = sphi 0, %s407
      %s422 = sphi 0, %s408
      %s426 = sphi 0, %s426
      %s428 = sphi 0, %s426
      %s429 = sphi 0, %s428
      %s443 = sphi 0, %s429
      %s447 = sphi 0, %s447
      %s449 = sphi 0, %s447
      %s450 = sphi 0, %s449
      %s464 = sphi 0, %s450
      %s468 = sphi 0, %s468
      %s470 = sphi 0, %s468
      %s471 = sphi 0, %s470
      %s485 = sphi 0, %s471
      %s489 = sphi 0, %s489
      %s491 = sphi 0, %s489
      %s492 = sphi 0, %s491
      %s506 = sphi 0, %s492
      %s512 = sphi 0, %s514
      %s515 = sphi 0, %s512
      %s516 = sphi 0, %s515
      %s532 = sphi 0, %s516
    $region4: #{tpu_custom_call.1} parent=1 // loop_header_branch
      %44 = sbr.rel (%p42) target = $region8
    $region5: #{tpu_custom_call.1} parent=1 // loop_body
      %s46 = ssub.s32 %s41, 1
      %s47 = ssub.s32 %s41, 2
      %s48 = sadd.s32 %s41, 1
      %s49 = ssub.s32 %s41, %s48
      %p50 = scmp.eq.s32.totalorder %s49, 0
      %s52 = sadd.s32 %s51, 1
      %s53 = scalar_select %p50, %s51, %s52
      %p56 = pneg %p50
      %p57 = scmp.eq.s32.totalorder %s41, 1
      %p58 = por %p56, %p57
      %p59 = scmp.ne.s32.totalorder %s51, %s54
      %p60 = scmp.eq.s32.totalorder %s41, 0
      %p61 = por %p59, %p60
      %p62 = scmp.ne.s32.totalorder %s51, %s54
      %p63 = scmp.eq.s32.totalorder %s46, 1
      %p64 = por %p62, %p63
      %p65 = scmp.ne.s32.totalorder %s54, %s55
      %p66 = scmp.eq.s32.totalorder %s46, 0
      %p67 = por %p65, %p66
      %p68 = scmp.ne.s32.totalorder %s54, %s55
      %p69 = scmp.eq.s32.totalorder %s47, 1
      %p70 = por %p68, %p69
      %p72 = scmp.ne.s32.totalorder %s55, %s71
      %p73 = scmp.eq.s32.totalorder %s47, 0
      %p74 = por %p72, %p73
      %s75 = ssub.s32 %s41, %s48
      %p76 = scmp.eq.s32.totalorder %s75, 0
      %s78 = sadd.s32 %s77, 1
      %s79 = scalar_select %p76, %s77, %s78
      %p82 = pneg %p76
      %p83 = scmp.eq.s32.totalorder %s41, 1
      %p84 = por %p82, %p83
      %p85 = scmp.ne.s32.totalorder %s77, %s80
      %p86 = scmp.eq.s32.totalorder %s41, 0
      %p87 = por %p85, %p86
      %p88 = scmp.ne.s32.totalorder %s77, %s80
      %p89 = scmp.eq.s32.totalorder %s46, 1
      %p90 = por %p88, %p89
      %p91 = scmp.ne.s32.totalorder %s80, %s81
      %p92 = scmp.eq.s32.totalorder %s46, 0
      %p93 = por %p91, %p92
      %p94 = scmp.ne.s32.totalorder %s80, %s81
      %p95 = scmp.eq.s32.totalorder %s47, 1
      %p96 = por %p94, %p95
      %p98 = scmp.ne.s32.totalorder %s81, %s97
      %p99 = scmp.eq.s32.totalorder %s47, 0
      %p100 = por %p98, %p99
      %s101 = ssub.s32 %s41, %s48
      %p102 = scmp.eq.s32.totalorder %s101, 0
      %s104 = sadd.s32 %s103, 1
      %s105 = scalar_select %p102, %s103, %s104
      %p108 = pneg %p102
      %p109 = scmp.eq.s32.totalorder %s41, 1
      %p110 = por %p108, %p109
      %p111 = scmp.ne.s32.totalorder %s103, %s106
      %p112 = scmp.eq.s32.totalorder %s41, 0
      %p113 = por %p111, %p112
      %p114 = scmp.ne.s32.totalorder %s103, %s106
      %p115 = scmp.eq.s32.totalorder %s46, 1
      %p116 = por %p114, %p115
      %p117 = scmp.ne.s32.totalorder %s106, %s107
      %p118 = scmp.eq.s32.totalorder %s46, 0
      %p119 = por %p117, %p118
      %p120 = scmp.ne.s32.totalorder %s106, %s107
      %p121 = scmp.eq.s32.totalorder %s47, 1
      %p122 = por %p120, %p121
      %p124 = scmp.ne.s32.totalorder %s107, %s123
      %p125 = scmp.eq.s32.totalorder %s47, 0
      %p126 = por %p124, %p125
      %s127 = ssub.s32 %s41, %s48
      %p128 = scmp.eq.s32.totalorder %s127, 0
      %s130 = sadd.s32 %s129, 1
      %s131 = scalar_select %p128, %s129, %s130
      %p134 = pneg %p128
      %p135 = scmp.eq.s32.totalorder %s41, 1
      %p136 = por %p134, %p135
      %p137 = scmp.ne.s32.totalorder %s129, %s132
      %p138 = scmp.eq.s32.totalorder %s41, 0
      %p139 = por %p137, %p138
      %p140 = scmp.ne.s32.totalorder %s129, %s132
      %p141 = scmp.eq.s32.totalorder %s46, 1
      %p142 = por %p140, %p141
      %p143 = scmp.ne.s32.totalorder %s132, %s133
      %p144 = scmp.eq.s32.totalorder %s46, 0
      %p145 = por %p143, %p144
      %p146 = scmp.ne.s32.totalorder %s132, %s133
      %p147 = scmp.eq.s32.totalorder %s47, 1
      %p148 = por %p146, %p147
      %p150 = scmp.ne.s32.totalorder %s133, %s149
      %p151 = scmp.eq.s32.totalorder %s47, 0
      %p152 = por %p150, %p151
      %s154 = sadd.s32 %s153, 1
      %p157 = scmp.eq.s32.totalorder %s41, 1
      %p158 = scmp.ne.s32.totalorder %s153, %s155
      %p159 = scmp.eq.s32.totalorder %s41, 0
      %p160 = por %p158, %p159
      %p161 = scmp.ne.s32.totalorder %s153, %s155
      %p162 = scmp.eq.s32.totalorder %s46, 1
      %p163 = por %p161, %p162
      %p164 = scmp.ne.s32.totalorder %s155, %s156
      %p165 = scmp.eq.s32.totalorder %s46, 0
      %p166 = por %p164, %p165
      %p167 = scmp.ne.s32.totalorder %s155, %s156
      %p168 = scmp.eq.s32.totalorder %s47, 1
      %p169 = por %p167, %p168
      %p171 = scmp.ne.s32.totalorder %s156, %s170
      %p172 = scmp.eq.s32.totalorder %s47, 0
      %p173 = por %p171, %p172
      %s175 = sadd.s32 %s174, 1
      %p178 = scmp.eq.s32.totalorder %s41, 1
      %p179 = scmp.ne.s32.totalorder %s174, %s176
      %p180 = scmp.eq.s32.totalorder %s41, 0
      %p181 = por %p179, %p180
      %p182 = scmp.ne.s32.totalorder %s174, %s176
      %p183 = scmp.eq.s32.totalorder %s46, 1
      %p184 = por %p182, %p183
      %p185 = scmp.ne.s32.totalorder %s176, %s177
      %p186 = scmp.eq.s32.totalorder %s46, 0
      %p187 = por %p185, %p186
      %p188 = scmp.ne.s32.totalorder %s176, %s177
      %p189 = scmp.eq.s32.totalorder %s47, 1
      %p190 = por %p188, %p189
      %p192 = scmp.ne.s32.totalorder %s177, %s191
      %p193 = scmp.eq.s32.totalorder %s47, 0
      %p194 = por %p192, %p193
      %s196 = sadd.s32 %s195, 1
      %p199 = scmp.eq.s32.totalorder %s41, 1
      %p200 = scmp.ne.s32.totalorder %s195, %s197
      %p201 = scmp.eq.s32.totalorder %s41, 0
      %p202 = por %p200, %p201
      %p203 = scmp.ne.s32.totalorder %s195, %s197
      %p204 = scmp.eq.s32.totalorder %s46, 1
      %p205 = por %p203, %p204
      %p206 = scmp.ne.s32.totalorder %s197, %s198
      %p207 = scmp.eq.s32.totalorder %s46, 0
      %p208 = por %p206, %p207
      %p209 = scmp.ne.s32.totalorder %s197, %s198
      %p210 = scmp.eq.s32.totalorder %s47, 1
      %p211 = por %p209, %p210
      %p213 = scmp.ne.s32.totalorder %s198, %s212
      %p214 = scmp.eq.s32.totalorder %s47, 0
      %p215 = por %p213, %p214
      %s217 = sadd.s32 %s216, 1
      %p220 = scmp.eq.s32.totalorder %s41, 1
      %p221 = scmp.ne.s32.totalorder %s216, %s218
      %p222 = scmp.eq.s32.totalorder %s41, 0
      %p223 = por %p221, %p222
      %p224 = scmp.ne.s32.totalorder %s216, %s218
      %p225 = scmp.eq.s32.totalorder %s46, 1
      %p226 = por %p224, %p225
      %p227 = scmp.ne.s32.totalorder %s218, %s219
      %p228 = scmp.eq.s32.totalorder %s46, 0
      %p229 = por %p227, %p228
      %p230 = scmp.ne.s32.totalorder %s218, %s219
      %p231 = scmp.eq.s32.totalorder %s47, 1
      %p232 = por %p230, %p231
      %p234 = scmp.ne.s32.totalorder %s219, %s233
      %p235 = scmp.eq.s32.totalorder %s47, 0
      %p236 = por %p234, %p235
      %s238 = sadd.s32 %s237, 1
      %p241 = scmp.eq.s32.totalorder %s41, 1
      %p242 = scmp.ne.s32.totalorder %s237, %s239
      %p243 = scmp.eq.s32.totalorder %s41, 0
      %p244 = por %p242, %p243
      %p245 = scmp.ne.s32.totalorder %s237, %s239
      %p246 = scmp.eq.s32.totalorder %s46, 1
      %p247 = por %p245, %p246
      %p248 = scmp.ne.s32.totalorder %s239, %s240
      %p249 = scmp.eq.s32.totalorder %s46, 0
      %p250 = por %p248, %p249
      %p251 = scmp.ne.s32.totalorder %s239, %s240
      %p252 = scmp.eq.s32.totalorder %s47, 1
      %p253 = por %p251, %p252
      %p255 = scmp.ne.s32.totalorder %s240, %s254
      %p256 = scmp.eq.s32.totalorder %s47, 0
      %p257 = por %p255, %p256
      %s259 = sadd.s32 %s258, 1
      %p262 = scmp.eq.s32.totalorder %s41, 1
      %p263 = scmp.ne.s32.totalorder %s258, %s260
      %p264 = scmp.eq.s32.totalorder %s41, 0
      %p265 = por %p263, %p264
      %p266 = scmp.ne.s32.totalorder %s258, %s260
      %p267 = scmp.eq.s32.totalorder %s46, 1
      %p268 = por %p266, %p267
      %p269 = scmp.ne.s32.totalorder %s260, %s261
      %p270 = scmp.eq.s32.totalorder %s46, 0
      %p271 = por %p269, %p270
      %p272 = scmp.ne.s32.totalorder %s260, %s261
      %p273 = scmp.eq.s32.totalorder %s47, 1
      %p274 = por %p272, %p273
      %p276 = scmp.ne.s32.totalorder %s261, %s275
      %p277 = scmp.eq.s32.totalorder %s47, 0
      %p278 = por %p276, %p277
      %s280 = sadd.s32 %s279, 1
      %p283 = scmp.eq.s32.totalorder %s41, 1
      %p284 = scmp.ne.s32.totalorder %s279, %s281
      %p285 = scmp.eq.s32.totalorder %s41, 0
      %p286 = por %p284, %p285
      %p287 = scmp.ne.s32.totalorder %s279, %s281
      %p288 = scmp.eq.s32.totalorder %s46, 1
      %p289 = por %p287, %p288
      %p290 = scmp.ne.s32.totalorder %s281, %s282
      %p291 = scmp.eq.s32.totalorder %s46, 0
      %p292 = por %p290, %p291
      %p293 = scmp.ne.s32.totalorder %s281, %s282
      %p294 = scmp.eq.s32.totalorder %s47, 1
      %p295 = por %p293, %p294
      %p297 = scmp.ne.s32.totalorder %s282, %s296
      %p298 = scmp.eq.s32.totalorder %s47, 0
      %p299 = por %p297, %p298
      %s301 = sadd.s32 %s300, 1
      %p304 = scmp.eq.s32.totalorder %s41, 1
      %p305 = scmp.ne.s32.totalorder %s300, %s302
      %p306 = scmp.eq.s32.totalorder %s41, 0
      %p307 = por %p305, %p306
      %p308 = scmp.ne.s32.totalorder %s300, %s302
      %p309 = scmp.eq.s32.totalorder %s46, 1
      %p310 = por %p308, %p309
      %p311 = scmp.ne.s32.totalorder %s302, %s303
      %p312 = scmp.eq.s32.totalorder %s46, 0
      %p313 = por %p311, %p312
      %p314 = scmp.ne.s32.totalorder %s302, %s303
      %p315 = scmp.eq.s32.totalorder %s47, 1
      %p316 = por %p314, %p315
      %p318 = scmp.ne.s32.totalorder %s303, %s317
      %p319 = scmp.eq.s32.totalorder %s47, 0
      %p320 = por %p318, %p319
      %s322 = sadd.s32 %s321, 1
      %p325 = scmp.eq.s32.totalorder %s41, 1
      %p326 = scmp.ne.s32.totalorder %s321, %s323
      %p327 = scmp.eq.s32.totalorder %s41, 0
      %p328 = por %p326, %p327
      %p329 = scmp.ne.s32.totalorder %s321, %s323
      %p330 = scmp.eq.s32.totalorder %s46, 1
      %p331 = por %p329, %p330
      %p332 = scmp.ne.s32.totalorder %s323, %s324
      %p333 = scmp.eq.s32.totalorder %s46, 0
      %p334 = por %p332, %p333
      %p335 = scmp.ne.s32.totalorder %s323, %s324
      %p336 = scmp.eq.s32.totalorder %s47, 1
      %p337 = por %p335, %p336
      %p339 = scmp.ne.s32.totalorder %s324, %s338
      %p340 = scmp.eq.s32.totalorder %s47, 0
      %p341 = por %p339, %p340
      %s343 = sadd.s32 %s342, 1
      %p346 = scmp.eq.s32.totalorder %s41, 1
      %p347 = scmp.ne.s32.totalorder %s342, %s344
      %p348 = scmp.eq.s32.totalorder %s41, 0
      %p349 = por %p347, %p348
      %p350 = scmp.ne.s32.totalorder %s342, %s344
      %p351 = scmp.eq.s32.totalorder %s46, 1
      %p352 = por %p350, %p351
      %p353 = scmp.ne.s32.totalorder %s344, %s345
      %p354 = scmp.eq.s32.totalorder %s46, 0
      %p355 = por %p353, %p354
      %p356 = scmp.ne.s32.totalorder %s344, %s345
      %p357 = scmp.eq.s32.totalorder %s47, 1
      %p358 = por %p356, %p357
      %p360 = scmp.ne.s32.totalorder %s345, %s359
      %p361 = scmp.eq.s32.totalorder %s47, 0
      %p362 = por %p360, %p361
      %s364 = sadd.s32 %s363, 1
      %p367 = scmp.eq.s32.totalorder %s41, 1
      %p368 = scmp.ne.s32.totalorder %s363, %s365
      %p369 = scmp.eq.s32.totalorder %s41, 0
      %p370 = por %p368, %p369
      %p371 = scmp.ne.s32.totalorder %s363, %s365
      %p372 = scmp.eq.s32.totalorder %s46, 1
      %p373 = por %p371, %p372
      %p374 = scmp.ne.s32.totalorder %s365, %s366
      %p375 = scmp.eq.s32.totalorder %s46, 0
      %p376 = por %p374, %p375
      %p377 = scmp.ne.s32.totalorder %s365, %s366
      %p378 = scmp.eq.s32.totalorder %s47, 1
      %p379 = por %p377, %p378
      %p381 = scmp.ne.s32.totalorder %s366, %s380
      %p382 = scmp.eq.s32.totalorder %s47, 0
      %p383 = por %p381, %p382
      %s385 = sadd.s32 %s384, 1
      %p388 = scmp.eq.s32.totalorder %s41, 1
      %p389 = scmp.ne.s32.totalorder %s384, %s386
      %p390 = scmp.eq.s32.totalorder %s41, 0
      %p391 = por %p389, %p390
      %p392 = scmp.ne.s32.totalorder %s384, %s386
      %p393 = scmp.eq.s32.totalorder %s46, 1
      %p394 = por %p392, %p393
      %p395 = scmp.ne.s32.totalorder %s386, %s387
      %p396 = scmp.eq.s32.totalorder %s46, 0
      %p397 = por %p395, %p396
      %p398 = scmp.ne.s32.totalorder %s386, %s387
      %p399 = scmp.eq.s32.totalorder %s47, 1
      %p400 = por %p398, %p399
      %p402 = scmp.ne.s32.totalorder %s387, %s401
      %p403 = scmp.eq.s32.totalorder %s47, 0
      %p404 = por %p402, %p403
      %s406 = sadd.s32 %s405, 1
      %p409 = scmp.eq.s32.totalorder %s41, 1
      %p410 = scmp.ne.s32.totalorder %s405, %s407
      %p411 = scmp.eq.s32.totalorder %s41, 0
      %p412 = por %p410, %p411
      %p413 = scmp.ne.s32.totalorder %s405, %s407
      %p414 = scmp.eq.s32.totalorder %s46, 1
      %p415 = por %p413, %p414
      %p416 = scmp.ne.s32.totalorder %s407, %s408
      %p417 = scmp.eq.s32.totalorder %s46, 0
      %p418 = por %p416, %p417
      %p419 = scmp.ne.s32.totalorder %s407, %s408
      %p420 = scmp.eq.s32.totalorder %s47, 1
      %p421 = por %p419, %p420
      %p423 = scmp.ne.s32.totalorder %s408, %s422
      %p424 = scmp.eq.s32.totalorder %s47, 0
      %p425 = por %p423, %p424
      %s427 = sadd.s32 %s426, 1
      %p430 = scmp.eq.s32.totalorder %s41, 1
      %p431 = scmp.ne.s32.totalorder %s426, %s428
      %p432 = scmp.eq.s32.totalorder %s41, 0
      %p433 = por %p431, %p432
      %p434 = scmp.ne.s32.totalorder %s426, %s428
      %p435 = scmp.eq.s32.totalorder %s46, 1
      %p436 = por %p434, %p435
      %p437 = scmp.ne.s32.totalorder %s428, %s429
      %p438 = scmp.eq.s32.totalorder %s46, 0
      %p439 = por %p437, %p438
      %p440 = scmp.ne.s32.totalorder %s428, %s429
      %p441 = scmp.eq.s32.totalorder %s47, 1
      %p442 = por %p440, %p441
      %p444 = scmp.ne.s32.totalorder %s429, %s443
      %p445 = scmp.eq.s32.totalorder %s47, 0
      %p446 = por %p444, %p445
      %s448 = sadd.s32 %s447, 1
      %p451 = scmp.eq.s32.totalorder %s41, 1
      %p452 = scmp.ne.s32.totalorder %s447, %s449
      %p453 = scmp.eq.s32.totalorder %s41, 0
      %p454 = por %p452, %p453
      %p455 = scmp.ne.s32.totalorder %s447, %s449
      %p456 = scmp.eq.s32.totalorder %s46, 1
      %p457 = por %p455, %p456
      %p458 = scmp.ne.s32.totalorder %s449, %s450
      %p459 = scmp.eq.s32.totalorder %s46, 0
      %p460 = por %p458, %p459
      %p461 = scmp.ne.s32.totalorder %s449, %s450
      %p462 = scmp.eq.s32.totalorder %s47, 1
      %p463 = por %p461, %p462
      %p465 = scmp.ne.s32.totalorder %s450, %s464
      %p466 = scmp.eq.s32.totalorder %s47, 0
      %p467 = por %p465, %p466
      %s469 = sadd.s32 %s468, 1
      %p472 = scmp.eq.s32.totalorder %s41, 1
      %p473 = scmp.ne.s32.totalorder %s468, %s470
      %p474 = scmp.eq.s32.totalorder %s41, 0
      %p475 = por %p473, %p474
      %p476 = scmp.ne.s32.totalorder %s468, %s470
      %p477 = scmp.eq.s32.totalorder %s46, 1
      %p478 = por %p476, %p477
      %p479 = scmp.ne.s32.totalorder %s470, %s471
      %p480 = scmp.eq.s32.totalorder %s46, 0
      %p481 = por %p479, %p480
      %p482 = scmp.ne.s32.totalorder %s470, %s471
      %p483 = scmp.eq.s32.totalorder %s47, 1
      %p484 = por %p482, %p483
      %p486 = scmp.ne.s32.totalorder %s471, %s485
      %p487 = scmp.eq.s32.totalorder %s47, 0
      %p488 = por %p486, %p487
      %s490 = sadd.s32 %s489, 1
      %p493 = scmp.eq.s32.totalorder %s41, 1
      %p494 = scmp.ne.s32.totalorder %s489, %s491
      %p495 = scmp.eq.s32.totalorder %s41, 0
      %p496 = por %p494, %p495
      %p497 = scmp.ne.s32.totalorder %s489, %s491
      %p498 = scmp.eq.s32.totalorder %s46, 1
      %p499 = por %p497, %p498
      %p500 = scmp.ne.s32.totalorder %s491, %s492
      %p501 = scmp.eq.s32.totalorder %s46, 0
      %p502 = por %p500, %p501
      %p503 = scmp.ne.s32.totalorder %s491, %s492
      %p504 = scmp.eq.s32.totalorder %s47, 1
      %p505 = por %p503, %p504
      %p507 = scmp.ne.s32.totalorder %s492, %s506
      %p508 = scmp.eq.s32.totalorder %s47, 0
      %p509 = por %p507, %p508
      %s510 = ssub.s32 %s41, %s48
      %p511 = scmp.eq.s32.totalorder %s510, 0
      %s513 = sadd.s32 %s512, 1
      %s514 = scalar_select %p511, %s512, %s513
      %p517 = pneg %p511
      %p518 = scmp.eq.s32.totalorder %s41, 1
      %p519 = por %p517, %p518
      %p520 = scmp.ne.s32.totalorder %s512, %s515
      %p521 = scmp.eq.s32.totalorder %s41, 0
      %p522 = por %p520, %p521
      %p523 = scmp.ne.s32.totalorder %s512, %s515
      %p524 = scmp.eq.s32.totalorder %s46, 1
      %p525 = por %p523, %p524
      %p526 = scmp.ne.s32.totalorder %s515, %s516
      %p527 = scmp.eq.s32.totalorder %s46, 0
      %p528 = por %p526, %p527
      %p529 = scmp.ne.s32.totalorder %s515, %s516
      %p530 = scmp.eq.s32.totalorder %s47, 1
      %p531 = por %p529, %p530
      %p533 = scmp.ne.s32.totalorder %s516, %s532
      %p534 = scmp.eq.s32.totalorder %s47, 0
      %p535 = por %p533, %p534
      %p536 = scmp.le.s32.totalorder 1, %s41
      %p537 = scmp.lt.s32.totalorder %s41, 3
      %p538 = pnand %p536, %p537
      %p539 = pneg %p538
      // Predicated region
      $region9: #{tpu_custom_call.1} parent=5 // pred_check
        _
      $region10: #{tpu_custom_call.1} parent=5 // pred_check_branch
        %541 = sbr.rel (%p538) target = $region12
      $region11: #{tpu_custom_call.1} parent=5 // pred_region
        %s542 = ssub.s32 %s41, 1
        // Predicated region
        $region13: #{tpu_custom_call.1} parent=11 // pred_check
          %p543 = pneg %p166
        $region14: #{tpu_custom_call.1} parent=11 // pred_check_branch
          %545 = sbr.rel (%p543) target = $region16
        $region15: #{tpu_custom_call.1} parent=11 // pred_region
          %s547 = ssub.s32 64, 64
          %548 = vsyncadd [#allocation9], %s547
          %s549 = sshll.u32 [#allocation10], 4
          %s550 = int_to_ptr.vmem [resolvable:$true] %s549
          %555 = dma.hbm_to_vmem [thread:$0]  %s4, 64, %s550, [#allocation9], 32, 32, 2
        $region16: #{tpu_custom_call.1} parent=11 // pred_fallthru
          _
        // Predicated region
        $region17: #{tpu_custom_call.1} parent=11 // pred_check
          %p556 = pneg %p187
        $region18: #{tpu_custom_call.1} parent=11 // pred_check_branch
          %558 = sbr.rel (%p556) target = $region20
        $region19: #{tpu_custom_call.1} parent=11 // pred_region
          _
        $region20: #{tpu_custom_call.1} parent=11 // pred_fallthru
          _
        // Predicated region
        $region21: #{tpu_custom_call.1} parent=11 // pred_check
          %p559 = pneg %p208
        $region22: #{tpu_custom_call.1} parent=11 // pred_check_branch
          %561 = sbr.rel (%p559) target = $region24
        $region23: #{tpu_custom_call.1} parent=11 // pred_region
          _
        $region24: #{tpu_custom_call.1} parent=11 // pred_fallthru
          _
        // Predicated region
        $region25: #{tpu_custom_call.1} parent=11 // pred_check
          %p562 = pneg %p229
        $region26: #{tpu_custom_call.1} parent=11 // pred_check_branch
          %564 = sbr.rel (%p562) target = $region28
        $region27: #{tpu_custom_call.1} parent=11 // pred_region
          %s566 = ssub.s32 256, 256
          %567 = vsyncadd [#allocation12], %s566
          %s568 = sshll.u32 [#allocation11], 4
          %s569 = int_to_ptr.vmem [resolvable:$true] %s568
          %574 = dma.hbm_to_vmem [thread:$0]  %s7, 256, %s569, [#allocation12], 64, 64, 4
        $region28: #{tpu_custom_call.1} parent=11 // pred_fallthru
          _
        // Predicated region
        $region29: #{tpu_custom_call.1} parent=11 // pred_check
          %p575 = pneg %p250
        $region30: #{tpu_custom_call.1} parent=11 // pred_check_branch
          %577 = sbr.rel (%p575) target = $region32
        $region31: #{tpu_custom_call.1} parent=11 // pred_region
          %s579 = ssub.s32 16, 16
          %580 = vsyncadd [#allocation12], %s579
          %s582 = sshll.u32 [#allocation13], 4
          %s583 = int_to_ptr.vmem [resolvable:$true] %s582
          %585 = dma.hbm_to_vmem [thread:$0]  %s8, 16, %s583, [#allocation12]
        $region32: #{tpu_custom_call.1} parent=11 // pred_fallthru
          _
        // Predicated region
        $region33: #{tpu_custom_call.1} parent=11 // pred_check
          %p586 = pneg %p271
        $region34: #{tpu_custom_call.1} parent=11 // pred_check_branch
          %588 = sbr.rel (%p586) target = $region36
        $region35: #{tpu_custom_call.1} parent=11 // pred_region
          _
        $region36: #{tpu_custom_call.1} parent=11 // pred_fallthru
          _
        // Predicated region
        $region37: #{tpu_custom_call.1} parent=11 // pred_check
          %p589 = pneg %p292
        $region38: #{tpu_custom_call.1} parent=11 // pred_check_branch
          %591 = sbr.rel (%p589) target = $region40
        $region39: #{tpu_custom_call.1} parent=11 // pred_region
          _
        $region40: #{tpu_custom_call.1} parent=11 // pred_fallthru
          _
        // Predicated region
        $region41: #{tpu_custom_call.1} parent=11 // pred_check
          %p592 = pneg %p313
        $region42: #{tpu_custom_call.1} parent=11 // pred_check_branch
          %594 = sbr.rel (%p592) target = $region44
        $region43: #{tpu_custom_call.1} parent=11 // pred_region
          _
        $region44: #{tpu_custom_call.1} parent=11 // pred_fallthru
          _
        // Predicated region
        $region45: #{tpu_custom_call.1} parent=11 // pred_check
          %p595 = pneg %p334
        $region46: #{tpu_custom_call.1} parent=11 // pred_check_branch
          %597 = sbr.rel (%p595) target = $region48
        $region47: #{tpu_custom_call.1} parent=11 // pred_region
          _
        $region48: #{tpu_custom_call.1} parent=11 // pred_fallthru
          _
        // Predicated region
        $region49: #{tpu_custom_call.1} parent=11 // pred_check
          %p598 = pneg %p355
        $region50: #{tpu_custom_call.1} parent=11 // pred_check_branch
          %600 = sbr.rel (%p598) target = $region52
        $region51: #{tpu_custom_call.1} parent=11 // pred_region
          %s602 = ssub.s32 1024, 1024
          %603 = vsyncadd [#allocation15], %s602
          %s604 = sshll.u32 [#allocation14], 4
          %s605 = int_to_ptr.vmem [resolvable:$true] %s604
          %610 = dma.hbm_to_vmem [thread:$0]  %s13, 1024, %s605, [#allocation15], 64, 64, 4
        $region52: #{tpu_custom_call.1} parent=11 // pred_fallthru
          _
        // Predicated region
        $region53: #{tpu_custom_call.1} parent=11 // pred_check
          %p611 = pneg %p376
        $region54: #{tpu_custom_call.1} parent=11 // pred_check_branch
          %613 = sbr.rel (%p611) target = $region56
        $region55: #{tpu_custom_call.1} parent=11 // pred_region
          _
        $region56: #{tpu_custom_call.1} parent=11 // pred_fallthru
          _
        // Predicated region
        $region57: #{tpu_custom_call.1} parent=11 // pred_check
          %p614 = pneg %p397
        $region58: #{tpu_custom_call.1} parent=11 // pred_check_branch
          %616 = sbr.rel (%p614) target = $region60
        $region59: #{tpu_custom_call.1} parent=11 // pred_region
          _
        $region60: #{tpu_custom_call.1} parent=11 // pred_fallthru
          _
        // Predicated region
        $region61: #{tpu_custom_call.1} parent=11 // pred_check
          %p617 = pneg %p418
        $region62: #{tpu_custom_call.1} parent=11 // pred_check_branch
          %619 = sbr.rel (%p617) target = $region64
        $region63: #{tpu_custom_call.1} parent=11 // pred_region
          _
        $region64: #{tpu_custom_call.1} parent=11 // pred_fallthru
          _
        // Predicated region
        $region65: #{tpu_custom_call.1} parent=11 // pred_check
          %p620 = pneg %p439
        $region66: #{tpu_custom_call.1} parent=11 // pred_check_branch
          %622 = sbr.rel (%p620) target = $region68
        $region67: #{tpu_custom_call.1} parent=11 // pred_region
          _
        $region68: #{tpu_custom_call.1} parent=11 // pred_fallthru
          _
        // Predicated region
        $region69: #{tpu_custom_call.1} parent=11 // pred_check
          %p623 = pneg %p460
        $region70: #{tpu_custom_call.1} parent=11 // pred_check_branch
          %625 = sbr.rel (%p623) target = $region72
        $region71: #{tpu_custom_call.1} parent=11 // pred_region
          _
        $region72: #{tpu_custom_call.1} parent=11 // pred_fallthru
          _
        // Predicated region
        $region73: #{tpu_custom_call.1} parent=11 // pred_check
          %p626 = pneg %p481
        $region74: #{tpu_custom_call.1} parent=11 // pred_check_branch
          %628 = sbr.rel (%p626) target = $region76
        $region75: #{tpu_custom_call.1} parent=11 // pred_region
          %s630 = ssub.s32 256, 256
          %631 = vsyncadd [#allocation15], %s630
          %s632 = sshll.u32 [#allocation16], 4
          %s633 = int_to_ptr.vmem [resolvable:$true] %s632
          %638 = dma.hbm_to_vmem [thread:$0]  %s19, 256, %s633, [#allocation15], 64, 64, 4
        $region76: #{tpu_custom_call.1} parent=11 // pred_fallthru
          _
        // Predicated region
        $region77: #{tpu_custom_call.1} parent=11 // pred_check
          %p639 = pneg %p502
        $region78: #{tpu_custom_call.1} parent=11 // pred_check_branch
          %641 = sbr.rel (%p639) target = $region80
        $region79: #{tpu_custom_call.1} parent=11 // pred_region
          _
        $region80: #{tpu_custom_call.1} parent=11 // pred_fallthru
          _
      $region12: #{tpu_custom_call.1} parent=5 // pred_fallthru
        _
      %p642 = scmp.lt.s32.totalorder %s41, 2
      // Predicated region
      $region81: #{tpu_custom_call.1} parent=5 // pred_check
        %p643 = pneg %p642
      $region82: #{tpu_custom_call.1} parent=5 // pred_check_branch
        %645 = sbr.rel (%p643) target = $region84
      $region83: #{tpu_custom_call.1} parent=5 // pred_region
        // Predicated region
        $region85: #{tpu_custom_call.1} parent=83 // pred_check
          %p646 = pneg %p61
        $region86: #{tpu_custom_call.1} parent=83 // pred_check_branch
          %648 = sbr.rel (%p646) target = $region88
        $region87: #{tpu_custom_call.1} parent=83 // pred_region
          %s649 = sand.u32 %s51, 1
          %s650 = scalar_lea.sflag [#allocation3], %s649
          %s651 = sand.u32 %s51, 1
          %s652 = smul.addr %s651, 16
          %s653 = scalar_lea.vmem [#allocation2], %s652
          %s655 = ssub.s32 256, 256
          %656 = vsyncadd %s650, %s655
          %s657 = smul.addr %s41, 2
          %s658 = smul.addr %s657, 128
          %s659 = scalar_lea.hbm %s0, %s658
          %s660 = sshll.u32 %s653, 4
          %s661 = int_to_ptr.vmem [resolvable:$true] %s660
          %666 = dma.hbm_to_vmem [thread:$0]  %s659, 256, %s661, %s650, 128, 128, 8
        $region88: #{tpu_custom_call.1} parent=83 // pred_fallthru
          _
        // Predicated region
        $region89: #{tpu_custom_call.1} parent=83 // pred_check
          %p667 = pneg %p87
        $region90: #{tpu_custom_call.1} parent=83 // pred_check_branch
          %669 = sbr.rel (%p667) target = $region92
        $region91: #{tpu_custom_call.1} parent=83 // pred_region
          %s670 = sand.u32 %s41, 1
          %s671 = scalar_lea.sflag [#allocation6], %s670
          %s672 = sand.u32 %s77, 1
          %s673 = smul.addr %s672, 8
          %s674 = scalar_lea.vmem [#allocation5], %s673
          %s676 = ssub.s32 128, 128
          %677 = vsyncadd %s671, %s676
          %s678 = smul.addr %s41, 128
          %s679 = scalar_lea.hbm %s1, %s678
          %s681 = sshll.u32 %s674, 4
          %s682 = int_to_ptr.vmem [resolvable:$true] %s681
          %684 = dma.hbm_to_vmem [thread:$0]  %s679, 128, %s682, %s671
        $region92: #{tpu_custom_call.1} parent=83 // pred_fallthru
          _
        // Predicated region
        $region93: #{tpu_custom_call.1} parent=83 // pred_check
          %p685 = pneg %p113
        $region94: #{tpu_custom_call.1} parent=83 // pred_check_branch
          %687 = sbr.rel (%p685) target = $region96
        $region95: #{tpu_custom_call.1} parent=83 // pred_region
          %s688 = sand.u32 %s41, 1
          %s689 = scalar_lea.sflag [#allocation6], %s688
          %s690 = sand.u32 %s103, 1
          %s691 = scalar_lea.vmem [#allocation7], %s690
          %s693 = ssub.s32 16, 16
          %694 = vsyncadd %s689, %s693
          %s695 = smul.addr %s41, 16
          %s696 = scalar_lea.hbm %s2, %s695
          %s698 = sshll.u32 %s691, 4
          %s699 = int_to_ptr.vmem [resolvable:$true] %s698
          %701 = dma.hbm_to_vmem [thread:$0]  %s696, 16, %s699, %s689
        $region96: #{tpu_custom_call.1} parent=83 // pred_fallthru
          _
        // Predicated region
        $region97: #{tpu_custom_call.1} parent=83 // pred_check
          %p702 = pneg %p139
        $region98: #{tpu_custom_call.1} parent=83 // pred_check_branch
          %704 = sbr.rel (%p702) target = $region100
        $region99: #{tpu_custom_call.1} parent=83 // pred_region
          %s705 = sand.u32 %s41, 1
          %s706 = scalar_lea.sflag [#allocation9], %s705
          %s707 = sand.u32 %s129, 1
          %s708 = scalar_lea.vmem [#allocation8], %s707
          %s710 = ssub.s32 16, 16
          %711 = vsyncadd %s706, %s710
          %s712 = smul.addr %s41, 16
          %s713 = scalar_lea.hbm %s3, %s712
          %s715 = sshll.u32 %s708, 4
          %s716 = int_to_ptr.vmem [resolvable:$true] %s715
          %718 = dma.hbm_to_vmem [thread:$0]  %s713, 16, %s716, %s706
        $region100: #{tpu_custom_call.1} parent=83 // pred_fallthru
          _
      $region84: #{tpu_custom_call.1} parent=5 // pred_fallthru
        _
      %p719 = scmp.le.s32.totalorder 1, %s41
      %p720 = scmp.lt.s32.totalorder %s41, 3
      %p721 = pnand %p719, %p720
      %p722 = pneg %p721
      // Predicated region
      $region101: #{tpu_custom_call.1} parent=5 // pred_check
        _
      $region102: #{tpu_custom_call.1} parent=5 // pred_check_branch
        %724 = sbr.rel (%p721) target = $region104
      $region103: #{tpu_custom_call.1} parent=5 // pred_region
        %s725 = ssub.s32 %s41, 1
        %s726 = sand.u32 %s54, 1
        %s727 = scalar_lea.sflag [#allocation3], %s726
        %s728 = sand.u32 %s54, 1
        %s729 = smul.addr %s728, 16
        %s730 = scalar_lea.vmem [#allocation2], %s729
        // Predicated region
        $region105: #{tpu_custom_call.1} parent=103 // pred_check
          %p731 = pneg %p67
        $region106: #{tpu_custom_call.1} parent=103 // pred_check_branch
          %733 = sbr.rel (%p731) target = $region108
        $region107: #{tpu_custom_call.1} parent=103 // pred_region
          %734 = dma.done %s727, 256
        $region108: #{tpu_custom_call.1} parent=103 // pred_fallthru
          _
        %s735 = sand.u32 %s46, 1
        %s736 = scalar_lea.sflag [#allocation6], %s735
        %s737 = sand.u32 %s80, 1
        %s738 = smul.addr %s737, 8
        %s739 = scalar_lea.vmem [#allocation5], %s738
        // Predicated region
        $region109: #{tpu_custom_call.1} parent=103 // pred_check
          %p740 = pneg %p93
        $region110: #{tpu_custom_call.1} parent=103 // pred_check_branch
          %742 = sbr.rel (%p740) target = $region112
        $region111: #{tpu_custom_call.1} parent=103 // pred_region
          %743 = dma.done %s736, 128
        $region112: #{tpu_custom_call.1} parent=103 // pred_fallthru
          _
        %s744 = sand.u32 %s46, 1
        %s745 = scalar_lea.sflag [#allocation6], %s744
        %s746 = sand.u32 %s106, 1
        %s747 = scalar_lea.vmem [#allocation7], %s746
        // Predicated region
        $region113: #{tpu_custom_call.1} parent=103 // pred_check
          %p748 = pneg %p119
        $region114: #{tpu_custom_call.1} parent=103 // pred_check_branch
          %750 = sbr.rel (%p748) target = $region116
        $region115: #{tpu_custom_call.1} parent=103 // pred_region
          %751 = dma.done %s745, 16
        $region116: #{tpu_custom_call.1} parent=103 // pred_fallthru
          _
        %s752 = sand.u32 %s46, 1
        %s753 = scalar_lea.sflag [#allocation9], %s752
        %s754 = sand.u32 %s132, 1
        %s755 = scalar_lea.vmem [#allocation8], %s754
        // Predicated region
        $region117: #{tpu_custom_call.1} parent=103 // pred_check
          %p756 = pneg %p145
        $region118: #{tpu_custom_call.1} parent=103 // pred_check_branch
          %758 = sbr.rel (%p756) target = $region120
        $region119: #{tpu_custom_call.1} parent=103 // pred_region
          %759 = dma.done %s753, 16
        $region120: #{tpu_custom_call.1} parent=103 // pred_fallthru
          _
        // Predicated region
        $region121: #{tpu_custom_call.1} parent=103 // pred_check
          %p760 = pneg %p166
        $region122: #{tpu_custom_call.1} parent=103 // pred_check_branch
          %762 = sbr.rel (%p760) target = $region124
        $region123: #{tpu_custom_call.1} parent=103 // pred_region
          %763 = dma.done [#allocation9], 64
        $region124: #{tpu_custom_call.1} parent=103 // pred_fallthru
          _
        // Predicated region
        $region125: #{tpu_custom_call.1} parent=103 // pred_check
          %p764 = pneg %p229
        $region126: #{tpu_custom_call.1} parent=103 // pred_check_branch
          %766 = sbr.rel (%p764) target = $region128
        $region127: #{tpu_custom_call.1} parent=103 // pred_region
          %767 = dma.done [#allocation12], 256
        $region128: #{tpu_custom_call.1} parent=103 // pred_fallthru
          _
        // Predicated region
        $region129: #{tpu_custom_call.1} parent=103 // pred_check
          %p768 = pneg %p250
        $region130: #{tpu_custom_call.1} parent=103 // pred_check_branch
          %770 = sbr.rel (%p768) target = $region132
        $region131: #{tpu_custom_call.1} parent=103 // pred_region
          %771 = dma.done [#allocation12], 16
        $region132: #{tpu_custom_call.1} parent=103 // pred_fallthru
          _
        // Predicated region
        $region133: #{tpu_custom_call.1} parent=103 // pred_check
          %p772 = pneg %p355
        $region134: #{tpu_custom_call.1} parent=103 // pred_check_branch
          %774 = sbr.rel (%p772) target = $region136
        $region135: #{tpu_custom_call.1} parent=103 // pred_region
          %775 = dma.done [#allocation15], 1024
        $region136: #{tpu_custom_call.1} parent=103 // pred_fallthru
          _
        // Predicated region
        $region137: #{tpu_custom_call.1} parent=103 // pred_check
          %p776 = pneg %p481
        $region138: #{tpu_custom_call.1} parent=103 // pred_check_branch
          %778 = sbr.rel (%p776) target = $region140
        $region139: #{tpu_custom_call.1} parent=103 // pred_region
          %779 = dma.done [#allocation15], 256
        $region140: #{tpu_custom_call.1} parent=103 // pred_fallthru
          _
        %s780 = sand.u32 %s54, 1
        %s781 = scalar_lea.sflag [#allocation3], %s780
        %s782 = sand.u32 %s54, 1
        %s783 = smul.addr %s782, 16
        %s784 = scalar_lea.vmem [#allocation2], %s783
        %p785 = pneg %p67
        %p786 = pneg %p64
        %s787 = sand.u32 %s46, 1
        %s788 = scalar_lea.sflag [#allocation6], %s787
        %s789 = sand.u32 %s80, 1
        %s790 = smul.addr %s789, 8
        %s791 = scalar_lea.vmem [#allocation5], %s790
        %p792 = pneg %p93
        %p793 = pneg %p90
        %s794 = sand.u32 %s46, 1
        %s795 = scalar_lea.sflag [#allocation6], %s794
        %s796 = sand.u32 %s106, 1
        %s797 = scalar_lea.vmem [#allocation7], %s796
        %p798 = pneg %p119
        %p799 = pneg %p116
        %s800 = sand.u32 %s46, 1
        %s801 = scalar_lea.sflag [#allocation9], %s800
        %s802 = sand.u32 %s132, 1
        %s803 = scalar_lea.vmem [#allocation8], %s802
        %p804 = pneg %p145
        %p805 = pneg %p142
        %p806 = pneg %p166
        %p807 = pneg %p163
        %p808 = pneg %p187
        %p809 = pneg %p184
        %p810 = pneg %p208
        %p811 = pneg %p205
        %p812 = pneg %p229
        %p813 = pneg %p226
        %p814 = pneg %p250
        %p815 = pneg %p247
        %p816 = pneg %p271
        %p817 = pneg %p268
        %p818 = pneg %p292
        %p819 = pneg %p289
        %p820 = pneg %p313
        %p821 = pneg %p310
        %p822 = pneg %p334
        %p823 = pneg %p331
        %p824 = pneg %p355
        %p825 = pneg %p352
        %p826 = pneg %p376
        %p827 = pneg %p373
        %p828 = pneg %p397
        %p829 = pneg %p394
        %p830 = pneg %p418
        %p831 = pneg %p415
        %p832 = pneg %p439
        %p833 = pneg %p436
        %p834 = pneg %p460
        %p835 = pneg %p457
        %p836 = pneg %p481
        %p837 = pneg %p478
        %p838 = pneg %p502
        %p839 = pneg %p499
        %p840 = pneg %p528
        %p841 = pneg %p525
        %s842 = sand.u32 %s515, 1
        %s843 = scalar_lea.sflag [#allocation4], %s842
        %s844 = sand.u32 %s515, 1
        %s845 = smul.addr %s844, 8
        %s846 = scalar_lea.vmem [#allocation17], %s845
        %v848 = vlaneseq
        %v849 = vand.u32 %v848, 127
        %vm850 = vcmp.ge.s32.totalorder %v849, 0
        %vm851 = vcmp.lt.s32.totalorder %v849, 8
        %vm852 = vmand %vm850, %vm851
        %v853 = vsel %vm852, 1, 0
        %v854 = vcvt.s32.f32 %v853
        %vm855 = vcmp.ge.s32.totalorder %v849, 8
        %vm856 = vcmp.lt.s32.totalorder %v849, 16
        %vm857 = vmand %vm855, %vm856
        %v858 = vsel %vm857, 1, 0
        %v859 = vcvt.s32.f32 %v858
        %vm860 = vcmp.ge.s32.totalorder %v849, 16
        %vm861 = vcmp.lt.s32.totalorder %v849, 24
        %vm862 = vmand %vm860, %vm861
        %v863 = vsel %vm862, 1, 0
        %v864 = vcvt.s32.f32 %v863
        %vm865 = vcmp.ge.s32.totalorder %v849, 24
        %vm866 = vcmp.lt.s32.totalorder %v849, 32
        %vm867 = vmand %vm865, %vm866
        %v868 = vsel %vm867, 1, 0
        %v869 = vcvt.s32.f32 %v868
        %v870 = vld [vmem:[%s747] sm:$0x1]
        %v871 = vld [vmem:[%s755] sm:$0x1]
        %v872 = vsub.f32 1.0, %v870
        %v873 = vmul.f32 %v872, -1e+09
        %v874 = vlaneseq
        %v875 = vshrl.u32 %v874, 7
        %vm876 = vcmp.le.s32.totalorder %v849, %v875
        %v877 = vsel %vm876, 1, 0
        %v878 = vcvt.s32.f32 %v877
        %v880 = vlaneseq
        %v881 = vshrl.u32 %v880, 7
        %v882 = vsub.s32 0, %v881
        %v883 = vrot.slane %v871, %v882
        %v885 = vmul.f32 %v878, %v883
        %v886 = vsub.f32 1.0, %v885
        %v887 = vmul.f32 %v886, -1e+09
        %v888 = vld [vmem:[#allocation10] sm:$0x3]
        %v889 = vld [vmem:[#allocation10 + $0x2] sm:$0x3]
        %v890 = vld [vmem:[%s730] sm:$0xff]
        %v891 = vld [vmem:[%s730 + $0x8] sm:$0xff]
        %vm892 = vcmask 261120
        %v893 = vsel %vm892, %v890, 0.0
        %894 = vadd.xlane.f32.xlu0 %v893
        %v895 = vpop.xlane.xlu0 %894
        %v896 = vsel %vm892, %v891, 0.0
        %897 = vadd.xlane.f32.xlu0 %v896
        %v898 = vpop.xlane.xlu0 %897
        %v899 = vrcp.pop 32.0
        %v900 = vmul.f32 %v895, %v899
        %v901 = vmul.f32 %v898, %v899
        %v902 = vsub.f32 %v890, %v900
        %v903 = vsub.f32 %v891, %v901
        %v904 = vmul.f32 %v902, %v902
        %v905 = vmul.f32 %v903, %v903
        %v906 = vsel %vm892, %v904, 0.0
        %907 = vadd.xlane.f32.xlu0 %v906
        %v908 = vpop.xlane.xlu0 %907
        %v909 = vsel %vm892, %v905, 0.0
        %910 = vadd.xlane.f32.xlu0 %v909
        %v911 = vpop.xlane.xlu0 %910
        %v912 = vmul.f32 %v908, %v899
        %v913 = vmul.f32 %v911, %v899
        %v914 = vadd.f32 %v912, 1e-12
        %v915 = vadd.f32 %v913, 1e-12
        %v916 = vrsqrt.pop %v914
        %v917 = vrsqrt.pop %v915
        %v918 = vmul.f32 %v902, %v916
        %v919 = vmul.f32 %v903, %v917
        %v920 = vlaneseq
        %v921 = vshrl.u32 %v920, 7
        %v922 = vsub.s32 0, %v921
        %v923 = vrot.slane %v888, %v922
        %v924 = vmul.f32 %v918, %v923
        %v925 = vmul.f32 %v919, %v923
        %v926 = vlaneseq
        %v927 = vshrl.u32 %v926, 7
        %v928 = vsub.s32 1, %v927
        %v929 = vrot.slane %v888, %v928
        %v930 = vadd.f32 %v924, %v929
        %v931 = vadd.f32 %v925, %v929
        %v932 = vld [vmem:[%s5] sm:$0xf]
        %v933 = vld [vmem:[%s5 + $0x4] sm:$0xf]
        %v934 = vld [vmem:[%s5 + $0x8] sm:$0xf]
        %v935 = vld [vmem:[%s5 + $0xc] sm:$0xf]
        %v936 = vld [vmem:[%s5 + $0x10] sm:$0xf]
        %v937 = vld [vmem:[%s5 + $0x14] sm:$0xf]
        %v938 = vld [vmem:[%s5 + $0x18] sm:$0xf]
        %v939 = vld [vmem:[%s5 + $0x1c] sm:$0xf]
        %v940 = vld [vmem:[%s5 + $0x20] sm:$0xf]
        %v941 = vld [vmem:[%s5 + $0x24] sm:$0xf]
        %v942 = vld [vmem:[%s5 + $0x28] sm:$0xf]
        %v943 = vld [vmem:[%s5 + $0x2c] sm:$0xf]
        %v944 = vld [vmem:[%s5 + $0x30] sm:$0xf]
        %v945 = vld [vmem:[%s5 + $0x34] sm:$0xf]
        %v946 = vld [vmem:[%s5 + $0x38] sm:$0xf]
        %v947 = vld [vmem:[%s5 + $0x3c] sm:$0xf]
        %v948 = vld [vmem:[%s6] sm:$0x3f]
        %v949 = vpack.c.bf16 %v931, %v930
        %v950 = vlaneseq
        %v951 = vshrl.u32 %v950, 7
        %v952 = vsub.s32 0, %v951
        %v953 = vrot.slane %v948, %v952
        %v958 = vunpack.c.l.b16 %v932
        %v959 = vunpack.c.l.b16 %v933
        %v960 = vunpack.c.l.b16 %v934
        %v961 = vunpack.c.l.b16 %v935
        %v962 = vpack.c.b16 %v959, %v958
        %v963 = vpack.c.b16 %v961, %v960
        %v967 = vsel %vm892, %v949, 0
        %969 = vmatprep.subr.bf16.mxu0 0
        %970 = vmatpush1.bf16.msra.mxu0 0
        %971 = vmatprep.subr.bf16.mxu0 0
        %972 = vmatpush1.bf16.msra.mxu0 0
        %973 = vmatprep.subr.bf16.mxu0 0
        %974 = vmatpush1.bf16.msra.mxu0 0
        %975 = vmatprep.subr.bf16.mxu0 0
        %976 = vmatpush1.bf16.msra.mxu0 0
        %977 = vmatprep.subr.bf16.mxu0 0
        %978 = vmatpush1.bf16.msra.mxu0 0
        %979 = vmatprep.subr.bf16.mxu0 0
        %980 = vmatpush1.bf16.msra.mxu0 0
        %981 = vmatprep.subr.bf16.mxu0 0
        %982 = vmatpush1.bf16.msra.mxu0 %v963
        %983 = vmatprep.subr.bf16.mxu0 0
        %984 = vmatpush1.bf16.msra.mxu0 %v962
        %985 = vmatprep.subr.bf16.mxu0 0
        %986 = vmatpush2.bf16.msra.mxu0 0
        %987 = vmatprep.subr.bf16.mxu0 0
        %988 = vmatpush2.bf16.msra.mxu0 0
        %989 = vmatprep.subr.bf16.mxu0 0
        %990 = vmatpush2.bf16.msra.mxu0 0
        %991 = vmatprep.subr.bf16.mxu0 0
        %992 = vmatpush2.bf16.msra.mxu0 0
        %993 = vmatprep.subr.bf16.mxu0 0
        %994 = vmatpush2.bf16.msra.mxu0 0
        %995 = vmatprep.subr.bf16.mxu0 0
        %996 = vmatpush2.bf16.msra.mxu0 0
        %997 = vmatprep.subr.bf16.mxu0 0
        %998 = vmatpush2.bf16.msra.mxu0 0
        %999 = vmatprep.subr.bf16.mxu0 0
        %1000 = vmatpush2.bf16.msra.mxu0 0
        %1001 = vmatprep.mubr.bf16.mxu0 0
        %1002 = vmatmul.mubr.bf16.gmra.mxu0 %v967
        %v1003 = vpop.f32.mrf.mxu0
        %v1004 = vadd.f32 %v953, %v1003
        %v1005 = vpop.f32.mrf.mxu0
        %v1006 = vpop.f32.mrf.mxu0
        %v1007 = vadd.f32 %v953, %v1006
        %v1008 = vpop.f32.mrf.mxu0
        %1009 = vdwg.mxu0
        %v1010 = vlaneseq
        %v1011 = vshrl.u32 %v1010, 7
        %v1012 = vsub.s32 1, %v1011
        %v1013 = vrot.slane %v948, %v1012
        %v1018 = vunpack.c.l.b16 %v936
        %v1019 = vunpack.c.l.b16 %v937
        %v1020 = vunpack.c.l.b16 %v938
        %v1021 = vunpack.c.l.b16 %v939
        %v1022 = vpack.c.b16 %v1019, %v1018
        %v1023 = vpack.c.b16 %v1021, %v1020
        %1026 = vmatprep.subr.bf16.mxu0 0
        %1027 = vmatpush1.bf16.msra.mxu0 0
        %1028 = vmatprep.subr.bf16.mxu0 0
        %1029 = vmatpush1.bf16.msra.mxu0 0
        %1030 = vmatprep.subr.bf16.mxu0 0
        %1031 = vmatpush1.bf16.msra.mxu0 0
        %1032 = vmatprep.subr.bf16.mxu0 0
        %1033 = vmatpush1.bf16.msra.mxu0 0
        %1034 = vmatprep.subr.bf16.mxu0 0
        %1035 = vmatpush1.bf16.msra.mxu0 0
        %1036 = vmatprep.subr.bf16.mxu0 0
        %1037 = vmatpush1.bf16.msra.mxu0 0
        %1038 = vmatprep.subr.bf16.mxu0 0
        %1039 = vmatpush1.bf16.msra.mxu0 %v1023
        %1040 = vmatprep.subr.bf16.mxu0 0
        %1041 = vmatpush1.bf16.msra.mxu0 %v1022
        %1042 = vmatprep.subr.bf16.mxu0 0
        %1043 = vmatpush2.bf16.msra.mxu0 0
        %1044 = vmatprep.subr.bf16.mxu0 0
        %1045 = vmatpush2.bf16.msra.mxu0 0
        %1046 = vmatprep.subr.bf16.mxu0 0
        %1047 = vmatpush2.bf16.msra.mxu0 0
        %1048 = vmatprep.subr.bf16.mxu0 0
        %1049 = vmatpush2.bf16.msra.mxu0 0
        %1050 = vmatprep.subr.bf16.mxu0 0
        %1051 = vmatpush2.bf16.msra.mxu0 0
        %1052 = vmatprep.subr.bf16.mxu0 0
        %1053 = vmatpush2.bf16.msra.mxu0 0
        %1054 = vmatprep.subr.bf16.mxu0 0
        %1055 = vmatpush2.bf16.msra.mxu0 0
        %1056 = vmatprep.subr.bf16.mxu0 0
        %1057 = vmatpush2.bf16.msra.mxu0 0
        %1058 = vmatprep.mubr.bf16.mxu0 0
        %1059 = vmatmul.mubr.bf16.gmra.mxu0 %v967
        %v1060 = vpop.f32.mrf.mxu0
        %v1061 = vadd.f32 %v1013, %v1060
        %v1062 = vpop.f32.mrf.mxu0
        %v1063 = vpop.f32.mrf.mxu0
        %v1064 = vadd.f32 %v1013, %v1063
        %v1065 = vpop.f32.mrf.mxu0
        %1066 = vdwg.mxu0
        %v1067 = vlaneseq
        %v1068 = vshrl.u32 %v1067, 7
        %v1069 = vsub.s32 2, %v1068
        %v1070 = vrot.slane %v948, %v1069
        %v1075 = vunpack.c.l.b16 %v940
        %v1076 = vunpack.c.l.b16 %v941
        %v1077 = vunpack.c.l.b16 %v942
        %v1078 = vunpack.c.l.b16 %v943
        %v1079 = vpack.c.b16 %v1076, %v1075
        %v1080 = vpack.c.b16 %v1078, %v1077
        %1083 = vmatprep.subr.bf16.mxu0 0
        %1084 = vmatpush1.bf16.msra.mxu0 0
        %1085 = vmatprep.subr.bf16.mxu0 0
        %1086 = vmatpush1.bf16.msra.mxu0 0
        %1087 = vmatprep.subr.bf16.mxu0 0
        %1088 = vmatpush1.bf16.msra.mxu0 0
        %1089 = vmatprep.subr.bf16.mxu0 0
        %1090 = vmatpush1.bf16.msra.mxu0 0
        %1091 = vmatprep.subr.bf16.mxu0 0
        %1092 = vmatpush1.bf16.msra.mxu0 0
        %1093 = vmatprep.subr.bf16.mxu0 0
        %1094 = vmatpush1.bf16.msra.mxu0 0
        %1095 = vmatprep.subr.bf16.mxu0 0
        %1096 = vmatpush1.bf16.msra.mxu0 %v1080
        %1097 = vmatprep.subr.bf16.mxu0 0
        %1098 = vmatpush1.bf16.msra.mxu0 %v1079
        %1099 = vmatprep.subr.bf16.mxu0 0
        %1100 = vmatpush2.bf16.msra.mxu0 0
        %1101 = vmatprep.subr.bf16.mxu0 0
        %1102 = vmatpush2.bf16.msra.mxu0 0
        %1103 = vmatprep.subr.bf16.mxu0 0
        %1104 = vmatpush2.bf16.msra.mxu0 0
        %1105 = vmatprep.subr.bf16.mxu0 0
        %1106 = vmatpush2.bf16.msra.mxu0 0
        %1107 = vmatprep.subr.bf16.mxu0 0
        %1108 = vmatpush2.bf16.msra.mxu0 0
        %1109 = vmatprep.subr.bf16.mxu0 0
        %1110 = vmatpush2.bf16.msra.mxu0 0
        %1111 = vmatprep.subr.bf16.mxu0 0
        %1112 = vmatpush2.bf16.msra.mxu0 0
        %1113 = vmatprep.subr.bf16.mxu0 0
        %1114 = vmatpush2.bf16.msra.mxu0 0
        %1115 = vmatprep.mubr.bf16.mxu0 0
        %1116 = vmatmul.mubr.bf16.gmra.mxu0 %v967
        %v1117 = vpop.f32.mrf.mxu0
        %v1118 = vadd.f32 %v1070, %v1117
        %v1119 = vpop.f32.mrf.mxu0
        %v1120 = vpop.f32.mrf.mxu0
        %v1121 = vadd.f32 %v1070, %v1120
        %v1122 = vpop.f32.mrf.mxu0
        %1123 = vdwg.mxu0
        %v1124 = vmul.f32 %v1004, %v854
        %v1125 = vmul.f32 %v1007, %v854
        %v1127 = vsel %vm892, %v1124, 0
        %v1130 = vsel %vm892, %v1125, 0
        %v1133 = vsel %vm892, %v1061, 0
        %v1136 = vsel %vm892, %v1064, 0
        %1138 = vmatprep.subr.mxu0 0.0
        %1139 = vmatpush1.xpose.msra.mxu0 0.0
        %1140 = vmatprep.subr.mxu0 0.0
        %1141 = vmatpush1.xpose.msra.mxu0 0.0
        %1142 = vmatprep.subr.mxu0 0.0
        %1143 = vmatpush1.xpose.msra.mxu0 0.0
        %1144 = vmatprep.subr.mxu0 0.0
        %1145 = vmatpush1.xpose.msra.mxu0 0.0
        %1146 = vmatprep.subr.mxu0 0.0
        %1147 = vmatpush1.xpose.msra.mxu0 0.0
        %1148 = vmatprep.subr.mxu0 0.0
        %1149 = vmatpush1.xpose.msra.mxu0 0.0
        %1150 = vmatprep.subr.mxu0 0.0
        %1151 = vmatpush1.xpose.msra.mxu0 0.0
        %1152 = vmatprep.subr.mxu0 0.0
        %1153 = vmatpush1.xpose.msra.mxu0 0.0
        %1154 = vmatprep.subr.mxu0 0.0
        %1155 = vmatpush1.xpose.msra.mxu0 0.0
        %1156 = vmatprep.subr.mxu0 0.0
        %1157 = vmatpush1.xpose.msra.mxu0 0.0
        %1158 = vmatprep.subr.mxu0 0.0
        %1159 = vmatpush1.xpose.msra.mxu0 0.0
        %1160 = vmatprep.subr.mxu0 0.0
        %1161 = vmatpush1.xpose.msra.mxu0 0.0
        %1162 = vmatprep.subr.mxu0 0.0
        %1163 = vmatpush1.xpose.msra.mxu0 0.0
        %1164 = vmatprep.subr.mxu0 0.0
        %1165 = vmatpush1.xpose.msra.mxu0 0.0
        %1166 = vmatprep.subr.mxu0 0.0
        %1167 = vmatpush1.xpose.msra.mxu0 %v1136
        %1168 = vmatprep.subr.mxu0 0.0
        %1169 = vmatpush1.xpose.msra.mxu0 %v1133
        %1170 = vmatprep.subr.mxu0 0.0
        %1171 = vmatpush2.xpose.msra.mxu0 0.0
        %1172 = vmatprep.subr.mxu0 0.0
        %1173 = vmatpush2.xpose.msra.mxu0 0.0
        %1174 = vmatprep.subr.mxu0 0.0
        %1175 = vmatpush2.xpose.msra.mxu0 0.0
        %1176 = vmatprep.subr.mxu0 0.0
        %1177 = vmatpush2.xpose.msra.mxu0 0.0
        %1178 = vmatprep.subr.mxu0 0.0
        %1179 = vmatpush2.xpose.msra.mxu0 0.0
        %1180 = vmatprep.subr.mxu0 0.0
        %1181 = vmatpush2.xpose.msra.mxu0 0.0
        %1182 = vmatprep.subr.mxu0 0.0
        %1183 = vmatpush2.xpose.msra.mxu0 0.0
        %1184 = vmatprep.subr.mxu0 0.0
        %1185 = vmatpush2.xpose.msra.mxu0 0.0
        %1186 = vmatprep.subr.mxu0 0.0
        %1187 = vmatpush2.xpose.msra.mxu0 0.0
        %1188 = vmatprep.subr.mxu0 0.0
        %1189 = vmatpush2.xpose.msra.mxu0 0.0
        %1190 = vmatprep.subr.mxu0 0.0
        %1191 = vmatpush2.xpose.msra.mxu0 0.0
        %1192 = vmatprep.subr.mxu0 0.0
        %1193 = vmatpush2.xpose.msra.mxu0 0.0
        %1194 = vmatprep.subr.mxu0 0.0
        %1195 = vmatpush2.xpose.msra.mxu0 0.0
        %1196 = vmatprep.subr.mxu0 0.0
        %1197 = vmatpush2.xpose.msra.mxu0 0.0
        %1198 = vmatprep.subr.mxu0 0.0
        %1199 = vmatpush2.xpose.msra.mxu0 0.0
        %1200 = vmatprep.subr.mxu0 0.0
        %1201 = vmatpush2.xpose.msra.mxu0 0.0
        %1202 = vmatprep.mubr.f32.mxu0 0.0
        %1203 = vmatmul.mubr.f32.gmra.mxu0 %v1127
        %v1204 = vpop.f32.mrf.mxu0
        %v1205 = vadd.f32 0.0, %v1204
        %v1206 = vpop.f32.mrf.mxu0
        %1207 = vmatprep.mubr.f32.mxu0 0.0
        %1208 = vmatmul.mubr.f32.gmra.mxu0 %v1130
        %v1209 = vpop.f32.mrf.mxu0
        %v1210 = vadd.f32 0.0, %v1209
        %v1211 = vpop.f32.mrf.mxu0
        %1212 = vdwg.mxu0
        %v1213 = vmul.f32 %v1205, 0.35355338
        %v1214 = vmul.f32 %v1210, 0.35355338
        %v1216 = vlaneseq
        %v1217 = vshrl.u32 %v1216, 7
        %v1218 = vsub.s32 0, %v1217
        %v1219 = vrot.slane %v873, %v1218
        %v1221 = vadd.f32 %v1213, %v1219
        %v1222 = vadd.f32 %v1214, %v1219
        %vm1223 = vcmask 130048
        %v1224 = vsel %vm1223, %v1221, -inf
        %1225 = vmax.xlane.f32.xlu0 %v1224
        %v1226 = vpop.xlane.xlu0 %1225
        %v1227 = vsel %vm1223, %v1222, -inf
        %1228 = vmax.xlane.f32.xlu0 %v1227
        %v1229 = vpop.xlane.xlu0 %1228
        %v1230 = vsub.f32 %v1221, %v1226
        %v1231 = vsub.f32 %v1222, %v1229
        %v1232 = vmul.f32 %v1230, 1.442695
        %v1233 = vpow.pop %v1232
        %v1234 = vmul.f32 %v1231, 1.442695
        %v1235 = vpow.pop %v1234
        %v1236 = vsel %vm1223, %v1233, 0.0
        %1237 = vadd.xlane.f32.xlu0 %v1236
        %v1238 = vpop.xlane.xlu0 %1237
        %v1239 = vsel %vm1223, %v1235, 0.0
        %1240 = vadd.xlane.f32.xlu0 %v1239
        %v1241 = vpop.xlane.xlu0 %1240
        %v1242 = vrcp.pop %v1238
        %v1243 = vrcp.pop %v1241
        %v1244 = vmul.f32 %v1233, %v1242
        %v1245 = vmul.f32 %v1235, %v1243
        %v1246 = vmul.f32 %v1118, %v854
        %v1247 = vmul.f32 %v1121, %v854
        %v1248 = vmul.f32 %v1004, %v859
        %v1249 = vmul.f32 %v1007, %v859
        %v1251 = vsel %vm892, %v1248, 0
        %v1254 = vsel %vm892, %v1249, 0
        %1256 = vmatprep.subr.mxu0 0.0
        %1257 = vmatpush1.xpose.msra.mxu0 0.0
        %1258 = vmatprep.subr.mxu0 0.0
        %1259 = vmatpush1.xpose.msra.mxu0 0.0
        %1260 = vmatprep.subr.mxu0 0.0
        %1261 = vmatpush1.xpose.msra.mxu0 0.0
        %1262 = vmatprep.subr.mxu0 0.0
        %1263 = vmatpush1.xpose.msra.mxu0 0.0
        %1264 = vmatprep.subr.mxu0 0.0
        %1265 = vmatpush1.xpose.msra.mxu0 0.0
        %1266 = vmatprep.subr.mxu0 0.0
        %1267 = vmatpush1.xpose.msra.mxu0 0.0
        %1268 = vmatprep.subr.mxu0 0.0
        %1269 = vmatpush1.xpose.msra.mxu0 0.0
        %1270 = vmatprep.subr.mxu0 0.0
        %1271 = vmatpush1.xpose.msra.mxu0 0.0
        %1272 = vmatprep.subr.mxu0 0.0
        %1273 = vmatpush1.xpose.msra.mxu0 0.0
        %1274 = vmatprep.subr.mxu0 0.0
        %1275 = vmatpush1.xpose.msra.mxu0 0.0
        %1276 = vmatprep.subr.mxu0 0.0
        %1277 = vmatpush1.xpose.msra.mxu0 0.0
        %1278 = vmatprep.subr.mxu0 0.0
        %1279 = vmatpush1.xpose.msra.mxu0 0.0
        %1280 = vmatprep.subr.mxu0 0.0
        %1281 = vmatpush1.xpose.msra.mxu0 0.0
        %1282 = vmatprep.subr.mxu0 0.0
        %1283 = vmatpush1.xpose.msra.mxu0 0.0
        %1284 = vmatprep.subr.mxu0 0.0
        %1285 = vmatpush1.xpose.msra.mxu0 %v1136
        %1286 = vmatprep.subr.mxu0 0.0
        %1287 = vmatpush1.xpose.msra.mxu0 %v1133
        %1288 = vmatprep.subr.mxu0 0.0
        %1289 = vmatpush2.xpose.msra.mxu0 0.0
        %1290 = vmatprep.subr.mxu0 0.0
        %1291 = vmatpush2.xpose.msra.mxu0 0.0
        %1292 = vmatprep.subr.mxu0 0.0
        %1293 = vmatpush2.xpose.msra.mxu0 0.0
        %1294 = vmatprep.subr.mxu0 0.0
        %1295 = vmatpush2.xpose.msra.mxu0 0.0
        %1296 = vmatprep.subr.mxu0 0.0
        %1297 = vmatpush2.xpose.msra.mxu0 0.0
        %1298 = vmatprep.subr.mxu0 0.0
        %1299 = vmatpush2.xpose.msra.mxu0 0.0
        %1300 = vmatprep.subr.mxu0 0.0
        %1301 = vmatpush2.xpose.msra.mxu0 0.0
        %1302 = vmatprep.subr.mxu0 0.0
        %1303 = vmatpush2.xpose.msra.mxu0 0.0
        %1304 = vmatprep.subr.mxu0 0.0
        %1305 = vmatpush2.xpose.msra.mxu0 0.0
        %1306 = vmatprep.subr.mxu0 0.0
        %1307 = vmatpush2.xpose.msra.mxu0 0.0
        %1308 = vmatprep.subr.mxu0 0.0
        %1309 = vmatpush2.xpose.msra.mxu0 0.0
        %1310 = vmatprep.subr.mxu0 0.0
        %1311 = vmatpush2.xpose.msra.mxu0 0.0
        %1312 = vmatprep.subr.mxu0 0.0
        %1313 = vmatpush2.xpose.msra.mxu0 0.0
        %1314 = vmatprep.subr.mxu0 0.0
        %1315 = vmatpush2.xpose.msra.mxu0 0.0
        %1316 = vmatprep.subr.mxu0 0.0
        %1317 = vmatpush2.xpose.msra.mxu0 0.0
        %1318 = vmatprep.subr.mxu0 0.0
        %1319 = vmatpush2.xpose.msra.mxu0 0.0
        %1320 = vmatprep.mubr.f32.mxu0 0.0
        %1321 = vmatmul.mubr.f32.gmra.mxu0 %v1251
        %v1322 = vpop.f32.mrf.mxu0
        %v1323 = vadd.f32 0.0, %v1322
        %v1324 = vpop.f32.mrf.mxu0
        %1325 = vmatprep.mubr.f32.mxu0 0.0
        %1326 = vmatmul.mubr.f32.gmra.mxu0 %v1254
        %v1327 = vpop.f32.mrf.mxu0
        %v1328 = vadd.f32 0.0, %v1327
        %v1329 = vpop.f32.mrf.mxu0
        %1330 = vdwg.mxu0
        %v1331 = vmul.f32 %v1323, 0.35355338
        %v1332 = vmul.f32 %v1328, 0.35355338
        %v1333 = vadd.f32 %v1331, %v1219
        %v1334 = vadd.f32 %v1332, %v1219
        %v1335 = vsel %vm1223, %v1333, -inf
        %1336 = vmax.xlane.f32.xlu0 %v1335
        %v1337 = vpop.xlane.xlu0 %1336
        %v1338 = vsel %vm1223, %v1334, -inf
        %1339 = vmax.xlane.f32.xlu0 %v1338
        %v1340 = vpop.xlane.xlu0 %1339
        %v1341 = vsub.f32 %v1333, %v1337
        %v1342 = vsub.f32 %v1334, %v1340
        %v1343 = vmul.f32 %v1341, 1.442695
        %v1344 = vpow.pop %v1343
        %v1345 = vmul.f32 %v1342, 1.442695
        %v1346 = vpow.pop %v1345
        %v1347 = vsel %vm1223, %v1344, 0.0
        %1348 = vadd.xlane.f32.xlu0 %v1347
        %v1349 = vpop.xlane.xlu0 %1348
        %v1350 = vsel %vm1223, %v1346, 0.0
        %1351 = vadd.xlane.f32.xlu0 %v1350
        %v1352 = vpop.xlane.xlu0 %1351
        %v1353 = vrcp.pop %v1349
        %v1354 = vrcp.pop %v1352
        %v1355 = vmul.f32 %v1344, %v1353
        %v1356 = vmul.f32 %v1346, %v1354
        %v1357 = vmul.f32 %v1118, %v859
        %v1358 = vmul.f32 %v1121, %v859
        %v1360 = vsel %vm1223, %v1355, 0
        %v1363 = vsel %vm1223, %v1356, 0
        %1365 = vmatprep.subr.mxu0 0.0
        %1366 = vmatpush1.msra.mxu0 0.0
        %1367 = vmatprep.subr.mxu0 0.0
        %1368 = vmatpush1.msra.mxu0 0.0
        %1369 = vmatprep.subr.mxu0 0.0
        %1370 = vmatpush1.msra.mxu0 0.0
        %1371 = vmatprep.subr.mxu0 0.0
        %1372 = vmatpush1.msra.mxu0 0.0
        %1373 = vmatprep.subr.mxu0 0.0
        %1374 = vmatpush1.msra.mxu0 0.0
        %1375 = vmatprep.subr.mxu0 0.0
        %1376 = vmatpush1.msra.mxu0 0.0
        %1377 = vmatprep.subr.mxu0 0.0
        %1378 = vmatpush1.msra.mxu0 0.0
        %1379 = vmatprep.subr.mxu0 0.0
        %1380 = vmatpush1.msra.mxu0 0.0
        %1381 = vmatprep.subr.mxu0 0.0
        %1382 = vmatpush1.msra.mxu0 0.0
        %1383 = vmatprep.subr.mxu0 0.0
        %1384 = vmatpush1.msra.mxu0 0.0
        %1385 = vmatprep.subr.mxu0 0.0
        %1386 = vmatpush1.msra.mxu0 0.0
        %1387 = vmatprep.subr.mxu0 0.0
        %1388 = vmatpush1.msra.mxu0 0.0
        %1389 = vmatprep.subr.mxu0 0.0
        %1390 = vmatpush1.msra.mxu0 0.0
        %1391 = vmatprep.subr.mxu0 0.0
        %1392 = vmatpush1.msra.mxu0 0.0
        %1393 = vmatprep.subr.mxu0 0.0
        %1394 = vmatpush1.msra.mxu0 %v1358
        %1395 = vmatprep.subr.mxu0 0.0
        %1396 = vmatpush1.msra.mxu0 %v1357
        %1397 = vmatprep.subr.mxu0 0.0
        %1398 = vmatpush2.msra.mxu0 0.0
        %1399 = vmatprep.subr.mxu0 0.0
        %1400 = vmatpush2.msra.mxu0 0.0
        %1401 = vmatprep.subr.mxu0 0.0
        %1402 = vmatpush2.msra.mxu0 0.0
        %1403 = vmatprep.subr.mxu0 0.0
        %1404 = vmatpush2.msra.mxu0 0.0
        %1405 = vmatprep.subr.mxu0 0.0
        %1406 = vmatpush2.msra.mxu0 0.0
        %1407 = vmatprep.subr.mxu0 0.0
        %1408 = vmatpush2.msra.mxu0 0.0
        %1409 = vmatprep.subr.mxu0 0.0
        %1410 = vmatpush2.msra.mxu0 0.0
        %1411 = vmatprep.subr.mxu0 0.0
        %1412 = vmatpush2.msra.mxu0 0.0
        %1413 = vmatprep.subr.mxu0 0.0
        %1414 = vmatpush2.msra.mxu0 0.0
        %1415 = vmatprep.subr.mxu0 0.0
        %1416 = vmatpush2.msra.mxu0 0.0
        %1417 = vmatprep.subr.mxu0 0.0
        %1418 = vmatpush2.msra.mxu0 0.0
        %1419 = vmatprep.subr.mxu0 0.0
        %1420 = vmatpush2.msra.mxu0 0.0
        %1421 = vmatprep.subr.mxu0 0.0
        %1422 = vmatpush2.msra.mxu0 0.0
        %1423 = vmatprep.subr.mxu0 0.0
        %1424 = vmatpush2.msra.mxu0 0.0
        %1425 = vmatprep.subr.mxu0 0.0
        %1426 = vmatpush2.msra.mxu0 0.0
        %1427 = vmatprep.subr.mxu0 0.0
        %1428 = vmatpush2.msra.mxu0 0.0
        %1429 = vmatprep.mubr.f32.mxu0 0.0
        %1430 = vmatmul.mubr.f32.gmra.mxu0 %v1360
        %v1431 = vpop.f32.mrf.mxu0
        %v1432 = vadd.f32 0.0, %v1431
        %v1433 = vpop.f32.mrf.mxu0
        %1434 = vmatprep.mubr.f32.mxu0 0.0
        %1435 = vmatmul.mubr.f32.gmra.mxu0 %v1363
        %v1436 = vpop.f32.mrf.mxu0
        %v1437 = vadd.f32 0.0, %v1436
        %v1438 = vpop.f32.mrf.mxu0
        %1439 = vdwg.mxu0
        %v1441 = vsel %vm1223, %v1244, 0
        %v1444 = vsel %vm1223, %v1245, 0
        %1446 = vmatprep.subr.mxu0 0.0
        %1447 = vmatpush1.msra.mxu0 0.0
        %1448 = vmatprep.subr.mxu0 0.0
        %1449 = vmatpush1.msra.mxu0 0.0
        %1450 = vmatprep.subr.mxu0 0.0
        %1451 = vmatpush1.msra.mxu0 0.0
        %1452 = vmatprep.subr.mxu0 0.0
        %1453 = vmatpush1.msra.mxu0 0.0
        %1454 = vmatprep.subr.mxu0 0.0
        %1455 = vmatpush1.msra.mxu0 0.0
        %1456 = vmatprep.subr.mxu0 0.0
        %1457 = vmatpush1.msra.mxu0 0.0
        %1458 = vmatprep.subr.mxu0 0.0
        %1459 = vmatpush1.msra.mxu0 0.0
        %1460 = vmatprep.subr.mxu0 0.0
        %1461 = vmatpush1.msra.mxu0 0.0
        %1462 = vmatprep.subr.mxu0 0.0
        %1463 = vmatpush1.msra.mxu0 0.0
        %1464 = vmatprep.subr.mxu0 0.0
        %1465 = vmatpush1.msra.mxu0 0.0
        %1466 = vmatprep.subr.mxu0 0.0
        %1467 = vmatpush1.msra.mxu0 0.0
        %1468 = vmatprep.subr.mxu0 0.0
        %1469 = vmatpush1.msra.mxu0 0.0
        %1470 = vmatprep.subr.mxu0 0.0
        %1471 = vmatpush1.msra.mxu0 0.0
        %1472 = vmatprep.subr.mxu0 0.0
        %1473 = vmatpush1.msra.mxu0 0.0
        %1474 = vmatprep.subr.mxu0 0.0
        %1475 = vmatpush1.msra.mxu0 %v1247
        %1476 = vmatprep.subr.mxu0 0.0
        %1477 = vmatpush1.msra.mxu0 %v1246
        %1478 = vmatprep.subr.mxu0 0.0
        %1479 = vmatpush2.msra.mxu0 0.0
        %1480 = vmatprep.subr.mxu0 0.0
        %1481 = vmatpush2.msra.mxu0 0.0
        %1482 = vmatprep.subr.mxu0 0.0
        %1483 = vmatpush2.msra.mxu0 0.0
        %1484 = vmatprep.subr.mxu0 0.0
        %1485 = vmatpush2.msra.mxu0 0.0
        %1486 = vmatprep.subr.mxu0 0.0
        %1487 = vmatpush2.msra.mxu0 0.0
        %1488 = vmatprep.subr.mxu0 0.0
        %1489 = vmatpush2.msra.mxu0 0.0
        %1490 = vmatprep.subr.mxu0 0.0
        %1491 = vmatpush2.msra.mxu0 0.0
        %1492 = vmatprep.subr.mxu0 0.0
        %1493 = vmatpush2.msra.mxu0 0.0
        %1494 = vmatprep.subr.mxu0 0.0
        %1495 = vmatpush2.msra.mxu0 0.0
        %1496 = vmatprep.subr.mxu0 0.0
        %1497 = vmatpush2.msra.mxu0 0.0
        %1498 = vmatprep.subr.mxu0 0.0
        %1499 = vmatpush2.msra.mxu0 0.0
        %1500 = vmatprep.subr.mxu0 0.0
        %1501 = vmatpush2.msra.mxu0 0.0
        %1502 = vmatprep.subr.mxu0 0.0
        %1503 = vmatpush2.msra.mxu0 0.0
        %1504 = vmatprep.subr.mxu0 0.0
        %1505 = vmatpush2.msra.mxu0 0.0
        %1506 = vmatprep.subr.mxu0 0.0
        %1507 = vmatpush2.msra.mxu0 0.0
        %1508 = vmatprep.subr.mxu0 0.0
        %1509 = vmatpush2.msra.mxu0 0.0
        %1510 = vmatprep.mubr.f32.mxu0 0.0
        %1511 = vmatmul.mubr.f32.gmra.mxu0 %v1441
        %v1512 = vpop.f32.mrf.mxu0
        %v1513 = vadd.f32 %v1432, %v1512
        %v1514 = vpop.f32.mrf.mxu0
        %1515 = vmatprep.mubr.f32.mxu0 0.0
        %1516 = vmatmul.mubr.f32.gmra.mxu0 %v1444
        %v1517 = vpop.f32.mrf.mxu0
        %v1518 = vadd.f32 %v1437, %v1517
        %v1519 = vpop.f32.mrf.mxu0
        %1520 = vdwg.mxu0
        %v1521 = vmul.f32 %v1004, %v864
        %v1522 = vmul.f32 %v1007, %v864
        %v1524 = vsel %vm892, %v1521, 0
        %v1527 = vsel %vm892, %v1522, 0
        %1529 = vmatprep.subr.mxu0 0.0
        %1530 = vmatpush1.xpose.msra.mxu0 0.0
        %1531 = vmatprep.subr.mxu0 0.0
        %1532 = vmatpush1.xpose.msra.mxu0 0.0
        %1533 = vmatprep.subr.mxu0 0.0
        %1534 = vmatpush1.xpose.msra.mxu0 0.0
        %1535 = vmatprep.subr.mxu0 0.0
        %1536 = vmatpush1.xpose.msra.mxu0 0.0
        %1537 = vmatprep.subr.mxu0 0.0
        %1538 = vmatpush1.xpose.msra.mxu0 0.0
        %1539 = vmatprep.subr.mxu0 0.0
        %1540 = vmatpush1.xpose.msra.mxu0 0.0
        %1541 = vmatprep.subr.mxu0 0.0
        %1542 = vmatpush1.xpose.msra.mxu0 0.0
        %1543 = vmatprep.subr.mxu0 0.0
        %1544 = vmatpush1.xpose.msra.mxu0 0.0
        %1545 = vmatprep.subr.mxu0 0.0
        %1546 = vmatpush1.xpose.msra.mxu0 0.0
        %1547 = vmatprep.subr.mxu0 0.0
        %1548 = vmatpush1.xpose.msra.mxu0 0.0
        %1549 = vmatprep.subr.mxu0 0.0
        %1550 = vmatpush1.xpose.msra.mxu0 0.0
        %1551 = vmatprep.subr.mxu0 0.0
        %1552 = vmatpush1.xpose.msra.mxu0 0.0
        %1553 = vmatprep.subr.mxu0 0.0
        %1554 = vmatpush1.xpose.msra.mxu0 0.0
        %1555 = vmatprep.subr.mxu0 0.0
        %1556 = vmatpush1.xpose.msra.mxu0 0.0
        %1557 = vmatprep.subr.mxu0 0.0
        %1558 = vmatpush1.xpose.msra.mxu0 %v1136
        %1559 = vmatprep.subr.mxu0 0.0
        %1560 = vmatpush1.xpose.msra.mxu0 %v1133
        %1561 = vmatprep.subr.mxu0 0.0
        %1562 = vmatpush2.xpose.msra.mxu0 0.0
        %1563 = vmatprep.subr.mxu0 0.0
        %1564 = vmatpush2.xpose.msra.mxu0 0.0
        %1565 = vmatprep.subr.mxu0 0.0
        %1566 = vmatpush2.xpose.msra.mxu0 0.0
        %1567 = vmatprep.subr.mxu0 0.0
        %1568 = vmatpush2.xpose.msra.mxu0 0.0
        %1569 = vmatprep.subr.mxu0 0.0
        %1570 = vmatpush2.xpose.msra.mxu0 0.0
        %1571 = vmatprep.subr.mxu0 0.0
        %1572 = vmatpush2.xpose.msra.mxu0 0.0
        %1573 = vmatprep.subr.mxu0 0.0
        %1574 = vmatpush2.xpose.msra.mxu0 0.0
        %1575 = vmatprep.subr.mxu0 0.0
        %1576 = vmatpush2.xpose.msra.mxu0 0.0
        %1577 = vmatprep.subr.mxu0 0.0
        %1578 = vmatpush2.xpose.msra.mxu0 0.0
        %1579 = vmatprep.subr.mxu0 0.0
        %1580 = vmatpush2.xpose.msra.mxu0 0.0
        %1581 = vmatprep.subr.mxu0 0.0
        %1582 = vmatpush2.xpose.msra.mxu0 0.0
        %1583 = vmatprep.subr.mxu0 0.0
        %1584 = vmatpush2.xpose.msra.mxu0 0.0
        %1585 = vmatprep.subr.mxu0 0.0
        %1586 = vmatpush2.xpose.msra.mxu0 0.0
        %1587 = vmatprep.subr.mxu0 0.0
        %1588 = vmatpush2.xpose.msra.mxu0 0.0
        %1589 = vmatprep.subr.mxu0 0.0
        %1590 = vmatpush2.xpose.msra.mxu0 0.0
        %1591 = vmatprep.subr.mxu0 0.0
        %1592 = vmatpush2.xpose.msra.mxu0 0.0
        %1593 = vmatprep.mubr.f32.mxu0 0.0
        %1594 = vmatmul.mubr.f32.gmra.mxu0 %v1524
        %v1595 = vpop.f32.mrf.mxu0
        %v1596 = vadd.f32 0.0, %v1595
        %v1597 = vpop.f32.mrf.mxu0
        %1598 = vmatprep.mubr.f32.mxu0 0.0
        %1599 = vmatmul.mubr.f32.gmra.mxu0 %v1527
        %v1600 = vpop.f32.mrf.mxu0
        %v1601 = vadd.f32 0.0, %v1600
        %v1602 = vpop.f32.mrf.mxu0
        %1603 = vdwg.mxu0
        %v1604 = vmul.f32 %v1596, 0.35355338
        %v1605 = vmul.f32 %v1601, 0.35355338
        %v1606 = vadd.f32 %v1604, %v1219
        %v1607 = vadd.f32 %v1605, %v1219
        %v1608 = vsel %vm1223, %v1606, -inf
        %1609 = vmax.xlane.f32.xlu0 %v1608
        %v1610 = vpop.xlane.xlu0 %1609
        %v1611 = vsel %vm1223, %v1607, -inf
        %1612 = vmax.xlane.f32.xlu0 %v1611
        %v1613 = vpop.xlane.xlu0 %1612
        %v1614 = vsub.f32 %v1606, %v1610
        %v1615 = vsub.f32 %v1607, %v1613
        %v1616 = vmul.f32 %v1614, 1.442695
        %v1617 = vpow.pop %v1616
        %v1618 = vmul.f32 %v1615, 1.442695
        %v1619 = vpow.pop %v1618
        %v1620 = vsel %vm1223, %v1617, 0.0
        %1621 = vadd.xlane.f32.xlu0 %v1620
        %v1622 = vpop.xlane.xlu0 %1621
        %v1623 = vsel %vm1223, %v1619, 0.0
        %1624 = vadd.xlane.f32.xlu0 %v1623
        %v1625 = vpop.xlane.xlu0 %1624
        %v1626 = vrcp.pop %v1622
        %v1627 = vrcp.pop %v1625
        %v1628 = vmul.f32 %v1617, %v1626
        %v1629 = vmul.f32 %v1619, %v1627
        %v1630 = vmul.f32 %v1118, %v864
        %v1631 = vmul.f32 %v1121, %v864
        %v1633 = vsel %vm1223, %v1628, 0
        %v1636 = vsel %vm1223, %v1629, 0
        %1638 = vmatprep.subr.mxu0 0.0
        %1639 = vmatpush1.msra.mxu0 0.0
        %1640 = vmatprep.subr.mxu0 0.0
        %1641 = vmatpush1.msra.mxu0 0.0
        %1642 = vmatprep.subr.mxu0 0.0
        %1643 = vmatpush1.msra.mxu0 0.0
        %1644 = vmatprep.subr.mxu0 0.0
        %1645 = vmatpush1.msra.mxu0 0.0
        %1646 = vmatprep.subr.mxu0 0.0
        %1647 = vmatpush1.msra.mxu0 0.0
        %1648 = vmatprep.subr.mxu0 0.0
        %1649 = vmatpush1.msra.mxu0 0.0
        %1650 = vmatprep.subr.mxu0 0.0
        %1651 = vmatpush1.msra.mxu0 0.0
        %1652 = vmatprep.subr.mxu0 0.0
        %1653 = vmatpush1.msra.mxu0 0.0
        %1654 = vmatprep.subr.mxu0 0.0
        %1655 = vmatpush1.msra.mxu0 0.0
        %1656 = vmatprep.subr.mxu0 0.0
        %1657 = vmatpush1.msra.mxu0 0.0
        %1658 = vmatprep.subr.mxu0 0.0
        %1659 = vmatpush1.msra.mxu0 0.0
        %1660 = vmatprep.subr.mxu0 0.0
        %1661 = vmatpush1.msra.mxu0 0.0
        %1662 = vmatprep.subr.mxu0 0.0
        %1663 = vmatpush1.msra.mxu0 0.0
        %1664 = vmatprep.subr.mxu0 0.0
        %1665 = vmatpush1.msra.mxu0 0.0
        %1666 = vmatprep.subr.mxu0 0.0
        %1667 = vmatpush1.msra.mxu0 %v1631
        %1668 = vmatprep.subr.mxu0 0.0
        %1669 = vmatpush1.msra.mxu0 %v1630
        %1670 = vmatprep.subr.mxu0 0.0
        %1671 = vmatpush2.msra.mxu0 0.0
        %1672 = vmatprep.subr.mxu0 0.0
        %1673 = vmatpush2.msra.mxu0 0.0
        %1674 = vmatprep.subr.mxu0 0.0
        %1675 = vmatpush2.msra.mxu0 0.0
        %1676 = vmatprep.subr.mxu0 0.0
        %1677 = vmatpush2.msra.mxu0 0.0
        %1678 = vmatprep.subr.mxu0 0.0
        %1679 = vmatpush2.msra.mxu0 0.0
        %1680 = vmatprep.subr.mxu0 0.0
        %1681 = vmatpush2.msra.mxu0 0.0
        %1682 = vmatprep.subr.mxu0 0.0
        %1683 = vmatpush2.msra.mxu0 0.0
        %1684 = vmatprep.subr.mxu0 0.0
        %1685 = vmatpush2.msra.mxu0 0.0
        %1686 = vmatprep.subr.mxu0 0.0
        %1687 = vmatpush2.msra.mxu0 0.0
        %1688 = vmatprep.subr.mxu0 0.0
        %1689 = vmatpush2.msra.mxu0 0.0
        %1690 = vmatprep.subr.mxu0 0.0
        %1691 = vmatpush2.msra.mxu0 0.0
        %1692 = vmatprep.subr.mxu0 0.0
        %1693 = vmatpush2.msra.mxu0 0.0
        %1694 = vmatprep.subr.mxu0 0.0
        %1695 = vmatpush2.msra.mxu0 0.0
        %1696 = vmatprep.subr.mxu0 0.0
        %1697 = vmatpush2.msra.mxu0 0.0
        %1698 = vmatprep.subr.mxu0 0.0
        %1699 = vmatpush2.msra.mxu0 0.0
        %1700 = vmatprep.subr.mxu0 0.0
        %1701 = vmatpush2.msra.mxu0 0.0
        %1702 = vmatprep.mubr.f32.mxu0 0.0
        %1703 = vmatmul.mubr.f32.gmra.mxu0 %v1633
        %v1704 = vpop.f32.mrf.mxu0
        %v1705 = vadd.f32 0.0, %v1704
        %v1706 = vpop.f32.mrf.mxu0
        %1707 = vmatprep.mubr.f32.mxu0 0.0
        %1708 = vmatmul.mubr.f32.gmra.mxu0 %v1636
        %v1709 = vpop.f32.mrf.mxu0
        %v1710 = vadd.f32 0.0, %v1709
        %v1711 = vpop.f32.mrf.mxu0
        %1712 = vdwg.mxu0
        %v1713 = vadd.f32 %v1513, %v1705
        %v1714 = vadd.f32 %v1518, %v1710
        %v1715 = vmul.f32 %v1004, %v869
        %v1716 = vmul.f32 %v1007, %v869
        %v1718 = vsel %vm892, %v1715, 0
        %v1721 = vsel %vm892, %v1716, 0
        %1723 = vmatprep.subr.mxu0 0.0
        %1724 = vmatpush1.xpose.msra.mxu0 0.0
        %1725 = vmatprep.subr.mxu0 0.0
        %1726 = vmatpush1.xpose.msra.mxu0 0.0
        %1727 = vmatprep.subr.mxu0 0.0
        %1728 = vmatpush1.xpose.msra.mxu0 0.0
        %1729 = vmatprep.subr.mxu0 0.0
        %1730 = vmatpush1.xpose.msra.mxu0 0.0
        %1731 = vmatprep.subr.mxu0 0.0
        %1732 = vmatpush1.xpose.msra.mxu0 0.0
        %1733 = vmatprep.subr.mxu0 0.0
        %1734 = vmatpush1.xpose.msra.mxu0 0.0
        %1735 = vmatprep.subr.mxu0 0.0
        %1736 = vmatpush1.xpose.msra.mxu0 0.0
        %1737 = vmatprep.subr.mxu0 0.0
        %1738 = vmatpush1.xpose.msra.mxu0 0.0
        %1739 = vmatprep.subr.mxu0 0.0
        %1740 = vmatpush1.xpose.msra.mxu0 0.0
        %1741 = vmatprep.subr.mxu0 0.0
        %1742 = vmatpush1.xpose.msra.mxu0 0.0
        %1743 = vmatprep.subr.mxu0 0.0
        %1744 = vmatpush1.xpose.msra.mxu0 0.0
        %1745 = vmatprep.subr.mxu0 0.0
        %1746 = vmatpush1.xpose.msra.mxu0 0.0
        %1747 = vmatprep.subr.mxu0 0.0
        %1748 = vmatpush1.xpose.msra.mxu0 0.0
        %1749 = vmatprep.subr.mxu0 0.0
        %1750 = vmatpush1.xpose.msra.mxu0 0.0
        %1751 = vmatprep.subr.mxu0 0.0
        %1752 = vmatpush1.xpose.msra.mxu0 %v1136
        %1753 = vmatprep.subr.mxu0 0.0
        %1754 = vmatpush1.xpose.msra.mxu0 %v1133
        %1755 = vmatprep.subr.mxu0 0.0
        %1756 = vmatpush2.xpose.msra.mxu0 0.0
        %1757 = vmatprep.subr.mxu0 0.0
        %1758 = vmatpush2.xpose.msra.mxu0 0.0
        %1759 = vmatprep.subr.mxu0 0.0
        %1760 = vmatpush2.xpose.msra.mxu0 0.0
        %1761 = vmatprep.subr.mxu0 0.0
        %1762 = vmatpush2.xpose.msra.mxu0 0.0
        %1763 = vmatprep.subr.mxu0 0.0
        %1764 = vmatpush2.xpose.msra.mxu0 0.0
        %1765 = vmatprep.subr.mxu0 0.0
        %1766 = vmatpush2.xpose.msra.mxu0 0.0
        %1767 = vmatprep.subr.mxu0 0.0
        %1768 = vmatpush2.xpose.msra.mxu0 0.0
        %1769 = vmatprep.subr.mxu0 0.0
        %1770 = vmatpush2.xpose.msra.mxu0 0.0
        %1771 = vmatprep.subr.mxu0 0.0
        %1772 = vmatpush2.xpose.msra.mxu0 0.0
        %1773 = vmatprep.subr.mxu0 0.0
        %1774 = vmatpush2.xpose.msra.mxu0 0.0
        %1775 = vmatprep.subr.mxu0 0.0
        %1776 = vmatpush2.xpose.msra.mxu0 0.0
        %1777 = vmatprep.subr.mxu0 0.0
        %1778 = vmatpush2.xpose.msra.mxu0 0.0
        %1779 = vmatprep.subr.mxu0 0.0
        %1780 = vmatpush2.xpose.msra.mxu0 0.0
        %1781 = vmatprep.subr.mxu0 0.0
        %1782 = vmatpush2.xpose.msra.mxu0 0.0
        %1783 = vmatprep.subr.mxu0 0.0
        %1784 = vmatpush2.xpose.msra.mxu0 0.0
        %1785 = vmatprep.subr.mxu0 0.0
        %1786 = vmatpush2.xpose.msra.mxu0 0.0
        %1787 = vmatprep.mubr.f32.mxu0 0.0
        %1788 = vmatmul.mubr.f32.gmra.mxu0 %v1718
        %v1789 = vpop.f32.mrf.mxu0
        %v1790 = vadd.f32 0.0, %v1789
        %v1791 = vpop.f32.mrf.mxu0
        %1792 = vmatprep.mubr.f32.mxu0 0.0
        %1793 = vmatmul.mubr.f32.gmra.mxu0 %v1721
        %v1794 = vpop.f32.mrf.mxu0
        %v1795 = vadd.f32 0.0, %v1794
        %v1796 = vpop.f32.mrf.mxu0
        %1797 = vdwg.mxu0
        %v1798 = vmul.f32 %v1790, 0.35355338
        %v1799 = vmul.f32 %v1795, 0.35355338
        %v1800 = vadd.f32 %v1798, %v1219
        %v1801 = vadd.f32 %v1799, %v1219
        %v1802 = vsel %vm1223, %v1800, -inf
        %1803 = vmax.xlane.f32.xlu0 %v1802
        %v1804 = vpop.xlane.xlu0 %1803
        %v1805 = vsel %vm1223, %v1801, -inf
        %1806 = vmax.xlane.f32.xlu0 %v1805
        %v1807 = vpop.xlane.xlu0 %1806
        %v1808 = vsub.f32 %v1800, %v1804
        %v1809 = vsub.f32 %v1801, %v1807
        %v1810 = vmul.f32 %v1808, 1.442695
        %v1811 = vpow.pop %v1810
        %v1812 = vmul.f32 %v1809, 1.442695
        %v1813 = vpow.pop %v1812
        %v1814 = vsel %vm1223, %v1811, 0.0
        %1815 = vadd.xlane.f32.xlu0 %v1814
        %v1816 = vpop.xlane.xlu0 %1815
        %v1817 = vsel %vm1223, %v1813, 0.0
        %1818 = vadd.xlane.f32.xlu0 %v1817
        %v1819 = vpop.xlane.xlu0 %1818
        %v1820 = vrcp.pop %v1816
        %v1821 = vrcp.pop %v1819
        %v1822 = vmul.f32 %v1811, %v1820
        %v1823 = vmul.f32 %v1813, %v1821
        %v1824 = vmul.f32 %v1118, %v869
        %v1825 = vmul.f32 %v1121, %v869
        %v1827 = vsel %vm1223, %v1822, 0
        %v1830 = vsel %vm1223, %v1823, 0
        %1832 = vmatprep.subr.mxu0 0.0
        %1833 = vmatpush1.msra.mxu0 0.0
        %1834 = vmatprep.subr.mxu0 0.0
        %1835 = vmatpush1.msra.mxu0 0.0
        %1836 = vmatprep.subr.mxu0 0.0
        %1837 = vmatpush1.msra.mxu0 0.0
        %1838 = vmatprep.subr.mxu0 0.0
        %1839 = vmatpush1.msra.mxu0 0.0
        %1840 = vmatprep.subr.mxu0 0.0
        %1841 = vmatpush1.msra.mxu0 0.0
        %1842 = vmatprep.subr.mxu0 0.0
        %1843 = vmatpush1.msra.mxu0 0.0
        %1844 = vmatprep.subr.mxu0 0.0
        %1845 = vmatpush1.msra.mxu0 0.0
        %1846 = vmatprep.subr.mxu0 0.0
        %1847 = vmatpush1.msra.mxu0 0.0
        %1848 = vmatprep.subr.mxu0 0.0
        %1849 = vmatpush1.msra.mxu0 0.0
        %1850 = vmatprep.subr.mxu0 0.0
        %1851 = vmatpush1.msra.mxu0 0.0
        %1852 = vmatprep.subr.mxu0 0.0
        %1853 = vmatpush1.msra.mxu0 0.0
        %1854 = vmatprep.subr.mxu0 0.0
        %1855 = vmatpush1.msra.mxu0 0.0
        %1856 = vmatprep.subr.mxu0 0.0
        %1857 = vmatpush1.msra.mxu0 0.0
        %1858 = vmatprep.subr.mxu0 0.0
        %1859 = vmatpush1.msra.mxu0 0.0
        %1860 = vmatprep.subr.mxu0 0.0
        %1861 = vmatpush1.msra.mxu0 %v1825
        %1862 = vmatprep.subr.mxu0 0.0
        %1863 = vmatpush1.msra.mxu0 %v1824
        %1864 = vmatprep.subr.mxu0 0.0
        %1865 = vmatpush2.msra.mxu0 0.0
        %1866 = vmatprep.subr.mxu0 0.0
        %1867 = vmatpush2.msra.mxu0 0.0
        %1868 = vmatprep.subr.mxu0 0.0
        %1869 = vmatpush2.msra.mxu0 0.0
        %1870 = vmatprep.subr.mxu0 0.0
        %1871 = vmatpush2.msra.mxu0 0.0
        %1872 = vmatprep.subr.mxu0 0.0
        %1873 = vmatpush2.msra.mxu0 0.0
        %1874 = vmatprep.subr.mxu0 0.0
        %1875 = vmatpush2.msra.mxu0 0.0
        %1876 = vmatprep.subr.mxu0 0.0
        %1877 = vmatpush2.msra.mxu0 0.0
        %1878 = vmatprep.subr.mxu0 0.0
        %1879 = vmatpush2.msra.mxu0 0.0
        %1880 = vmatprep.subr.mxu0 0.0
        %1881 = vmatpush2.msra.mxu0 0.0
        %1882 = vmatprep.subr.mxu0 0.0
        %1883 = vmatpush2.msra.mxu0 0.0
        %1884 = vmatprep.subr.mxu0 0.0
        %1885 = vmatpush2.msra.mxu0 0.0
        %1886 = vmatprep.subr.mxu0 0.0
        %1887 = vmatpush2.msra.mxu0 0.0
        %1888 = vmatprep.subr.mxu0 0.0
        %1889 = vmatpush2.msra.mxu0 0.0
        %1890 = vmatprep.subr.mxu0 0.0
        %1891 = vmatpush2.msra.mxu0 0.0
        %1892 = vmatprep.subr.mxu0 0.0
        %1893 = vmatpush2.msra.mxu0 0.0
        %1894 = vmatprep.subr.mxu0 0.0
        %1895 = vmatpush2.msra.mxu0 0.0
        %1896 = vmatprep.mubr.f32.mxu0 0.0
        %1897 = vmatmul.mubr.f32.gmra.mxu0 %v1827
        %v1898 = vpop.f32.mrf.mxu0
        %v1899 = vadd.f32 0.0, %v1898
        %v1900 = vpop.f32.mrf.mxu0
        %1901 = vmatprep.mubr.f32.mxu0 0.0
        %1902 = vmatmul.mubr.f32.gmra.mxu0 %v1830
        %v1903 = vpop.f32.mrf.mxu0
        %v1904 = vadd.f32 0.0, %v1903
        %v1905 = vpop.f32.mrf.mxu0
        %1906 = vdwg.mxu0
        %v1907 = vadd.f32 %v1713, %v1899
        %v1908 = vadd.f32 %v1714, %v1904
        %v1909 = vpack.c.bf16 %v1908, %v1907
        %v1910 = vlaneseq
        %v1911 = vshrl.u32 %v1910, 7
        %v1912 = vsub.s32 3, %v1911
        %v1913 = vrot.slane %v948, %v1912
        %v1918 = vunpack.c.l.b16 %v944
        %v1919 = vunpack.c.l.b16 %v945
        %v1920 = vunpack.c.l.b16 %v946
        %v1921 = vunpack.c.l.b16 %v947
        %v1922 = vpack.c.b16 %v1919, %v1918
        %v1923 = vpack.c.b16 %v1921, %v1920
        %v1927 = vsel %vm892, %v1909, 0
        %1929 = vmatprep.subr.bf16.mxu0 0
        %1930 = vmatpush1.bf16.msra.mxu0 0
        %1931 = vmatprep.subr.bf16.mxu0 0
        %1932 = vmatpush1.bf16.msra.mxu0 0
        %1933 = vmatprep.subr.bf16.mxu0 0
        %1934 = vmatpush1.bf16.msra.mxu0 0
        %1935 = vmatprep.subr.bf16.mxu0 0
        %1936 = vmatpush1.bf16.msra.mxu0 0
        %1937 = vmatprep.subr.bf16.mxu0 0
        %1938 = vmatpush1.bf16.msra.mxu0 0
        %1939 = vmatprep.subr.bf16.mxu0 0
        %1940 = vmatpush1.bf16.msra.mxu0 0
        %1941 = vmatprep.subr.bf16.mxu0 0
        %1942 = vmatpush1.bf16.msra.mxu0 %v1923
        %1943 = vmatprep.subr.bf16.mxu0 0
        %1944 = vmatpush1.bf16.msra.mxu0 %v1922
        %1945 = vmatprep.subr.bf16.mxu0 0
        %1946 = vmatpush2.bf16.msra.mxu0 0
        %1947 = vmatprep.subr.bf16.mxu0 0
        %1948 = vmatpush2.bf16.msra.mxu0 0
        %1949 = vmatprep.subr.bf16.mxu0 0
        %1950 = vmatpush2.bf16.msra.mxu0 0
        %1951 = vmatprep.subr.bf16.mxu0 0
        %1952 = vmatpush2.bf16.msra.mxu0 0
        %1953 = vmatprep.subr.bf16.mxu0 0
        %1954 = vmatpush2.bf16.msra.mxu0 0
        %1955 = vmatprep.subr.bf16.mxu0 0
        %1956 = vmatpush2.bf16.msra.mxu0 0
        %1957 = vmatprep.subr.bf16.mxu0 0
        %1958 = vmatpush2.bf16.msra.mxu0 0
        %1959 = vmatprep.subr.bf16.mxu0 0
        %1960 = vmatpush2.bf16.msra.mxu0 0
        %1961 = vmatprep.mubr.bf16.mxu0 0
        %1962 = vmatmul.mubr.bf16.gmra.mxu0 %v1927
        %v1963 = vpop.f32.mrf.mxu0
        %v1964 = vadd.f32 %v1913, %v1963
        %v1965 = vpop.f32.mrf.mxu0
        %v1966 = vpop.f32.mrf.mxu0
        %v1967 = vadd.f32 %v1913, %v1966
        %v1968 = vpop.f32.mrf.mxu0
        %1969 = vdwg.mxu0
        %v1970 = vadd.f32 %v930, %v1964
        %v1971 = vadd.f32 %v931, %v1967
        %v1972 = vsel %vm892, %v1970, 0.0
        %1973 = vadd.xlane.f32.xlu0 %v1972
        %v1974 = vpop.xlane.xlu0 %1973
        %v1975 = vsel %vm892, %v1971, 0.0
        %1976 = vadd.xlane.f32.xlu0 %v1975
        %v1977 = vpop.xlane.xlu0 %1976
        %v1978 = vmul.f32 %v1974, %v899
        %v1979 = vmul.f32 %v1977, %v899
        %v1980 = vsub.f32 %v1970, %v1978
        %v1981 = vsub.f32 %v1971, %v1979
        %v1982 = vmul.f32 %v1980, %v1980
        %v1983 = vmul.f32 %v1981, %v1981
        %v1984 = vsel %vm892, %v1982, 0.0
        %1985 = vadd.xlane.f32.xlu0 %v1984
        %v1986 = vpop.xlane.xlu0 %1985
        %v1987 = vsel %vm892, %v1983, 0.0
        %1988 = vadd.xlane.f32.xlu0 %v1987
        %v1989 = vpop.xlane.xlu0 %1988
        %v1990 = vmul.f32 %v1986, %v899
        %v1991 = vmul.f32 %v1989, %v899
        %v1992 = vadd.f32 %v1990, 1e-12
        %v1993 = vadd.f32 %v1991, 1e-12
        %v1994 = vrsqrt.pop %v1992
        %v1995 = vrsqrt.pop %v1993
        %v1996 = vmul.f32 %v1980, %v1994
        %v1997 = vmul.f32 %v1981, %v1995
        %v1998 = vlaneseq
        %v1999 = vshrl.u32 %v1998, 7
        %v2000 = vsub.s32 4, %v1999
        %v2001 = vrot.slane %v948, %v2000
        %v2002 = vmul.f32 %v1996, %v2001
        %v2003 = vmul.f32 %v1997, %v2001
        %v2004 = vlaneseq
        %v2005 = vshrl.u32 %v2004, 7
        %v2006 = vsub.s32 5, %v2005
        %v2007 = vrot.slane %v948, %v2006
        %v2008 = vadd.f32 %v2002, %v2007
        %v2009 = vadd.f32 %v2003, %v2007
        %v2010 = vld [vmem:[#allocation11] sm:$0xf]
        %v2011 = vld [vmem:[#allocation11 + $0x4] sm:$0xf]
        %v2012 = vld [vmem:[#allocation11 + $0x8] sm:$0xf]
        %v2013 = vld [vmem:[#allocation11 + $0xc] sm:$0xf]
        %v2014 = vld [vmem:[#allocation13] sm:$0x1]
        %v2015 = vld [vmem:[%s9] sm:$0xf]
        %v2016 = vld [vmem:[%s9 + $0x4] sm:$0xf]
        %v2017 = vld [vmem:[%s9 + $0x8] sm:$0xf]
        %v2018 = vld [vmem:[%s9 + $0xc] sm:$0xf]
        %v2019 = vld [vmem:[%s9 + $0x10] sm:$0xf]
        %v2020 = vld [vmem:[%s9 + $0x14] sm:$0xf]
        %v2021 = vld [vmem:[%s9 + $0x18] sm:$0xf]
        %v2022 = vld [vmem:[%s9 + $0x1c] sm:$0xf]
        %v2023 = vld [vmem:[%s10] sm:$0x7]
        %v2024 = vpack.c.bf16 %v2009, %v2008
        %v2026 = vlaneseq
        %v2027 = vshrl.u32 %v2026, 7
        %v2028 = vsub.s32 0, %v2027
        %v2029 = vrot.slane %v2014, %v2028
        %v2035 = vunpack.c.l.b16 %v2010
        %v2036 = vunpack.c.l.b16 %v2011
        %v2037 = vunpack.c.l.b16 %v2012
        %v2038 = vunpack.c.l.b16 %v2013
        %v2039 = vpack.c.b16 %v2036, %v2035
        %v2040 = vpack.c.b16 %v2038, %v2037
        %v2044 = vsel %vm892, %v2024, 0
        %2046 = vmatprep.subr.bf16.mxu0 0
        %2047 = vmatpush1.bf16.msra.mxu0 0
        %2048 = vmatprep.subr.bf16.mxu0 0
        %2049 = vmatpush1.bf16.msra.mxu0 0
        %2050 = vmatprep.subr.bf16.mxu0 0
        %2051 = vmatpush1.bf16.msra.mxu0 0
        %2052 = vmatprep.subr.bf16.mxu0 0
        %2053 = vmatpush1.bf16.msra.mxu0 0
        %2054 = vmatprep.subr.bf16.mxu0 0
        %2055 = vmatpush1.bf16.msra.mxu0 0
        %2056 = vmatprep.subr.bf16.mxu0 0
        %2057 = vmatpush1.bf16.msra.mxu0 0
        %2058 = vmatprep.subr.bf16.mxu0 0
        %2059 = vmatpush1.bf16.msra.mxu0 %v2040
        %2060 = vmatprep.subr.bf16.mxu0 0
        %2061 = vmatpush1.bf16.msra.mxu0 %v2039
        %2062 = vmatprep.subr.bf16.mxu0 0
        %2063 = vmatpush2.bf16.msra.mxu0 0
        %2064 = vmatprep.subr.bf16.mxu0 0
        %2065 = vmatpush2.bf16.msra.mxu0 0
        %2066 = vmatprep.subr.bf16.mxu0 0
        %2067 = vmatpush2.bf16.msra.mxu0 0
        %2068 = vmatprep.subr.bf16.mxu0 0
        %2069 = vmatpush2.bf16.msra.mxu0 0
        %2070 = vmatprep.subr.bf16.mxu0 0
        %2071 = vmatpush2.bf16.msra.mxu0 0
        %2072 = vmatprep.subr.bf16.mxu0 0
        %2073 = vmatpush2.bf16.msra.mxu0 0
        %2074 = vmatprep.subr.bf16.mxu0 0
        %2075 = vmatpush2.bf16.msra.mxu0 0
        %2076 = vmatprep.subr.bf16.mxu0 0
        %2077 = vmatpush2.bf16.msra.mxu0 0
        %2078 = vmatprep.mubr.bf16.mxu0 0
        %2079 = vmatmul.mubr.bf16.gmra.mxu0 %v2044
        %v2080 = vpop.f32.mrf.mxu0
        %v2081 = vadd.f32 %v2029, %v2080
        %v2082 = vpop.f32.mrf.mxu0
        %v2083 = vpop.f32.mrf.mxu0
        %v2084 = vadd.f32 %v2029, %v2083
        %v2085 = vpop.f32.mrf.mxu0
        %2086 = vdwg.mxu0
        %v2087 = vmul.f32 %v2081, %v2081
        %v2088 = vmul.f32 %v2084, %v2084
        %v2089 = vmul.f32 %v2081, %v2087
        %v2090 = vmul.f32 %v2084, %v2088
        %v2091 = vmul.f32 %v2089, 0.044715
        %v2092 = vmul.f32 %v2090, 0.044715
        %v2093 = vadd.f32 %v2081, %v2091
        %v2094 = vadd.f32 %v2084, %v2092
        %v2095 = vmul.f32 %v2093, 0.7978846
        %v2096 = vmul.f32 %v2094, 0.7978846
        %v2097 = vtanh.pop %v2095
        %v2098 = vtanh.pop %v2096
        %v2099 = vadd.f32 %v2097, 1.0
        %v2100 = vadd.f32 %v2098, 1.0
        %v2101 = vmul.f32 %v2099, 0.5
        %v2102 = vmul.f32 %v2100, 0.5
        %v2103 = vmul.f32 %v2081, %v2101
        %v2104 = vmul.f32 %v2084, %v2102
        %v2105 = vpack.c.bf16 %v2104, %v2103
        %v2106 = vlaneseq
        %v2107 = vshrl.u32 %v2106, 7
        %v2108 = vsub.s32 0, %v2107
        %v2109 = vrot.slane %v2023, %v2108
        %v2118 = vunpack.c.l.b16 %v2015
        %v2119 = vunpack.c.l.b16 %v2016
        %v2120 = vunpack.c.l.b16 %v2017
        %v2121 = vunpack.c.l.b16 %v2018
        %v2122 = vunpack.c.l.b16 %v2019
        %v2123 = vunpack.c.l.b16 %v2020
        %v2124 = vunpack.c.l.b16 %v2021
        %v2125 = vunpack.c.l.b16 %v2022
        %v2126 = vpack.c.b16 %v2119, %v2118
        %v2127 = vpack.c.b16 %v2121, %v2120
        %v2128 = vpack.c.b16 %v2123, %v2122
        %v2129 = vpack.c.b16 %v2125, %v2124
        %vm2134 = vcmask 523264
        %v2136 = vsel %vm2134, %v2105, 0
        %2138 = vmatprep.subr.bf16.mxu0 0
        %2139 = vmatpush1.bf16.msra.mxu0 0
        %2140 = vmatprep.subr.bf16.mxu0 0
        %2141 = vmatpush1.bf16.msra.mxu0 0
        %2142 = vmatprep.subr.bf16.mxu0 0
        %2143 = vmatpush1.bf16.msra.mxu0 0
        %2144 = vmatprep.subr.bf16.mxu0 0
        %2145 = vmatpush1.bf16.msra.mxu0 0
        %2146 = vmatprep.subr.bf16.mxu0 0
        %2147 = vmatpush1.bf16.msra.mxu0 %v2129
        %2148 = vmatprep.subr.bf16.mxu0 0
        %2149 = vmatpush1.bf16.msra.mxu0 %v2128
        %2150 = vmatprep.subr.bf16.mxu0 0
        %2151 = vmatpush1.bf16.msra.mxu0 %v2127
        %2152 = vmatprep.subr.bf16.mxu0 0
        %2153 = vmatpush1.bf16.msra.mxu0 %v2126
        %2154 = vmatprep.subr.bf16.mxu0 0
        %2155 = vmatpush2.bf16.msra.mxu0 0
        %2156 = vmatprep.subr.bf16.mxu0 0
        %2157 = vmatpush2.bf16.msra.mxu0 0
        %2158 = vmatprep.subr.bf16.mxu0 0
        %2159 = vmatpush2.bf16.msra.mxu0 0
        %2160 = vmatprep.subr.bf16.mxu0 0
        %2161 = vmatpush2.bf16.msra.mxu0 0
        %2162 = vmatprep.subr.bf16.mxu0 0
        %2163 = vmatpush2.bf16.msra.mxu0 0
        %2164 = vmatprep.subr.bf16.mxu0 0
        %2165 = vmatpush2.bf16.msra.mxu0 0
        %2166 = vmatprep.subr.bf16.mxu0 0
        %2167 = vmatpush2.bf16.msra.mxu0 0
        %2168 = vmatprep.subr.bf16.mxu0 0
        %2169 = vmatpush2.bf16.msra.mxu0 0
        %2170 = vmatprep.mubr.bf16.mxu0 0
        %2171 = vmatmul.mubr.bf16.gmra.mxu0 %v2136
        %v2172 = vpop.f32.mrf.mxu0
        %v2173 = vadd.f32 %v2109, %v2172
        %v2174 = vpop.f32.mrf.mxu0
        %v2175 = vpop.f32.mrf.mxu0
        %v2176 = vadd.f32 %v2109, %v2175
        %v2177 = vpop.f32.mrf.mxu0
        %2178 = vdwg.mxu0
        %v2179 = vadd.f32 %v2008, %v2173
        %v2180 = vadd.f32 %v2009, %v2176
        %v2181 = vsel %vm892, %v2179, 0.0
        %2182 = vadd.xlane.f32.xlu0 %v2181
        %v2183 = vpop.xlane.xlu0 %2182
        %v2184 = vsel %vm892, %v2180, 0.0
        %2185 = vadd.xlane.f32.xlu0 %v2184
        %v2186 = vpop.xlane.xlu0 %2185
        %v2187 = vmul.f32 %v2183, %v899
        %v2188 = vmul.f32 %v2186, %v899
        %v2189 = vsub.f32 %v2179, %v2187
        %v2190 = vsub.f32 %v2180, %v2188
        %v2191 = vmul.f32 %v2189, %v2189
        %v2192 = vmul.f32 %v2190, %v2190
        %v2193 = vsel %vm892, %v2191, 0.0
        %2194 = vadd.xlane.f32.xlu0 %v2193
        %v2195 = vpop.xlane.xlu0 %2194
        %v2196 = vsel %vm892, %v2192, 0.0
        %2197 = vadd.xlane.f32.xlu0 %v2196
        %v2198 = vpop.xlane.xlu0 %2197
        %v2199 = vmul.f32 %v2195, %v899
        %v2200 = vmul.f32 %v2198, %v899
        %v2201 = vadd.f32 %v2199, 1e-12
        %v2202 = vadd.f32 %v2200, 1e-12
        %v2203 = vrsqrt.pop %v2201
        %v2204 = vrsqrt.pop %v2202
        %v2205 = vmul.f32 %v2189, %v2203
        %v2206 = vmul.f32 %v2190, %v2204
        %v2207 = vlaneseq
        %v2208 = vshrl.u32 %v2207, 7
        %v2209 = vsub.s32 1, %v2208
        %v2210 = vrot.slane %v2023, %v2209
        %v2211 = vmul.f32 %v2205, %v2210
        %v2212 = vmul.f32 %v2206, %v2210
        %v2213 = vlaneseq
        %v2214 = vshrl.u32 %v2213, 7
        %v2215 = vsub.s32 2, %v2214
        %v2216 = vrot.slane %v2023, %v2215
        %v2217 = vadd.f32 %v2211, %v2216
        %v2218 = vadd.f32 %v2212, %v2216
        %v2219 = vld [vmem:[%s739] sm:$0xff]
        %v2220 = vsel %vm892, %v2219, 0.0
        %2221 = vadd.xlane.f32.xlu0 %v2220
        %v2222 = vpop.xlane.xlu0 %2221
        %v2223 = vmul.f32 %v2222, %v899
        %v2224 = vsub.f32 %v2219, %v2223
        %v2225 = vmul.f32 %v2224, %v2224
        %v2226 = vsel %vm892, %v2225, 0.0
        %2227 = vadd.xlane.f32.xlu0 %v2226
        %v2228 = vpop.xlane.xlu0 %2227
        %v2229 = vmul.f32 %v2228, %v899
        %v2230 = vadd.f32 %v2229, 1e-12
        %v2231 = vrsqrt.pop %v2230
        %v2232 = vmul.f32 %v2224, %v2231
        %v2233 = vlaneseq
        %v2234 = vshrl.u32 %v2233, 7
        %v2235 = vsub.s32 0, %v2234
        %v2236 = vrot.slane %v889, %v2235
        %v2237 = vmul.f32 %v2232, %v2236
        %v2238 = vlaneseq
        %v2239 = vshrl.u32 %v2238, 7
        %v2240 = vsub.s32 1, %v2239
        %v2241 = vrot.slane %v889, %v2240
        %v2242 = vadd.f32 %v2237, %v2241
        %v2243 = vld [vmem:[%s11] sm:$0xf]
        %v2244 = vld [vmem:[%s11 + $0x4] sm:$0xf]
        %v2245 = vld [vmem:[%s11 + $0x8] sm:$0xf]
        %v2246 = vld [vmem:[%s11 + $0xc] sm:$0xf]
        %v2247 = vld [vmem:[%s11 + $0x10] sm:$0xf]
        %v2248 = vld [vmem:[%s11 + $0x14] sm:$0xf]
        %v2249 = vld [vmem:[%s11 + $0x18] sm:$0xf]
        %v2250 = vld [vmem:[%s11 + $0x1c] sm:$0xf]
        %v2251 = vld [vmem:[%s11 + $0x20] sm:$0xf]
        %v2252 = vld [vmem:[%s11 + $0x24] sm:$0xf]
        %v2253 = vld [vmem:[%s11 + $0x28] sm:$0xf]
        %v2254 = vld [vmem:[%s11 + $0x2c] sm:$0xf]
        %v2255 = vld [vmem:[%s11 + $0x30] sm:$0xf]
        %v2256 = vld [vmem:[%s11 + $0x34] sm:$0xf]
        %v2257 = vld [vmem:[%s11 + $0x38] sm:$0xf]
        %v2258 = vld [vmem:[%s11 + $0x3c] sm:$0xf]
        %v2259 = vld [vmem:[%s12] sm:$0x3f]
        %v2260 = vpack.c.bf16 %v2242, %v2242
        %v2261 = vlaneseq
        %v2262 = vshrl.u32 %v2261, 7
        %v2263 = vsub.s32 0, %v2262
        %v2264 = vrot.slane %v2259, %v2263
        %v2269 = vunpack.c.l.b16 %v2243
        %v2270 = vunpack.c.l.b16 %v2244
        %v2271 = vunpack.c.l.b16 %v2245
        %v2272 = vunpack.c.l.b16 %v2246
        %v2273 = vpack.c.b16 %v2270, %v2269
        %v2274 = vpack.c.b16 %v2272, %v2271
        %v2278 = vsel %vm892, %v2260, 0
        %2280 = vmatprep.subr.bf16.mxu0 0
        %2281 = vmatpush1.bf16.msra.mxu0 0
        %2282 = vmatprep.subr.bf16.mxu0 0
        %2283 = vmatpush1.bf16.msra.mxu0 0
        %2284 = vmatprep.subr.bf16.mxu0 0
        %2285 = vmatpush1.bf16.msra.mxu0 0
        %2286 = vmatprep.subr.bf16.mxu0 0
        %2287 = vmatpush1.bf16.msra.mxu0 0
        %2288 = vmatprep.subr.bf16.mxu0 0
        %2289 = vmatpush1.bf16.msra.mxu0 0
        %2290 = vmatprep.subr.bf16.mxu0 0
        %2291 = vmatpush1.bf16.msra.mxu0 0
        %2292 = vmatprep.subr.bf16.mxu0 0
        %2293 = vmatpush1.bf16.msra.mxu0 %v2274
        %2294 = vmatprep.subr.bf16.mxu0 0
        %2295 = vmatpush1.bf16.msra.mxu0 %v2273
        %2296 = vmatprep.subr.bf16.mxu0 0
        %2297 = vmatpush2.bf16.msra.mxu0 0
        %2298 = vmatprep.subr.bf16.mxu0 0
        %2299 = vmatpush2.bf16.msra.mxu0 0
        %2300 = vmatprep.subr.bf16.mxu0 0
        %2301 = vmatpush2.bf16.msra.mxu0 0
        %2302 = vmatprep.subr.bf16.mxu0 0
        %2303 = vmatpush2.bf16.msra.mxu0 0
        %2304 = vmatprep.subr.bf16.mxu0 0
        %2305 = vmatpush2.bf16.msra.mxu0 0
        %2306 = vmatprep.subr.bf16.mxu0 0
        %2307 = vmatpush2.bf16.msra.mxu0 0
        %2308 = vmatprep.subr.bf16.mxu0 0
        %2309 = vmatpush2.bf16.msra.mxu0 0
        %2310 = vmatprep.subr.bf16.mxu0 0
        %2311 = vmatpush2.bf16.msra.mxu0 0
        %2312 = vmatprep.mubr.bf16.mxu0 0
        %2313 = vmatmul.mubr.bf16.gmra.mxu0 %v2278
        %v2314 = vpop.f32.mrf.mxu0
        %v2315 = vadd.f32 %v2264, %v2314
        %v2316 = vpop.f32.mrf.mxu0
        %v2317 = vpop.f32.mrf.mxu0
        %v2318 = vpop.f32.mrf.mxu0
        %2319 = vdwg.mxu0
        %v2320 = vlaneseq
        %v2321 = vshrl.u32 %v2320, 7
        %v2322 = vsub.s32 1, %v2321
        %v2323 = vrot.slane %v2259, %v2322
        %v2328 = vunpack.c.l.b16 %v2247
        %v2329 = vunpack.c.l.b16 %v2248
        %v2330 = vunpack.c.l.b16 %v2249
        %v2331 = vunpack.c.l.b16 %v2250
        %v2332 = vpack.c.b16 %v2329, %v2328
        %v2333 = vpack.c.b16 %v2331, %v2330
        %2336 = vmatprep.subr.bf16.mxu0 0
        %2337 = vmatpush1.bf16.msra.mxu0 0
        %2338 = vmatprep.subr.bf16.mxu0 0
        %2339 = vmatpush1.bf16.msra.mxu0 0
        %2340 = vmatprep.subr.bf16.mxu0 0
        %2341 = vmatpush1.bf16.msra.mxu0 0
        %2342 = vmatprep.subr.bf16.mxu0 0
        %2343 = vmatpush1.bf16.msra.mxu0 0
        %2344 = vmatprep.subr.bf16.mxu0 0
        %2345 = vmatpush1.bf16.msra.mxu0 0
        %2346 = vmatprep.subr.bf16.mxu0 0
        %2347 = vmatpush1.bf16.msra.mxu0 0
        %2348 = vmatprep.subr.bf16.mxu0 0
        %2349 = vmatpush1.bf16.msra.mxu0 %v2333
        %2350 = vmatprep.subr.bf16.mxu0 0
        %2351 = vmatpush1.bf16.msra.mxu0 %v2332
        %2352 = vmatprep.subr.bf16.mxu0 0
        %2353 = vmatpush2.bf16.msra.mxu0 0
        %2354 = vmatprep.subr.bf16.mxu0 0
        %2355 = vmatpush2.bf16.msra.mxu0 0
        %2356 = vmatprep.subr.bf16.mxu0 0
        %2357 = vmatpush2.bf16.msra.mxu0 0
        %2358 = vmatprep.subr.bf16.mxu0 0
        %2359 = vmatpush2.bf16.msra.mxu0 0
        %2360 = vmatprep.subr.bf16.mxu0 0
        %2361 = vmatpush2.bf16.msra.mxu0 0
        %2362 = vmatprep.subr.bf16.mxu0 0
        %2363 = vmatpush2.bf16.msra.mxu0 0
        %2364 = vmatprep.subr.bf16.mxu0 0
        %2365 = vmatpush2.bf16.msra.mxu0 0
        %2366 = vmatprep.subr.bf16.mxu0 0
        %2367 = vmatpush2.bf16.msra.mxu0 0
        %2368 = vmatprep.mubr.bf16.mxu0 0
        %2369 = vmatmul.mubr.bf16.gmra.mxu0 %v2278
        %v2370 = vpop.f32.mrf.mxu0
        %v2371 = vadd.f32 %v2323, %v2370
        %v2372 = vpop.f32.mrf.mxu0
        %v2373 = vpop.f32.mrf.mxu0
        %v2374 = vpop.f32.mrf.mxu0
        %2375 = vdwg.mxu0
        %v2376 = vlaneseq
        %v2377 = vshrl.u32 %v2376, 7
        %v2378 = vsub.s32 2, %v2377
        %v2379 = vrot.slane %v2259, %v2378
        %v2384 = vunpack.c.l.b16 %v2251
        %v2385 = vunpack.c.l.b16 %v2252
        %v2386 = vunpack.c.l.b16 %v2253
        %v2387 = vunpack.c.l.b16 %v2254
        %v2388 = vpack.c.b16 %v2385, %v2384
        %v2389 = vpack.c.b16 %v2387, %v2386
        %2392 = vmatprep.subr.bf16.mxu0 0
        %2393 = vmatpush1.bf16.msra.mxu0 0
        %2394 = vmatprep.subr.bf16.mxu0 0
        %2395 = vmatpush1.bf16.msra.mxu0 0
        %2396 = vmatprep.subr.bf16.mxu0 0
        %2397 = vmatpush1.bf16.msra.mxu0 0
        %2398 = vmatprep.subr.bf16.mxu0 0
        %2399 = vmatpush1.bf16.msra.mxu0 0
        %2400 = vmatprep.subr.bf16.mxu0 0
        %2401 = vmatpush1.bf16.msra.mxu0 0
        %2402 = vmatprep.subr.bf16.mxu0 0
        %2403 = vmatpush1.bf16.msra.mxu0 0
        %2404 = vmatprep.subr.bf16.mxu0 0
        %2405 = vmatpush1.bf16.msra.mxu0 %v2389
        %2406 = vmatprep.subr.bf16.mxu0 0
        %2407 = vmatpush1.bf16.msra.mxu0 %v2388
        %2408 = vmatprep.subr.bf16.mxu0 0
        %2409 = vmatpush2.bf16.msra.mxu0 0
        %2410 = vmatprep.subr.bf16.mxu0 0
        %2411 = vmatpush2.bf16.msra.mxu0 0
        %2412 = vmatprep.subr.bf16.mxu0 0
        %2413 = vmatpush2.bf16.msra.mxu0 0
        %2414 = vmatprep.subr.bf16.mxu0 0
        %2415 = vmatpush2.bf16.msra.mxu0 0
        %2416 = vmatprep.subr.bf16.mxu0 0
        %2417 = vmatpush2.bf16.msra.mxu0 0
        %2418 = vmatprep.subr.bf16.mxu0 0
        %2419 = vmatpush2.bf16.msra.mxu0 0
        %2420 = vmatprep.subr.bf16.mxu0 0
        %2421 = vmatpush2.bf16.msra.mxu0 0
        %2422 = vmatprep.subr.bf16.mxu0 0
        %2423 = vmatpush2.bf16.msra.mxu0 0
        %2424 = vmatprep.mubr.bf16.mxu0 0
        %2425 = vmatmul.mubr.bf16.gmra.mxu0 %v2278
        %v2426 = vpop.f32.mrf.mxu0
        %v2427 = vadd.f32 %v2379, %v2426
        %v2428 = vpop.f32.mrf.mxu0
        %v2429 = vpop.f32.mrf.mxu0
        %v2430 = vpop.f32.mrf.mxu0
        %2431 = vdwg.mxu0
        %v2432 = vmul.f32 %v2315, %v854
        %v2434 = vsel %vm892, %v2432, 0
        %v2437 = vsel %vm892, %v2371, 0
        %2439 = vmatprep.subr.mxu0 0.0
        %2440 = vmatpush1.xpose.msra.mxu0 0.0
        %2441 = vmatprep.subr.mxu0 0.0
        %2442 = vmatpush1.xpose.msra.mxu0 0.0
        %2443 = vmatprep.subr.mxu0 0.0
        %2444 = vmatpush1.xpose.msra.mxu0 0.0
        %2445 = vmatprep.subr.mxu0 0.0
        %2446 = vmatpush1.xpose.msra.mxu0 0.0
        %2447 = vmatprep.subr.mxu0 0.0
        %2448 = vmatpush1.xpose.msra.mxu0 0.0
        %2449 = vmatprep.subr.mxu0 0.0
        %2450 = vmatpush1.xpose.msra.mxu0 0.0
        %2451 = vmatprep.subr.mxu0 0.0
        %2452 = vmatpush1.xpose.msra.mxu0 0.0
        %2453 = vmatprep.subr.mxu0 0.0
        %2454 = vmatpush1.xpose.msra.mxu0 0.0
        %2455 = vmatprep.subr.mxu0 0.0
        %2456 = vmatpush1.xpose.msra.mxu0 0.0
        %2457 = vmatprep.subr.mxu0 0.0
        %2458 = vmatpush1.xpose.msra.mxu0 0.0
        %2459 = vmatprep.subr.mxu0 0.0
        %2460 = vmatpush1.xpose.msra.mxu0 0.0
        %2461 = vmatprep.subr.mxu0 0.0
        %2462 = vmatpush1.xpose.msra.mxu0 0.0
        %2463 = vmatprep.subr.mxu0 0.0
        %2464 = vmatpush1.xpose.msra.mxu0 0.0
        %2465 = vmatprep.subr.mxu0 0.0
        %2466 = vmatpush1.xpose.msra.mxu0 0.0
        %2467 = vmatprep.subr.mxu0 0.0
        %2468 = vmatpush1.xpose.msra.mxu0 0.0
        %2469 = vmatprep.subr.mxu0 0.0
        %2470 = vmatpush1.xpose.msra.mxu0 %v2437
        %2471 = vmatprep.subr.mxu0 0.0
        %2472 = vmatpush2.xpose.msra.mxu0 0.0
        %2473 = vmatprep.subr.mxu0 0.0
        %2474 = vmatpush2.xpose.msra.mxu0 0.0
        %2475 = vmatprep.subr.mxu0 0.0
        %2476 = vmatpush2.xpose.msra.mxu0 0.0
        %2477 = vmatprep.subr.mxu0 0.0
        %2478 = vmatpush2.xpose.msra.mxu0 0.0
        %2479 = vmatprep.subr.mxu0 0.0
        %2480 = vmatpush2.xpose.msra.mxu0 0.0
        %2481 = vmatprep.subr.mxu0 0.0
        %2482 = vmatpush2.xpose.msra.mxu0 0.0
        %2483 = vmatprep.subr.mxu0 0.0
        %2484 = vmatpush2.xpose.msra.mxu0 0.0
        %2485 = vmatprep.subr.mxu0 0.0
        %2486 = vmatpush2.xpose.msra.mxu0 0.0
        %2487 = vmatprep.subr.mxu0 0.0
        %2488 = vmatpush2.xpose.msra.mxu0 0.0
        %2489 = vmatprep.subr.mxu0 0.0
        %2490 = vmatpush2.xpose.msra.mxu0 0.0
        %2491 = vmatprep.subr.mxu0 0.0
        %2492 = vmatpush2.xpose.msra.mxu0 0.0
        %2493 = vmatprep.subr.mxu0 0.0
        %2494 = vmatpush2.xpose.msra.mxu0 0.0
        %2495 = vmatprep.subr.mxu0 0.0
        %2496 = vmatpush2.xpose.msra.mxu0 0.0
        %2497 = vmatprep.subr.mxu0 0.0
        %2498 = vmatpush2.xpose.msra.mxu0 0.0
        %2499 = vmatprep.subr.mxu0 0.0
        %2500 = vmatpush2.xpose.msra.mxu0 0.0
        %2501 = vmatprep.subr.mxu0 0.0
        %2502 = vmatpush2.xpose.msra.mxu0 0.0
        %2503 = vmatprep.mubr.f32.mxu0 0.0
        %2504 = vmatmul.mubr.f32.gmra.mxu0 %v2434
        %v2505 = vpop.f32.mrf.mxu0
        %v2506 = vadd.f32 0.0, %v2505
        %v2507 = vpop.f32.mrf.mxu0
        %2508 = vdwg.mxu0
        %v2509 = vmul.f32 %v2506, 0.35355338
        %v2510 = vadd.f32 %v2509, %v887
        %vm2511 = vcmask 64512
        %v2512 = vsel %vm2511, %v2510, -inf
        %2513 = vmax.xlane.f32.xlu0 %v2512
        %v2514 = vpop.xlane.xlu0 %2513
        %v2515 = vsub.f32 %v2510, %v2514
        %v2516 = vmul.f32 %v2515, 1.442695
        %v2517 = vpow.pop %v2516
        %v2518 = vsel %vm2511, %v2517, 0.0
        %2519 = vadd.xlane.f32.xlu0 %v2518
        %v2520 = vpop.xlane.xlu0 %2519
        %v2521 = vrcp.pop %v2520
        %v2522 = vmul.f32 %v2517, %v2521
        %v2523 = vmul.f32 %v2427, %v854
        %v2524 = vmul.f32 %v2315, %v859
        %v2526 = vsel %vm892, %v2524, 0
        %2528 = vmatprep.subr.mxu0 0.0
        %2529 = vmatpush1.xpose.msra.mxu0 0.0
        %2530 = vmatprep.subr.mxu0 0.0
        %2531 = vmatpush1.xpose.msra.mxu0 0.0
        %2532 = vmatprep.subr.mxu0 0.0
        %2533 = vmatpush1.xpose.msra.mxu0 0.0
        %2534 = vmatprep.subr.mxu0 0.0
        %2535 = vmatpush1.xpose.msra.mxu0 0.0
        %2536 = vmatprep.subr.mxu0 0.0
        %2537 = vmatpush1.xpose.msra.mxu0 0.0
        %2538 = vmatprep.subr.mxu0 0.0
        %2539 = vmatpush1.xpose.msra.mxu0 0.0
        %2540 = vmatprep.subr.mxu0 0.0
        %2541 = vmatpush1.xpose.msra.mxu0 0.0
        %2542 = vmatprep.subr.mxu0 0.0
        %2543 = vmatpush1.xpose.msra.mxu0 0.0
        %2544 = vmatprep.subr.mxu0 0.0
        %2545 = vmatpush1.xpose.msra.mxu0 0.0
        %2546 = vmatprep.subr.mxu0 0.0
        %2547 = vmatpush1.xpose.msra.mxu0 0.0
        %2548 = vmatprep.subr.mxu0 0.0
        %2549 = vmatpush1.xpose.msra.mxu0 0.0
        %2550 = vmatprep.subr.mxu0 0.0
        %2551 = vmatpush1.xpose.msra.mxu0 0.0
        %2552 = vmatprep.subr.mxu0 0.0
        %2553 = vmatpush1.xpose.msra.mxu0 0.0
        %2554 = vmatprep.subr.mxu0 0.0
        %2555 = vmatpush1.xpose.msra.mxu0 0.0
        %2556 = vmatprep.subr.mxu0 0.0
        %2557 = vmatpush1.xpose.msra.mxu0 0.0
        %2558 = vmatprep.subr.mxu0 0.0
        %2559 = vmatpush1.xpose.msra.mxu0 %v2437
        %2560 = vmatprep.subr.mxu0 0.0
        %2561 = vmatpush2.xpose.msra.mxu0 0.0
        %2562 = vmatprep.subr.mxu0 0.0
        %2563 = vmatpush2.xpose.msra.mxu0 0.0
        %2564 = vmatprep.subr.mxu0 0.0
        %2565 = vmatpush2.xpose.msra.mxu0 0.0
        %2566 = vmatprep.subr.mxu0 0.0
        %2567 = vmatpush2.xpose.msra.mxu0 0.0
        %2568 = vmatprep.subr.mxu0 0.0
        %2569 = vmatpush2.xpose.msra.mxu0 0.0
        %2570 = vmatprep.subr.mxu0 0.0
        %2571 = vmatpush2.xpose.msra.mxu0 0.0
        %2572 = vmatprep.subr.mxu0 0.0
        %2573 = vmatpush2.xpose.msra.mxu0 0.0
        %2574 = vmatprep.subr.mxu0 0.0
        %2575 = vmatpush2.xpose.msra.mxu0 0.0
        %2576 = vmatprep.subr.mxu0 0.0
        %2577 = vmatpush2.xpose.msra.mxu0 0.0
        %2578 = vmatprep.subr.mxu0 0.0
        %2579 = vmatpush2.xpose.msra.mxu0 0.0
        %2580 = vmatprep.subr.mxu0 0.0
        %2581 = vmatpush2.xpose.msra.mxu0 0.0
        %2582 = vmatprep.subr.mxu0 0.0
        %2583 = vmatpush2.xpose.msra.mxu0 0.0
        %2584 = vmatprep.subr.mxu0 0.0
        %2585 = vmatpush2.xpose.msra.mxu0 0.0
        %2586 = vmatprep.subr.mxu0 0.0
        %2587 = vmatpush2.xpose.msra.mxu0 0.0
        %2588 = vmatprep.subr.mxu0 0.0
        %2589 = vmatpush2.xpose.msra.mxu0 0.0
        %2590 = vmatprep.subr.mxu0 0.0
        %2591 = vmatpush2.xpose.msra.mxu0 0.0
        %2592 = vmatprep.mubr.f32.mxu0 0.0
        %2593 = vmatmul.mubr.f32.gmra.mxu0 %v2526
        %v2594 = vpop.f32.mrf.mxu0
        %v2595 = vadd.f32 0.0, %v2594
        %v2596 = vpop.f32.mrf.mxu0
        %2597 = vdwg.mxu0
        %v2598 = vmul.f32 %v2595, 0.35355338
        %v2599 = vadd.f32 %v2598, %v887
        %v2600 = vsel %vm2511, %v2599, -inf
        %2601 = vmax.xlane.f32.xlu0 %v2600
        %v2602 = vpop.xlane.xlu0 %2601
        %v2603 = vsub.f32 %v2599, %v2602
        %v2604 = vmul.f32 %v2603, 1.442695
        %v2605 = vpow.pop %v2604
        %v2606 = vsel %vm2511, %v2605, 0.0
        %2607 = vadd.xlane.f32.xlu0 %v2606
        %v2608 = vpop.xlane.xlu0 %2607
        %v2609 = vrcp.pop %v2608
        %v2610 = vmul.f32 %v2605, %v2609
        %v2611 = vmul.f32 %v2427, %v859
        %v2613 = vsel %vm2511, %v2610, 0
        %2615 = vmatprep.subr.mxu0 0.0
        %2616 = vmatpush1.msra.mxu0 0.0
        %2617 = vmatprep.subr.mxu0 0.0
        %2618 = vmatpush1.msra.mxu0 0.0
        %2619 = vmatprep.subr.mxu0 0.0
        %2620 = vmatpush1.msra.mxu0 0.0
        %2621 = vmatprep.subr.mxu0 0.0
        %2622 = vmatpush1.msra.mxu0 0.0
        %2623 = vmatprep.subr.mxu0 0.0
        %2624 = vmatpush1.msra.mxu0 0.0
        %2625 = vmatprep.subr.mxu0 0.0
        %2626 = vmatpush1.msra.mxu0 0.0
        %2627 = vmatprep.subr.mxu0 0.0
        %2628 = vmatpush1.msra.mxu0 0.0
        %2629 = vmatprep.subr.mxu0 0.0
        %2630 = vmatpush1.msra.mxu0 0.0
        %2631 = vmatprep.subr.mxu0 0.0
        %2632 = vmatpush1.msra.mxu0 0.0
        %2633 = vmatprep.subr.mxu0 0.0
        %2634 = vmatpush1.msra.mxu0 0.0
        %2635 = vmatprep.subr.mxu0 0.0
        %2636 = vmatpush1.msra.mxu0 0.0
        %2637 = vmatprep.subr.mxu0 0.0
        %2638 = vmatpush1.msra.mxu0 0.0
        %2639 = vmatprep.subr.mxu0 0.0
        %2640 = vmatpush1.msra.mxu0 0.0
        %2641 = vmatprep.subr.mxu0 0.0
        %2642 = vmatpush1.msra.mxu0 0.0
        %2643 = vmatprep.subr.mxu0 0.0
        %2644 = vmatpush1.msra.mxu0 0.0
        %2645 = vmatprep.subr.mxu0 0.0
        %2646 = vmatpush1.msra.mxu0 %v2611
        %2647 = vmatprep.subr.mxu0 0.0
        %2648 = vmatpush2.msra.mxu0 0.0
        %2649 = vmatprep.subr.mxu0 0.0
        %2650 = vmatpush2.msra.mxu0 0.0
        %2651 = vmatprep.subr.mxu0 0.0
        %2652 = vmatpush2.msra.mxu0 0.0
        %2653 = vmatprep.subr.mxu0 0.0
        %2654 = vmatpush2.msra.mxu0 0.0
        %2655 = vmatprep.subr.mxu0 0.0
        %2656 = vmatpush2.msra.mxu0 0.0
        %2657 = vmatprep.subr.mxu0 0.0
        %2658 = vmatpush2.msra.mxu0 0.0
        %2659 = vmatprep.subr.mxu0 0.0
        %2660 = vmatpush2.msra.mxu0 0.0
        %2661 = vmatprep.subr.mxu0 0.0
        %2662 = vmatpush2.msra.mxu0 0.0
        %2663 = vmatprep.subr.mxu0 0.0
        %2664 = vmatpush2.msra.mxu0 0.0
        %2665 = vmatprep.subr.mxu0 0.0
        %2666 = vmatpush2.msra.mxu0 0.0
        %2667 = vmatprep.subr.mxu0 0.0
        %2668 = vmatpush2.msra.mxu0 0.0
        %2669 = vmatprep.subr.mxu0 0.0
        %2670 = vmatpush2.msra.mxu0 0.0
        %2671 = vmatprep.subr.mxu0 0.0
        %2672 = vmatpush2.msra.mxu0 0.0
        %2673 = vmatprep.subr.mxu0 0.0
        %2674 = vmatpush2.msra.mxu0 0.0
        %2675 = vmatprep.subr.mxu0 0.0
        %2676 = vmatpush2.msra.mxu0 0.0
        %2677 = vmatprep.subr.mxu0 0.0
        %2678 = vmatpush2.msra.mxu0 0.0
        %2679 = vmatprep.mubr.f32.mxu0 0.0
        %2680 = vmatmul.mubr.f32.gmra.mxu0 %v2613
        %v2681 = vpop.f32.mrf.mxu0
        %v2682 = vadd.f32 0.0, %v2681
        %v2683 = vpop.f32.mrf.mxu0
        %2684 = vdwg.mxu0
        %v2686 = vsel %vm2511, %v2522, 0
        %2688 = vmatprep.subr.mxu0 0.0
        %2689 = vmatpush1.msra.mxu0 0.0
        %2690 = vmatprep.subr.mxu0 0.0
        %2691 = vmatpush1.msra.mxu0 0.0
        %2692 = vmatprep.subr.mxu0 0.0
        %2693 = vmatpush1.msra.mxu0 0.0
        %2694 = vmatprep.subr.mxu0 0.0
        %2695 = vmatpush1.msra.mxu0 0.0
        %2696 = vmatprep.subr.mxu0 0.0
        %2697 = vmatpush1.msra.mxu0 0.0
        %2698 = vmatprep.subr.mxu0 0.0
        %2699 = vmatpush1.msra.mxu0 0.0
        %2700 = vmatprep.subr.mxu0 0.0
        %2701 = vmatpush1.msra.mxu0 0.0
        %2702 = vmatprep.subr.mxu0 0.0
        %2703 = vmatpush1.msra.mxu0 0.0
        %2704 = vmatprep.subr.mxu0 0.0
        %2705 = vmatpush1.msra.mxu0 0.0
        %2706 = vmatprep.subr.mxu0 0.0
        %2707 = vmatpush1.msra.mxu0 0.0
        %2708 = vmatprep.subr.mxu0 0.0
        %2709 = vmatpush1.msra.mxu0 0.0
        %2710 = vmatprep.subr.mxu0 0.0
        %2711 = vmatpush1.msra.mxu0 0.0
        %2712 = vmatprep.subr.mxu0 0.0
        %2713 = vmatpush1.msra.mxu0 0.0
        %2714 = vmatprep.subr.mxu0 0.0
        %2715 = vmatpush1.msra.mxu0 0.0
        %2716 = vmatprep.subr.mxu0 0.0
        %2717 = vmatpush1.msra.mxu0 0.0
        %2718 = vmatprep.subr.mxu0 0.0
        %2719 = vmatpush1.msra.mxu0 %v2523
        %2720 = vmatprep.subr.mxu0 0.0
        %2721 = vmatpush2.msra.mxu0 0.0
        %2722 = vmatprep.subr.mxu0 0.0
        %2723 = vmatpush2.msra.mxu0 0.0
        %2724 = vmatprep.subr.mxu0 0.0
        %2725 = vmatpush2.msra.mxu0 0.0
        %2726 = vmatprep.subr.mxu0 0.0
        %2727 = vmatpush2.msra.mxu0 0.0
        %2728 = vmatprep.subr.mxu0 0.0
        %2729 = vmatpush2.msra.mxu0 0.0
        %2730 = vmatprep.subr.mxu0 0.0
        %2731 = vmatpush2.msra.mxu0 0.0
        %2732 = vmatprep.subr.mxu0 0.0
        %2733 = vmatpush2.msra.mxu0 0.0
        %2734 = vmatprep.subr.mxu0 0.0
        %2735 = vmatpush2.msra.mxu0 0.0
        %2736 = vmatprep.subr.mxu0 0.0
        %2737 = vmatpush2.msra.mxu0 0.0
        %2738 = vmatprep.subr.mxu0 0.0
        %2739 = vmatpush2.msra.mxu0 0.0
        %2740 = vmatprep.subr.mxu0 0.0
        %2741 = vmatpush2.msra.mxu0 0.0
        %2742 = vmatprep.subr.mxu0 0.0
        %2743 = vmatpush2.msra.mxu0 0.0
        %2744 = vmatprep.subr.mxu0 0.0
        %2745 = vmatpush2.msra.mxu0 0.0
        %2746 = vmatprep.subr.mxu0 0.0
        %2747 = vmatpush2.msra.mxu0 0.0
        %2748 = vmatprep.subr.mxu0 0.0
        %2749 = vmatpush2.msra.mxu0 0.0
        %2750 = vmatprep.subr.mxu0 0.0
        %2751 = vmatpush2.msra.mxu0 0.0
        %2752 = vmatprep.mubr.f32.mxu0 0.0
        %2753 = vmatmul.mubr.f32.gmra.mxu0 %v2686
        %v2754 = vpop.f32.mrf.mxu0
        %v2755 = vadd.f32 %v2682, %v2754
        %v2756 = vpop.f32.mrf.mxu0
        %2757 = vdwg.mxu0
        %v2758 = vmul.f32 %v2315, %v864
        %v2760 = vsel %vm892, %v2758, 0
        %2762 = vmatprep.subr.mxu0 0.0
        %2763 = vmatpush1.xpose.msra.mxu0 0.0
        %2764 = vmatprep.subr.mxu0 0.0
        %2765 = vmatpush1.xpose.msra.mxu0 0.0
        %2766 = vmatprep.subr.mxu0 0.0
        %2767 = vmatpush1.xpose.msra.mxu0 0.0
        %2768 = vmatprep.subr.mxu0 0.0
        %2769 = vmatpush1.xpose.msra.mxu0 0.0
        %2770 = vmatprep.subr.mxu0 0.0
        %2771 = vmatpush1.xpose.msra.mxu0 0.0
        %2772 = vmatprep.subr.mxu0 0.0
        %2773 = vmatpush1.xpose.msra.mxu0 0.0
        %2774 = vmatprep.subr.mxu0 0.0
        %2775 = vmatpush1.xpose.msra.mxu0 0.0
        %2776 = vmatprep.subr.mxu0 0.0
        %2777 = vmatpush1.xpose.msra.mxu0 0.0
        %2778 = vmatprep.subr.mxu0 0.0
        %2779 = vmatpush1.xpose.msra.mxu0 0.0
        %2780 = vmatprep.subr.mxu0 0.0
        %2781 = vmatpush1.xpose.msra.mxu0 0.0
        %2782 = vmatprep.subr.mxu0 0.0
        %2783 = vmatpush1.xpose.msra.mxu0 0.0
        %2784 = vmatprep.subr.mxu0 0.0
        %2785 = vmatpush1.xpose.msra.mxu0 0.0
        %2786 = vmatprep.subr.mxu0 0.0
        %2787 = vmatpush1.xpose.msra.mxu0 0.0
        %2788 = vmatprep.subr.mxu0 0.0
        %2789 = vmatpush1.xpose.msra.mxu0 0.0
        %2790 = vmatprep.subr.mxu0 0.0
        %2791 = vmatpush1.xpose.msra.mxu0 0.0
        %2792 = vmatprep.subr.mxu0 0.0
        %2793 = vmatpush1.xpose.msra.mxu0 %v2437
        %2794 = vmatprep.subr.mxu0 0.0
        %2795 = vmatpush2.xpose.msra.mxu0 0.0
        %2796 = vmatprep.subr.mxu0 0.0
        %2797 = vmatpush2.xpose.msra.mxu0 0.0
        %2798 = vmatprep.subr.mxu0 0.0
        %2799 = vmatpush2.xpose.msra.mxu0 0.0
        %2800 = vmatprep.subr.mxu0 0.0
        %2801 = vmatpush2.xpose.msra.mxu0 0.0
        %2802 = vmatprep.subr.mxu0 0.0
        %2803 = vmatpush2.xpose.msra.mxu0 0.0
        %2804 = vmatprep.subr.mxu0 0.0
        %2805 = vmatpush2.xpose.msra.mxu0 0.0
        %2806 = vmatprep.subr.mxu0 0.0
        %2807 = vmatpush2.xpose.msra.mxu0 0.0
        %2808 = vmatprep.subr.mxu0 0.0
        %2809 = vmatpush2.xpose.msra.mxu0 0.0
        %2810 = vmatprep.subr.mxu0 0.0
        %2811 = vmatpush2.xpose.msra.mxu0 0.0
        %2812 = vmatprep.subr.mxu0 0.0
        %2813 = vmatpush2.xpose.msra.mxu0 0.0
        %2814 = vmatprep.subr.mxu0 0.0
        %2815 = vmatpush2.xpose.msra.mxu0 0.0
        %2816 = vmatprep.subr.mxu0 0.0
        %2817 = vmatpush2.xpose.msra.mxu0 0.0
        %2818 = vmatprep.subr.mxu0 0.0
        %2819 = vmatpush2.xpose.msra.mxu0 0.0
        %2820 = vmatprep.subr.mxu0 0.0
        %2821 = vmatpush2.xpose.msra.mxu0 0.0
        %2822 = vmatprep.subr.mxu0 0.0
        %2823 = vmatpush2.xpose.msra.mxu0 0.0
        %2824 = vmatprep.subr.mxu0 0.0
        %2825 = vmatpush2.xpose.msra.mxu0 0.0
        %2826 = vmatprep.mubr.f32.mxu0 0.0
        %2827 = vmatmul.mubr.f32.gmra.mxu0 %v2760
        %v2828 = vpop.f32.mrf.mxu0
        %v2829 = vadd.f32 0.0, %v2828
        %v2830 = vpop.f32.mrf.mxu0
        %2831 = vdwg.mxu0
        %v2832 = vmul.f32 %v2829, 0.35355338
        %v2833 = vadd.f32 %v2832, %v887
        %v2834 = vsel %vm2511, %v2833, -inf
        %2835 = vmax.xlane.f32.xlu0 %v2834
        %v2836 = vpop.xlane.xlu0 %2835
        %v2837 = vsub.f32 %v2833, %v2836
        %v2838 = vmul.f32 %v2837, 1.442695
        %v2839 = vpow.pop %v2838
        %v2840 = vsel %vm2511, %v2839, 0.0
        %2841 = vadd.xlane.f32.xlu0 %v2840
        %v2842 = vpop.xlane.xlu0 %2841
        %v2843 = vrcp.pop %v2842
        %v2844 = vmul.f32 %v2839, %v2843
        %v2845 = vmul.f32 %v2427, %v864
        %v2847 = vsel %vm2511, %v2844, 0
        %2849 = vmatprep.subr.mxu0 0.0
        %2850 = vmatpush1.msra.mxu0 0.0
        %2851 = vmatprep.subr.mxu0 0.0
        %2852 = vmatpush1.msra.mxu0 0.0
        %2853 = vmatprep.subr.mxu0 0.0
        %2854 = vmatpush1.msra.mxu0 0.0
        %2855 = vmatprep.subr.mxu0 0.0
        %2856 = vmatpush1.msra.mxu0 0.0
        %2857 = vmatprep.subr.mxu0 0.0
        %2858 = vmatpush1.msra.mxu0 0.0
        %2859 = vmatprep.subr.mxu0 0.0
        %2860 = vmatpush1.msra.mxu0 0.0
        %2861 = vmatprep.subr.mxu0 0.0
        %2862 = vmatpush1.msra.mxu0 0.0
        %2863 = vmatprep.subr.mxu0 0.0
        %2864 = vmatpush1.msra.mxu0 0.0
        %2865 = vmatprep.subr.mxu0 0.0
        %2866 = vmatpush1.msra.mxu0 0.0
        %2867 = vmatprep.subr.mxu0 0.0
        %2868 = vmatpush1.msra.mxu0 0.0
        %2869 = vmatprep.subr.mxu0 0.0
        %2870 = vmatpush1.msra.mxu0 0.0
        %2871 = vmatprep.subr.mxu0 0.0
        %2872 = vmatpush1.msra.mxu0 0.0
        %2873 = vmatprep.subr.mxu0 0.0
        %2874 = vmatpush1.msra.mxu0 0.0
        %2875 = vmatprep.subr.mxu0 0.0
        %2876 = vmatpush1.msra.mxu0 0.0
        %2877 = vmatprep.subr.mxu0 0.0
        %2878 = vmatpush1.msra.mxu0 0.0
        %2879 = vmatprep.subr.mxu0 0.0
        %2880 = vmatpush1.msra.mxu0 %v2845
        %2881 = vmatprep.subr.mxu0 0.0
        %2882 = vmatpush2.msra.mxu0 0.0
        %2883 = vmatprep.subr.mxu0 0.0
        %2884 = vmatpush2.msra.mxu0 0.0
        %2885 = vmatprep.subr.mxu0 0.0
        %2886 = vmatpush2.msra.mxu0 0.0
        %2887 = vmatprep.subr.mxu0 0.0
        %2888 = vmatpush2.msra.mxu0 0.0
        %2889 = vmatprep.subr.mxu0 0.0
        %2890 = vmatpush2.msra.mxu0 0.0
        %2891 = vmatprep.subr.mxu0 0.0
        %2892 = vmatpush2.msra.mxu0 0.0
        %2893 = vmatprep.subr.mxu0 0.0
        %2894 = vmatpush2.msra.mxu0 0.0
        %2895 = vmatprep.subr.mxu0 0.0
        %2896 = vmatpush2.msra.mxu0 0.0
        %2897 = vmatprep.subr.mxu0 0.0
        %2898 = vmatpush2.msra.mxu0 0.0
        %2899 = vmatprep.subr.mxu0 0.0
        %2900 = vmatpush2.msra.mxu0 0.0
        %2901 = vmatprep.subr.mxu0 0.0
        %2902 = vmatpush2.msra.mxu0 0.0
        %2903 = vmatprep.subr.mxu0 0.0
        %2904 = vmatpush2.msra.mxu0 0.0
        %2905 = vmatprep.subr.mxu0 0.0
        %2906 = vmatpush2.msra.mxu0 0.0
        %2907 = vmatprep.subr.mxu0 0.0
        %2908 = vmatpush2.msra.mxu0 0.0
        %2909 = vmatprep.subr.mxu0 0.0
        %2910 = vmatpush2.msra.mxu0 0.0
        %2911 = vmatprep.subr.mxu0 0.0
        %2912 = vmatpush2.msra.mxu0 0.0
        %2913 = vmatprep.mubr.f32.mxu0 0.0
        %2914 = vmatmul.mubr.f32.gmra.mxu0 %v2847
        %v2915 = vpop.f32.mrf.mxu0
        %v2916 = vadd.f32 0.0, %v2915
        %v2917 = vpop.f32.mrf.mxu0
        %2918 = vdwg.mxu0
        %v2919 = vadd.f32 %v2755, %v2916
        %v2920 = vmul.f32 %v2315, %v869
        %v2922 = vsel %vm892, %v2920, 0
        %2924 = vmatprep.subr.mxu0 0.0
        %2925 = vmatpush1.xpose.msra.mxu0 0.0
        %2926 = vmatprep.subr.mxu0 0.0
        %2927 = vmatpush1.xpose.msra.mxu0 0.0
        %2928 = vmatprep.subr.mxu0 0.0
        %2929 = vmatpush1.xpose.msra.mxu0 0.0
        %2930 = vmatprep.subr.mxu0 0.0
        %2931 = vmatpush1.xpose.msra.mxu0 0.0
        %2932 = vmatprep.subr.mxu0 0.0
        %2933 = vmatpush1.xpose.msra.mxu0 0.0
        %2934 = vmatprep.subr.mxu0 0.0
        %2935 = vmatpush1.xpose.msra.mxu0 0.0
        %2936 = vmatprep.subr.mxu0 0.0
        %2937 = vmatpush1.xpose.msra.mxu0 0.0
        %2938 = vmatprep.subr.mxu0 0.0
        %2939 = vmatpush1.xpose.msra.mxu0 0.0
        %2940 = vmatprep.subr.mxu0 0.0
        %2941 = vmatpush1.xpose.msra.mxu0 0.0
        %2942 = vmatprep.subr.mxu0 0.0
        %2943 = vmatpush1.xpose.msra.mxu0 0.0
        %2944 = vmatprep.subr.mxu0 0.0
        %2945 = vmatpush1.xpose.msra.mxu0 0.0
        %2946 = vmatprep.subr.mxu0 0.0
        %2947 = vmatpush1.xpose.msra.mxu0 0.0
        %2948 = vmatprep.subr.mxu0 0.0
        %2949 = vmatpush1.xpose.msra.mxu0 0.0
        %2950 = vmatprep.subr.mxu0 0.0
        %2951 = vmatpush1.xpose.msra.mxu0 0.0
        %2952 = vmatprep.subr.mxu0 0.0
        %2953 = vmatpush1.xpose.msra.mxu0 0.0
        %2954 = vmatprep.subr.mxu0 0.0
        %2955 = vmatpush1.xpose.msra.mxu0 %v2437
        %2956 = vmatprep.subr.mxu0 0.0
        %2957 = vmatpush2.xpose.msra.mxu0 0.0
        %2958 = vmatprep.subr.mxu0 0.0
        %2959 = vmatpush2.xpose.msra.mxu0 0.0
        %2960 = vmatprep.subr.mxu0 0.0
        %2961 = vmatpush2.xpose.msra.mxu0 0.0
        %2962 = vmatprep.subr.mxu0 0.0
        %2963 = vmatpush2.xpose.msra.mxu0 0.0
        %2964 = vmatprep.subr.mxu0 0.0
        %2965 = vmatpush2.xpose.msra.mxu0 0.0
        %2966 = vmatprep.subr.mxu0 0.0
        %2967 = vmatpush2.xpose.msra.mxu0 0.0
        %2968 = vmatprep.subr.mxu0 0.0
        %2969 = vmatpush2.xpose.msra.mxu0 0.0
        %2970 = vmatprep.subr.mxu0 0.0
        %2971 = vmatpush2.xpose.msra.mxu0 0.0
        %2972 = vmatprep.subr.mxu0 0.0
        %2973 = vmatpush2.xpose.msra.mxu0 0.0
        %2974 = vmatprep.subr.mxu0 0.0
        %2975 = vmatpush2.xpose.msra.mxu0 0.0
        %2976 = vmatprep.subr.mxu0 0.0
        %2977 = vmatpush2.xpose.msra.mxu0 0.0
        %2978 = vmatprep.subr.mxu0 0.0
        %2979 = vmatpush2.xpose.msra.mxu0 0.0
        %2980 = vmatprep.subr.mxu0 0.0
        %2981 = vmatpush2.xpose.msra.mxu0 0.0
        %2982 = vmatprep.subr.mxu0 0.0
        %2983 = vmatpush2.xpose.msra.mxu0 0.0
        %2984 = vmatprep.subr.mxu0 0.0
        %2985 = vmatpush2.xpose.msra.mxu0 0.0
        %2986 = vmatprep.subr.mxu0 0.0
        %2987 = vmatpush2.xpose.msra.mxu0 0.0
        %2988 = vmatprep.mubr.f32.mxu0 0.0
        %2989 = vmatmul.mubr.f32.gmra.mxu0 %v2922
        %v2990 = vpop.f32.mrf.mxu0
        %v2991 = vadd.f32 0.0, %v2990
        %v2992 = vpop.f32.mrf.mxu0
        %2993 = vdwg.mxu0
        %v2994 = vmul.f32 %v2991, 0.35355338
        %v2995 = vadd.f32 %v2994, %v887
        %v2996 = vsel %vm2511, %v2995, -inf
        %2997 = vmax.xlane.f32.xlu0 %v2996
        %v2998 = vpop.xlane.xlu0 %2997
        %v2999 = vsub.f32 %v2995, %v2998
        %v3000 = vmul.f32 %v2999, 1.442695
        %v3001 = vpow.pop %v3000
        %v3002 = vsel %vm2511, %v3001, 0.0
        %3003 = vadd.xlane.f32.xlu0 %v3002
        %v3004 = vpop.xlane.xlu0 %3003
        %v3005 = vrcp.pop %v3004
        %v3006 = vmul.f32 %v3001, %v3005
        %v3007 = vmul.f32 %v2427, %v869
        %v3009 = vsel %vm2511, %v3006, 0
        %3011 = vmatprep.subr.mxu0 0.0
        %3012 = vmatpush1.msra.mxu0 0.0
        %3013 = vmatprep.subr.mxu0 0.0
        %3014 = vmatpush1.msra.mxu0 0.0
        %3015 = vmatprep.subr.mxu0 0.0
        %3016 = vmatpush1.msra.mxu0 0.0
        %3017 = vmatprep.subr.mxu0 0.0
        %3018 = vmatpush1.msra.mxu0 0.0
        %3019 = vmatprep.subr.mxu0 0.0
        %3020 = vmatpush1.msra.mxu0 0.0
        %3021 = vmatprep.subr.mxu0 0.0
        %3022 = vmatpush1.msra.mxu0 0.0
        %3023 = vmatprep.subr.mxu0 0.0
        %3024 = vmatpush1.msra.mxu0 0.0
        %3025 = vmatprep.subr.mxu0 0.0
        %3026 = vmatpush1.msra.mxu0 0.0
        %3027 = vmatprep.subr.mxu0 0.0
        %3028 = vmatpush1.msra.mxu0 0.0
        %3029 = vmatprep.subr.mxu0 0.0
        %3030 = vmatpush1.msra.mxu0 0.0
        %3031 = vmatprep.subr.mxu0 0.0
        %3032 = vmatpush1.msra.mxu0 0.0
        %3033 = vmatprep.subr.mxu0 0.0
        %3034 = vmatpush1.msra.mxu0 0.0
        %3035 = vmatprep.subr.mxu0 0.0
        %3036 = vmatpush1.msra.mxu0 0.0
        %3037 = vmatprep.subr.mxu0 0.0
        %3038 = vmatpush1.msra.mxu0 0.0
        %3039 = vmatprep.subr.mxu0 0.0
        %3040 = vmatpush1.msra.mxu0 0.0
        %3041 = vmatprep.subr.mxu0 0.0
        %3042 = vmatpush1.msra.mxu0 %v3007
        %3043 = vmatprep.subr.mxu0 0.0
        %3044 = vmatpush2.msra.mxu0 0.0
        %3045 = vmatprep.subr.mxu0 0.0
        %3046 = vmatpush2.msra.mxu0 0.0
        %3047 = vmatprep.subr.mxu0 0.0
        %3048 = vmatpush2.msra.mxu0 0.0
        %3049 = vmatprep.subr.mxu0 0.0
        %3050 = vmatpush2.msra.mxu0 0.0
        %3051 = vmatprep.subr.mxu0 0.0
        %3052 = vmatpush2.msra.mxu0 0.0
        %3053 = vmatprep.subr.mxu0 0.0
        %3054 = vmatpush2.msra.mxu0 0.0
        %3055 = vmatprep.subr.mxu0 0.0
        %3056 = vmatpush2.msra.mxu0 0.0
        %3057 = vmatprep.subr.mxu0 0.0
        %3058 = vmatpush2.msra.mxu0 0.0
        %3059 = vmatprep.subr.mxu0 0.0
        %3060 = vmatpush2.msra.mxu0 0.0
        %3061 = vmatprep.subr.mxu0 0.0
        %3062 = vmatpush2.msra.mxu0 0.0
        %3063 = vmatprep.subr.mxu0 0.0
        %3064 = vmatpush2.msra.mxu0 0.0
        %3065 = vmatprep.subr.mxu0 0.0
        %3066 = vmatpush2.msra.mxu0 0.0
        %3067 = vmatprep.subr.mxu0 0.0
        %3068 = vmatpush2.msra.mxu0 0.0
        %3069 = vmatprep.subr.mxu0 0.0
        %3070 = vmatpush2.msra.mxu0 0.0
        %3071 = vmatprep.subr.mxu0 0.0
        %3072 = vmatpush2.msra.mxu0 0.0
        %3073 = vmatprep.subr.mxu0 0.0
        %3074 = vmatpush2.msra.mxu0 0.0
        %3075 = vmatprep.mubr.f32.mxu0 0.0
        %3076 = vmatmul.mubr.f32.gmra.mxu0 %v3009
        %v3077 = vpop.f32.mrf.mxu0
        %v3078 = vadd.f32 0.0, %v3077
        %v3079 = vpop.f32.mrf.mxu0
        %3080 = vdwg.mxu0
        %v3081 = vadd.f32 %v2919, %v3078
        %v3082 = vpack.c.bf16 %v3081, %v3081
        %v3083 = vlaneseq
        %v3084 = vshrl.u32 %v3083, 7
        %v3085 = vsub.s32 3, %v3084
        %v3086 = vrot.slane %v2259, %v3085
        %v3091 = vunpack.c.l.b16 %v2255
        %v3092 = vunpack.c.l.b16 %v2256
        %v3093 = vunpack.c.l.b16 %v2257
        %v3094 = vunpack.c.l.b16 %v2258
        %v3095 = vpack.c.b16 %v3092, %v3091
        %v3096 = vpack.c.b16 %v3094, %v3093
        %v3100 = vsel %vm892, %v3082, 0
        %3102 = vmatprep.subr.bf16.mxu0 0
        %3103 = vmatpush1.bf16.msra.mxu0 0
        %3104 = vmatprep.subr.bf16.mxu0 0
        %3105 = vmatpush1.bf16.msra.mxu0 0
        %3106 = vmatprep.subr.bf16.mxu0 0
        %3107 = vmatpush1.bf16.msra.mxu0 0
        %3108 = vmatprep.subr.bf16.mxu0 0
        %3109 = vmatpush1.bf16.msra.mxu0 0
        %3110 = vmatprep.subr.bf16.mxu0 0
        %3111 = vmatpush1.bf16.msra.mxu0 0
        %3112 = vmatprep.subr.bf16.mxu0 0
        %3113 = vmatpush1.bf16.msra.mxu0 0
        %3114 = vmatprep.subr.bf16.mxu0 0
        %3115 = vmatpush1.bf16.msra.mxu0 %v3096
        %3116 = vmatprep.subr.bf16.mxu0 0
        %3117 = vmatpush1.bf16.msra.mxu0 %v3095
        %3118 = vmatprep.subr.bf16.mxu0 0
        %3119 = vmatpush2.bf16.msra.mxu0 0
        %3120 = vmatprep.subr.bf16.mxu0 0
        %3121 = vmatpush2.bf16.msra.mxu0 0
        %3122 = vmatprep.subr.bf16.mxu0 0
        %3123 = vmatpush2.bf16.msra.mxu0 0
        %3124 = vmatprep.subr.bf16.mxu0 0
        %3125 = vmatpush2.bf16.msra.mxu0 0
        %3126 = vmatprep.subr.bf16.mxu0 0
        %3127 = vmatpush2.bf16.msra.mxu0 0
        %3128 = vmatprep.subr.bf16.mxu0 0
        %3129 = vmatpush2.bf16.msra.mxu0 0
        %3130 = vmatprep.subr.bf16.mxu0 0
        %3131 = vmatpush2.bf16.msra.mxu0 0
        %3132 = vmatprep.subr.bf16.mxu0 0
        %3133 = vmatpush2.bf16.msra.mxu0 0
        %3134 = vmatprep.mubr.bf16.mxu0 0
        %3135 = vmatmul.mubr.bf16.gmra.mxu0 %v3100
        %v3136 = vpop.f32.mrf.mxu0
        %v3137 = vadd.f32 %v3086, %v3136
        %v3138 = vpop.f32.mrf.mxu0
        %v3139 = vpop.f32.mrf.mxu0
        %v3140 = vpop.f32.mrf.mxu0
        %3141 = vdwg.mxu0
        %v3142 = vadd.f32 %v2242, %v3137
        %v3143 = vsel %vm892, %v3142, 0.0
        %3144 = vadd.xlane.f32.xlu0 %v3143
        %v3145 = vpop.xlane.xlu0 %3144
        %v3146 = vmul.f32 %v3145, %v899
        %v3147 = vsub.f32 %v3142, %v3146
        %v3148 = vmul.f32 %v3147, %v3147
        %v3149 = vsel %vm892, %v3148, 0.0
        %3150 = vadd.xlane.f32.xlu0 %v3149
        %v3151 = vpop.xlane.xlu0 %3150
        %v3152 = vmul.f32 %v3151, %v899
        %v3153 = vadd.f32 %v3152, 1e-12
        %v3154 = vrsqrt.pop %v3153
        %v3155 = vmul.f32 %v3147, %v3154
        %v3156 = vlaneseq
        %v3157 = vshrl.u32 %v3156, 7
        %v3158 = vsub.s32 4, %v3157
        %v3159 = vrot.slane %v2259, %v3158
        %v3160 = vmul.f32 %v3155, %v3159
        %v3161 = vlaneseq
        %v3162 = vshrl.u32 %v3161, 7
        %v3163 = vsub.s32 5, %v3162
        %v3164 = vrot.slane %v2259, %v3163
        %v3165 = vadd.f32 %v3160, %v3164
        %v3166 = vld [vmem:[#allocation14] sm:$0xf]
        %v3167 = vld [vmem:[#allocation14 + $0x4] sm:$0xf]
        %v3168 = vld [vmem:[#allocation14 + $0x8] sm:$0xf]
        %v3169 = vld [vmem:[#allocation14 + $0xc] sm:$0xf]
        %v3170 = vld [vmem:[#allocation14 + $0x10] sm:$0xf]
        %v3171 = vld [vmem:[#allocation14 + $0x14] sm:$0xf]
        %v3172 = vld [vmem:[#allocation14 + $0x18] sm:$0xf]
        %v3173 = vld [vmem:[#allocation14 + $0x1c] sm:$0xf]
        %v3174 = vld [vmem:[#allocation14 + $0x20] sm:$0xf]
        %v3175 = vld [vmem:[#allocation14 + $0x24] sm:$0xf]
        %v3176 = vld [vmem:[#allocation14 + $0x28] sm:$0xf]
        %v3177 = vld [vmem:[#allocation14 + $0x2c] sm:$0xf]
        %v3178 = vld [vmem:[#allocation14 + $0x30] sm:$0xf]
        %v3179 = vld [vmem:[#allocation14 + $0x34] sm:$0xf]
        %v3180 = vld [vmem:[#allocation14 + $0x38] sm:$0xf]
        %v3181 = vld [vmem:[#allocation14 + $0x3c] sm:$0xf]
        %v3182 = vld [vmem:[%s14] sm:$0x3f]
        %v3183 = vpack.c.bf16 %v3165, %v3165
        %v3184 = vpack.c.bf16 %v2218, %v2217
        %v3185 = vlaneseq
        %v3186 = vshrl.u32 %v3185, 7
        %v3187 = vsub.s32 0, %v3186
        %v3188 = vrot.slane %v3182, %v3187
        %v3193 = vunpack.c.l.b16 %v3166
        %v3194 = vunpack.c.l.b16 %v3167
        %v3195 = vunpack.c.l.b16 %v3168
        %v3196 = vunpack.c.l.b16 %v3169
        %v3197 = vpack.c.b16 %v3194, %v3193
        %v3198 = vpack.c.b16 %v3196, %v3195
        %v3202 = vsel %vm892, %v3183, 0
        %3204 = vmatprep.subr.bf16.mxu0 0
        %3205 = vmatpush1.bf16.msra.mxu0 0
        %3206 = vmatprep.subr.bf16.mxu0 0
        %3207 = vmatpush1.bf16.msra.mxu0 0
        %3208 = vmatprep.subr.bf16.mxu0 0
        %3209 = vmatpush1.bf16.msra.mxu0 0
        %3210 = vmatprep.subr.bf16.mxu0 0
        %3211 = vmatpush1.bf16.msra.mxu0 0
        %3212 = vmatprep.subr.bf16.mxu0 0
        %3213 = vmatpush1.bf16.msra.mxu0 0
        %3214 = vmatprep.subr.bf16.mxu0 0
        %3215 = vmatpush1.bf16.msra.mxu0 0
        %3216 = vmatprep.subr.bf16.mxu0 0
        %3217 = vmatpush1.bf16.msra.mxu0 %v3198
        %3218 = vmatprep.subr.bf16.mxu0 0
        %3219 = vmatpush1.bf16.msra.mxu0 %v3197
        %3220 = vmatprep.subr.bf16.mxu0 0
        %3221 = vmatpush2.bf16.msra.mxu0 0
        %3222 = vmatprep.subr.bf16.mxu0 0
        %3223 = vmatpush2.bf16.msra.mxu0 0
        %3224 = vmatprep.subr.bf16.mxu0 0
        %3225 = vmatpush2.bf16.msra.mxu0 0
        %3226 = vmatprep.subr.bf16.mxu0 0
        %3227 = vmatpush2.bf16.msra.mxu0 0
        %3228 = vmatprep.subr.bf16.mxu0 0
        %3229 = vmatpush2.bf16.msra.mxu0 0
        %3230 = vmatprep.subr.bf16.mxu0 0
        %3231 = vmatpush2.bf16.msra.mxu0 0
        %3232 = vmatprep.subr.bf16.mxu0 0
        %3233 = vmatpush2.bf16.msra.mxu0 0
        %3234 = vmatprep.subr.bf16.mxu0 0
        %3235 = vmatpush2.bf16.msra.mxu0 0
        %3236 = vmatprep.mubr.bf16.mxu0 0
        %3237 = vmatmul.mubr.bf16.gmra.mxu0 %v3202
        %v3238 = vpop.f32.mrf.mxu0
        %v3239 = vadd.f32 %v3188, %v3238
        %v3240 = vpop.f32.mrf.mxu0
        %v3241 = vpop.f32.mrf.mxu0
        %v3242 = vpop.f32.mrf.mxu0
        %3243 = vdwg.mxu0
        %v3244 = vlaneseq
        %v3245 = vshrl.u32 %v3244, 7
        %v3246 = vsub.s32 1, %v3245
        %v3247 = vrot.slane %v3182, %v3246
        %v3252 = vunpack.c.l.b16 %v3170
        %v3253 = vunpack.c.l.b16 %v3171
        %v3254 = vunpack.c.l.b16 %v3172
        %v3255 = vunpack.c.l.b16 %v3173
        %v3256 = vpack.c.b16 %v3253, %v3252
        %v3257 = vpack.c.b16 %v3255, %v3254
        %v3261 = vsel %vm892, %v3184, 0
        %3263 = vmatprep.subr.bf16.mxu0 0
        %3264 = vmatpush1.bf16.msra.mxu0 0
        %3265 = vmatprep.subr.bf16.mxu0 0
        %3266 = vmatpush1.bf16.msra.mxu0 0
        %3267 = vmatprep.subr.bf16.mxu0 0
        %3268 = vmatpush1.bf16.msra.mxu0 0
        %3269 = vmatprep.subr.bf16.mxu0 0
        %3270 = vmatpush1.bf16.msra.mxu0 0
        %3271 = vmatprep.subr.bf16.mxu0 0
        %3272 = vmatpush1.bf16.msra.mxu0 0
        %3273 = vmatprep.subr.bf16.mxu0 0
        %3274 = vmatpush1.bf16.msra.mxu0 0
        %3275 = vmatprep.subr.bf16.mxu0 0
        %3276 = vmatpush1.bf16.msra.mxu0 %v3257
        %3277 = vmatprep.subr.bf16.mxu0 0
        %3278 = vmatpush1.bf16.msra.mxu0 %v3256
        %3279 = vmatprep.subr.bf16.mxu0 0
        %3280 = vmatpush2.bf16.msra.mxu0 0
        %3281 = vmatprep.subr.bf16.mxu0 0
        %3282 = vmatpush2.bf16.msra.mxu0 0
        %3283 = vmatprep.subr.bf16.mxu0 0
        %3284 = vmatpush2.bf16.msra.mxu0 0
        %3285 = vmatprep.subr.bf16.mxu0 0
        %3286 = vmatpush2.bf16.msra.mxu0 0
        %3287 = vmatprep.subr.bf16.mxu0 0
        %3288 = vmatpush2.bf16.msra.mxu0 0
        %3289 = vmatprep.subr.bf16.mxu0 0
        %3290 = vmatpush2.bf16.msra.mxu0 0
        %3291 = vmatprep.subr.bf16.mxu0 0
        %3292 = vmatpush2.bf16.msra.mxu0 0
        %3293 = vmatprep.subr.bf16.mxu0 0
        %3294 = vmatpush2.bf16.msra.mxu0 0
        %3295 = vmatprep.mubr.bf16.mxu0 0
        %3296 = vmatmul.mubr.bf16.gmra.mxu0 %v3261
        %v3297 = vpop.f32.mrf.mxu0
        %v3298 = vadd.f32 %v3247, %v3297
        %v3299 = vpop.f32.mrf.mxu0
        %v3300 = vpop.f32.mrf.mxu0
        %v3301 = vadd.f32 %v3247, %v3300
        %v3302 = vpop.f32.mrf.mxu0
        %3303 = vdwg.mxu0
        %v3304 = vlaneseq
        %v3305 = vshrl.u32 %v3304, 7
        %v3306 = vsub.s32 2, %v3305
        %v3307 = vrot.slane %v3182, %v3306
        %v3312 = vunpack.c.l.b16 %v3174
        %v3313 = vunpack.c.l.b16 %v3175
        %v3314 = vunpack.c.l.b16 %v3176
        %v3315 = vunpack.c.l.b16 %v3177
        %v3316 = vpack.c.b16 %v3313, %v3312
        %v3317 = vpack.c.b16 %v3315, %v3314
        %3320 = vmatprep.subr.bf16.mxu0 0
        %3321 = vmatpush1.bf16.msra.mxu0 0
        %3322 = vmatprep.subr.bf16.mxu0 0
        %3323 = vmatpush1.bf16.msra.mxu0 0
        %3324 = vmatprep.subr.bf16.mxu0 0
        %3325 = vmatpush1.bf16.msra.mxu0 0
        %3326 = vmatprep.subr.bf16.mxu0 0
        %3327 = vmatpush1.bf16.msra.mxu0 0
        %3328 = vmatprep.subr.bf16.mxu0 0
        %3329 = vmatpush1.bf16.msra.mxu0 0
        %3330 = vmatprep.subr.bf16.mxu0 0
        %3331 = vmatpush1.bf16.msra.mxu0 0
        %3332 = vmatprep.subr.bf16.mxu0 0
        %3333 = vmatpush1.bf16.msra.mxu0 %v3317
        %3334 = vmatprep.subr.bf16.mxu0 0
        %3335 = vmatpush1.bf16.msra.mxu0 %v3316
        %3336 = vmatprep.subr.bf16.mxu0 0
        %3337 = vmatpush2.bf16.msra.mxu0 0
        %3338 = vmatprep.subr.bf16.mxu0 0
        %3339 = vmatpush2.bf16.msra.mxu0 0
        %3340 = vmatprep.subr.bf16.mxu0 0
        %3341 = vmatpush2.bf16.msra.mxu0 0
        %3342 = vmatprep.subr.bf16.mxu0 0
        %3343 = vmatpush2.bf16.msra.mxu0 0
        %3344 = vmatprep.subr.bf16.mxu0 0
        %3345 = vmatpush2.bf16.msra.mxu0 0
        %3346 = vmatprep.subr.bf16.mxu0 0
        %3347 = vmatpush2.bf16.msra.mxu0 0
        %3348 = vmatprep.subr.bf16.mxu0 0
        %3349 = vmatpush2.bf16.msra.mxu0 0
        %3350 = vmatprep.subr.bf16.mxu0 0
        %3351 = vmatpush2.bf16.msra.mxu0 0
        %3352 = vmatprep.mubr.bf16.mxu0 0
        %3353 = vmatmul.mubr.bf16.gmra.mxu0 %v3261
        %v3354 = vpop.f32.mrf.mxu0
        %v3355 = vadd.f32 %v3307, %v3354
        %v3356 = vpop.f32.mrf.mxu0
        %v3357 = vpop.f32.mrf.mxu0
        %v3358 = vadd.f32 %v3307, %v3357
        %v3359 = vpop.f32.mrf.mxu0
        %3360 = vdwg.mxu0
        %v3361 = vmul.f32 %v3239, %v854
        %v3363 = vsel %vm892, %v3361, 0
        %v3366 = vsel %vm892, %v3298, 0
        %v3369 = vsel %vm892, %v3301, 0
        %3371 = vmatprep.subr.mxu0 0.0
        %3372 = vmatpush1.xpose.msra.mxu0 0.0
        %3373 = vmatprep.subr.mxu0 0.0
        %3374 = vmatpush1.xpose.msra.mxu0 0.0
        %3375 = vmatprep.subr.mxu0 0.0
        %3376 = vmatpush1.xpose.msra.mxu0 0.0
        %3377 = vmatprep.subr.mxu0 0.0
        %3378 = vmatpush1.xpose.msra.mxu0 0.0
        %3379 = vmatprep.subr.mxu0 0.0
        %3380 = vmatpush1.xpose.msra.mxu0 0.0
        %3381 = vmatprep.subr.mxu0 0.0
        %3382 = vmatpush1.xpose.msra.mxu0 0.0
        %3383 = vmatprep.subr.mxu0 0.0
        %3384 = vmatpush1.xpose.msra.mxu0 0.0
        %3385 = vmatprep.subr.mxu0 0.0
        %3386 = vmatpush1.xpose.msra.mxu0 0.0
        %3387 = vmatprep.subr.mxu0 0.0
        %3388 = vmatpush1.xpose.msra.mxu0 0.0
        %3389 = vmatprep.subr.mxu0 0.0
        %3390 = vmatpush1.xpose.msra.mxu0 0.0
        %3391 = vmatprep.subr.mxu0 0.0
        %3392 = vmatpush1.xpose.msra.mxu0 0.0
        %3393 = vmatprep.subr.mxu0 0.0
        %3394 = vmatpush1.xpose.msra.mxu0 0.0
        %3395 = vmatprep.subr.mxu0 0.0
        %3396 = vmatpush1.xpose.msra.mxu0 0.0
        %3397 = vmatprep.subr.mxu0 0.0
        %3398 = vmatpush1.xpose.msra.mxu0 0.0
        %3399 = vmatprep.subr.mxu0 0.0
        %3400 = vmatpush1.xpose.msra.mxu0 %v3369
        %3401 = vmatprep.subr.mxu0 0.0
        %3402 = vmatpush1.xpose.msra.mxu0 %v3366
        %3403 = vmatprep.subr.mxu0 0.0
        %3404 = vmatpush2.xpose.msra.mxu0 0.0
        %3405 = vmatprep.subr.mxu0 0.0
        %3406 = vmatpush2.xpose.msra.mxu0 0.0
        %3407 = vmatprep.subr.mxu0 0.0
        %3408 = vmatpush2.xpose.msra.mxu0 0.0
        %3409 = vmatprep.subr.mxu0 0.0
        %3410 = vmatpush2.xpose.msra.mxu0 0.0
        %3411 = vmatprep.subr.mxu0 0.0
        %3412 = vmatpush2.xpose.msra.mxu0 0.0
        %3413 = vmatprep.subr.mxu0 0.0
        %3414 = vmatpush2.xpose.msra.mxu0 0.0
        %3415 = vmatprep.subr.mxu0 0.0
        %3416 = vmatpush2.xpose.msra.mxu0 0.0
        %3417 = vmatprep.subr.mxu0 0.0
        %3418 = vmatpush2.xpose.msra.mxu0 0.0
        %3419 = vmatprep.subr.mxu0 0.0
        %3420 = vmatpush2.xpose.msra.mxu0 0.0
        %3421 = vmatprep.subr.mxu0 0.0
        %3422 = vmatpush2.xpose.msra.mxu0 0.0
        %3423 = vmatprep.subr.mxu0 0.0
        %3424 = vmatpush2.xpose.msra.mxu0 0.0
        %3425 = vmatprep.subr.mxu0 0.0
        %3426 = vmatpush2.xpose.msra.mxu0 0.0
        %3427 = vmatprep.subr.mxu0 0.0
        %3428 = vmatpush2.xpose.msra.mxu0 0.0
        %3429 = vmatprep.subr.mxu0 0.0
        %3430 = vmatpush2.xpose.msra.mxu0 0.0
        %3431 = vmatprep.subr.mxu0 0.0
        %3432 = vmatpush2.xpose.msra.mxu0 0.0
        %3433 = vmatprep.subr.mxu0 0.0
        %3434 = vmatpush2.xpose.msra.mxu0 0.0
        %3435 = vmatprep.mubr.f32.mxu0 0.0
        %3436 = vmatmul.mubr.f32.gmra.mxu0 %v3363
        %v3437 = vpop.f32.mrf.mxu0
        %v3438 = vadd.f32 0.0, %v3437
        %v3439 = vpop.f32.mrf.mxu0
        %3440 = vdwg.mxu0
        %v3441 = vmul.f32 %v3438, 0.35355338
        %v3442 = vadd.f32 %v3441, %v1219
        %v3443 = vsel %vm1223, %v3442, -inf
        %3444 = vmax.xlane.f32.xlu0 %v3443
        %v3445 = vpop.xlane.xlu0 %3444
        %v3446 = vsub.f32 %v3442, %v3445
        %v3447 = vmul.f32 %v3446, 1.442695
        %v3448 = vpow.pop %v3447
        %v3449 = vsel %vm1223, %v3448, 0.0
        %3450 = vadd.xlane.f32.xlu0 %v3449
        %v3451 = vpop.xlane.xlu0 %3450
        %v3452 = vrcp.pop %v3451
        %v3453 = vmul.f32 %v3448, %v3452
        %v3454 = vmul.f32 %v3355, %v854
        %v3455 = vmul.f32 %v3358, %v854
        %v3456 = vmul.f32 %v3239, %v859
        %v3458 = vsel %vm892, %v3456, 0
        %3460 = vmatprep.subr.mxu0 0.0
        %3461 = vmatpush1.xpose.msra.mxu0 0.0
        %3462 = vmatprep.subr.mxu0 0.0
        %3463 = vmatpush1.xpose.msra.mxu0 0.0
        %3464 = vmatprep.subr.mxu0 0.0
        %3465 = vmatpush1.xpose.msra.mxu0 0.0
        %3466 = vmatprep.subr.mxu0 0.0
        %3467 = vmatpush1.xpose.msra.mxu0 0.0
        %3468 = vmatprep.subr.mxu0 0.0
        %3469 = vmatpush1.xpose.msra.mxu0 0.0
        %3470 = vmatprep.subr.mxu0 0.0
        %3471 = vmatpush1.xpose.msra.mxu0 0.0
        %3472 = vmatprep.subr.mxu0 0.0
        %3473 = vmatpush1.xpose.msra.mxu0 0.0
        %3474 = vmatprep.subr.mxu0 0.0
        %3475 = vmatpush1.xpose.msra.mxu0 0.0
        %3476 = vmatprep.subr.mxu0 0.0
        %3477 = vmatpush1.xpose.msra.mxu0 0.0
        %3478 = vmatprep.subr.mxu0 0.0
        %3479 = vmatpush1.xpose.msra.mxu0 0.0
        %3480 = vmatprep.subr.mxu0 0.0
        %3481 = vmatpush1.xpose.msra.mxu0 0.0
        %3482 = vmatprep.subr.mxu0 0.0
        %3483 = vmatpush1.xpose.msra.mxu0 0.0
        %3484 = vmatprep.subr.mxu0 0.0
        %3485 = vmatpush1.xpose.msra.mxu0 0.0
        %3486 = vmatprep.subr.mxu0 0.0
        %3487 = vmatpush1.xpose.msra.mxu0 0.0
        %3488 = vmatprep.subr.mxu0 0.0
        %3489 = vmatpush1.xpose.msra.mxu0 %v3369
        %3490 = vmatprep.subr.mxu0 0.0
        %3491 = vmatpush1.xpose.msra.mxu0 %v3366
        %3492 = vmatprep.subr.mxu0 0.0
        %3493 = vmatpush2.xpose.msra.mxu0 0.0
        %3494 = vmatprep.subr.mxu0 0.0
        %3495 = vmatpush2.xpose.msra.mxu0 0.0
        %3496 = vmatprep.subr.mxu0 0.0
        %3497 = vmatpush2.xpose.msra.mxu0 0.0
        %3498 = vmatprep.subr.mxu0 0.0
        %3499 = vmatpush2.xpose.msra.mxu0 0.0
        %3500 = vmatprep.subr.mxu0 0.0
        %3501 = vmatpush2.xpose.msra.mxu0 0.0
        %3502 = vmatprep.subr.mxu0 0.0
        %3503 = vmatpush2.xpose.msra.mxu0 0.0
        %3504 = vmatprep.subr.mxu0 0.0
        %3505 = vmatpush2.xpose.msra.mxu0 0.0
        %3506 = vmatprep.subr.mxu0 0.0
        %3507 = vmatpush2.xpose.msra.mxu0 0.0
        %3508 = vmatprep.subr.mxu0 0.0
        %3509 = vmatpush2.xpose.msra.mxu0 0.0
        %3510 = vmatprep.subr.mxu0 0.0
        %3511 = vmatpush2.xpose.msra.mxu0 0.0
        %3512 = vmatprep.subr.mxu0 0.0
        %3513 = vmatpush2.xpose.msra.mxu0 0.0
        %3514 = vmatprep.subr.mxu0 0.0
        %3515 = vmatpush2.xpose.msra.mxu0 0.0
        %3516 = vmatprep.subr.mxu0 0.0
        %3517 = vmatpush2.xpose.msra.mxu0 0.0
        %3518 = vmatprep.subr.mxu0 0.0
        %3519 = vmatpush2.xpose.msra.mxu0 0.0
        %3520 = vmatprep.subr.mxu0 0.0
        %3521 = vmatpush2.xpose.msra.mxu0 0.0
        %3522 = vmatprep.subr.mxu0 0.0
        %3523 = vmatpush2.xpose.msra.mxu0 0.0
        %3524 = vmatprep.mubr.f32.mxu0 0.0
        %3525 = vmatmul.mubr.f32.gmra.mxu0 %v3458
        %v3526 = vpop.f32.mrf.mxu0
        %v3527 = vadd.f32 0.0, %v3526
        %v3528 = vpop.f32.mrf.mxu0
        %3529 = vdwg.mxu0
        %v3530 = vmul.f32 %v3527, 0.35355338
        %v3531 = vadd.f32 %v3530, %v1219
        %v3532 = vsel %vm1223, %v3531, -inf
        %3533 = vmax.xlane.f32.xlu0 %v3532
        %v3534 = vpop.xlane.xlu0 %3533
        %v3535 = vsub.f32 %v3531, %v3534
        %v3536 = vmul.f32 %v3535, 1.442695
        %v3537 = vpow.pop %v3536
        %v3538 = vsel %vm1223, %v3537, 0.0
        %3539 = vadd.xlane.f32.xlu0 %v3538
        %v3540 = vpop.xlane.xlu0 %3539
        %v3541 = vrcp.pop %v3540
        %v3542 = vmul.f32 %v3537, %v3541
        %v3543 = vmul.f32 %v3355, %v859
        %v3544 = vmul.f32 %v3358, %v859
        %v3546 = vsel %vm1223, %v3542, 0
        %3548 = vmatprep.subr.mxu0 0.0
        %3549 = vmatpush1.msra.mxu0 0.0
        %3550 = vmatprep.subr.mxu0 0.0
        %3551 = vmatpush1.msra.mxu0 0.0
        %3552 = vmatprep.subr.mxu0 0.0
        %3553 = vmatpush1.msra.mxu0 0.0
        %3554 = vmatprep.subr.mxu0 0.0
        %3555 = vmatpush1.msra.mxu0 0.0
        %3556 = vmatprep.subr.mxu0 0.0
        %3557 = vmatpush1.msra.mxu0 0.0
        %3558 = vmatprep.subr.mxu0 0.0
        %3559 = vmatpush1.msra.mxu0 0.0
        %3560 = vmatprep.subr.mxu0 0.0
        %3561 = vmatpush1.msra.mxu0 0.0
        %3562 = vmatprep.subr.mxu0 0.0
        %3563 = vmatpush1.msra.mxu0 0.0
        %3564 = vmatprep.subr.mxu0 0.0
        %3565 = vmatpush1.msra.mxu0 0.0
        %3566 = vmatprep.subr.mxu0 0.0
        %3567 = vmatpush1.msra.mxu0 0.0
        %3568 = vmatprep.subr.mxu0 0.0
        %3569 = vmatpush1.msra.mxu0 0.0
        %3570 = vmatprep.subr.mxu0 0.0
        %3571 = vmatpush1.msra.mxu0 0.0
        %3572 = vmatprep.subr.mxu0 0.0
        %3573 = vmatpush1.msra.mxu0 0.0
        %3574 = vmatprep.subr.mxu0 0.0
        %3575 = vmatpush1.msra.mxu0 0.0
        %3576 = vmatprep.subr.mxu0 0.0
        %3577 = vmatpush1.msra.mxu0 %v3544
        %3578 = vmatprep.subr.mxu0 0.0
        %3579 = vmatpush1.msra.mxu0 %v3543
        %3580 = vmatprep.subr.mxu0 0.0
        %3581 = vmatpush2.msra.mxu0 0.0
        %3582 = vmatprep.subr.mxu0 0.0
        %3583 = vmatpush2.msra.mxu0 0.0
        %3584 = vmatprep.subr.mxu0 0.0
        %3585 = vmatpush2.msra.mxu0 0.0
        %3586 = vmatprep.subr.mxu0 0.0
        %3587 = vmatpush2.msra.mxu0 0.0
        %3588 = vmatprep.subr.mxu0 0.0
        %3589 = vmatpush2.msra.mxu0 0.0
        %3590 = vmatprep.subr.mxu0 0.0
        %3591 = vmatpush2.msra.mxu0 0.0
        %3592 = vmatprep.subr.mxu0 0.0
        %3593 = vmatpush2.msra.mxu0 0.0
        %3594 = vmatprep.subr.mxu0 0.0
        %3595 = vmatpush2.msra.mxu0 0.0
        %3596 = vmatprep.subr.mxu0 0.0
        %3597 = vmatpush2.msra.mxu0 0.0
        %3598 = vmatprep.subr.mxu0 0.0
        %3599 = vmatpush2.msra.mxu0 0.0
        %3600 = vmatprep.subr.mxu0 0.0
        %3601 = vmatpush2.msra.mxu0 0.0
        %3602 = vmatprep.subr.mxu0 0.0
        %3603 = vmatpush2.msra.mxu0 0.0
        %3604 = vmatprep.subr.mxu0 0.0
        %3605 = vmatpush2.msra.mxu0 0.0
        %3606 = vmatprep.subr.mxu0 0.0
        %3607 = vmatpush2.msra.mxu0 0.0
        %3608 = vmatprep.subr.mxu0 0.0
        %3609 = vmatpush2.msra.mxu0 0.0
        %3610 = vmatprep.subr.mxu0 0.0
        %3611 = vmatpush2.msra.mxu0 0.0
        %3612 = vmatprep.mubr.f32.mxu0 0.0
        %3613 = vmatmul.mubr.f32.gmra.mxu0 %v3546
        %v3614 = vpop.f32.mrf.mxu0
        %v3615 = vadd.f32 0.0, %v3614
        %v3616 = vpop.f32.mrf.mxu0
        %3617 = vdwg.mxu0
        %v3619 = vsel %vm1223, %v3453, 0
        %3621 = vmatprep.subr.mxu0 0.0
        %3622 = vmatpush1.msra.mxu0 0.0
        %3623 = vmatprep.subr.mxu0 0.0
        %3624 = vmatpush1.msra.mxu0 0.0
        %3625 = vmatprep.subr.mxu0 0.0
        %3626 = vmatpush1.msra.mxu0 0.0
        %3627 = vmatprep.subr.mxu0 0.0
        %3628 = vmatpush1.msra.mxu0 0.0
        %3629 = vmatprep.subr.mxu0 0.0
        %3630 = vmatpush1.msra.mxu0 0.0
        %3631 = vmatprep.subr.mxu0 0.0
        %3632 = vmatpush1.msra.mxu0 0.0
        %3633 = vmatprep.subr.mxu0 0.0
        %3634 = vmatpush1.msra.mxu0 0.0
        %3635 = vmatprep.subr.mxu0 0.0
        %3636 = vmatpush1.msra.mxu0 0.0
        %3637 = vmatprep.subr.mxu0 0.0
        %3638 = vmatpush1.msra.mxu0 0.0
        %3639 = vmatprep.subr.mxu0 0.0
        %3640 = vmatpush1.msra.mxu0 0.0
        %3641 = vmatprep.subr.mxu0 0.0
        %3642 = vmatpush1.msra.mxu0 0.0
        %3643 = vmatprep.subr.mxu0 0.0
        %3644 = vmatpush1.msra.mxu0 0.0
        %3645 = vmatprep.subr.mxu0 0.0
        %3646 = vmatpush1.msra.mxu0 0.0
        %3647 = vmatprep.subr.mxu0 0.0
        %3648 = vmatpush1.msra.mxu0 0.0
        %3649 = vmatprep.subr.mxu0 0.0
        %3650 = vmatpush1.msra.mxu0 %v3455
        %3651 = vmatprep.subr.mxu0 0.0
        %3652 = vmatpush1.msra.mxu0 %v3454
        %3653 = vmatprep.subr.mxu0 0.0
        %3654 = vmatpush2.msra.mxu0 0.0
        %3655 = vmatprep.subr.mxu0 0.0
        %3656 = vmatpush2.msra.mxu0 0.0
        %3657 = vmatprep.subr.mxu0 0.0
        %3658 = vmatpush2.msra.mxu0 0.0
        %3659 = vmatprep.subr.mxu0 0.0
        %3660 = vmatpush2.msra.mxu0 0.0
        %3661 = vmatprep.subr.mxu0 0.0
        %3662 = vmatpush2.msra.mxu0 0.0
        %3663 = vmatprep.subr.mxu0 0.0
        %3664 = vmatpush2.msra.mxu0 0.0
        %3665 = vmatprep.subr.mxu0 0.0
        %3666 = vmatpush2.msra.mxu0 0.0
        %3667 = vmatprep.subr.mxu0 0.0
        %3668 = vmatpush2.msra.mxu0 0.0
        %3669 = vmatprep.subr.mxu0 0.0
        %3670 = vmatpush2.msra.mxu0 0.0
        %3671 = vmatprep.subr.mxu0 0.0
        %3672 = vmatpush2.msra.mxu0 0.0
        %3673 = vmatprep.subr.mxu0 0.0
        %3674 = vmatpush2.msra.mxu0 0.0
        %3675 = vmatprep.subr.mxu0 0.0
        %3676 = vmatpush2.msra.mxu0 0.0
        %3677 = vmatprep.subr.mxu0 0.0
        %3678 = vmatpush2.msra.mxu0 0.0
        %3679 = vmatprep.subr.mxu0 0.0
        %3680 = vmatpush2.msra.mxu0 0.0
        %3681 = vmatprep.subr.mxu0 0.0
        %3682 = vmatpush2.msra.mxu0 0.0
        %3683 = vmatprep.subr.mxu0 0.0
        %3684 = vmatpush2.msra.mxu0 0.0
        %3685 = vmatprep.mubr.f32.mxu0 0.0
        %3686 = vmatmul.mubr.f32.gmra.mxu0 %v3619
        %v3687 = vpop.f32.mrf.mxu0
        %v3688 = vadd.f32 %v3615, %v3687
        %v3689 = vpop.f32.mrf.mxu0
        %3690 = vdwg.mxu0
        %v3691 = vmul.f32 %v3239, %v864
        %v3693 = vsel %vm892, %v3691, 0
        %3695 = vmatprep.subr.mxu0 0.0
        %3696 = vmatpush1.xpose.msra.mxu0 0.0
        %3697 = vmatprep.subr.mxu0 0.0
        %3698 = vmatpush1.xpose.msra.mxu0 0.0
        %3699 = vmatprep.subr.mxu0 0.0
        %3700 = vmatpush1.xpose.msra.mxu0 0.0
        %3701 = vmatprep.subr.mxu0 0.0
        %3702 = vmatpush1.xpose.msra.mxu0 0.0
        %3703 = vmatprep.subr.mxu0 0.0
        %3704 = vmatpush1.xpose.msra.mxu0 0.0
        %3705 = vmatprep.subr.mxu0 0.0
        %3706 = vmatpush1.xpose.msra.mxu0 0.0
        %3707 = vmatprep.subr.mxu0 0.0
        %3708 = vmatpush1.xpose.msra.mxu0 0.0
        %3709 = vmatprep.subr.mxu0 0.0
        %3710 = vmatpush1.xpose.msra.mxu0 0.0
        %3711 = vmatprep.subr.mxu0 0.0
        %3712 = vmatpush1.xpose.msra.mxu0 0.0
        %3713 = vmatprep.subr.mxu0 0.0
        %3714 = vmatpush1.xpose.msra.mxu0 0.0
        %3715 = vmatprep.subr.mxu0 0.0
        %3716 = vmatpush1.xpose.msra.mxu0 0.0
        %3717 = vmatprep.subr.mxu0 0.0
        %3718 = vmatpush1.xpose.msra.mxu0 0.0
        %3719 = vmatprep.subr.mxu0 0.0
        %3720 = vmatpush1.xpose.msra.mxu0 0.0
        %3721 = vmatprep.subr.mxu0 0.0
        %3722 = vmatpush1.xpose.msra.mxu0 0.0
        %3723 = vmatprep.subr.mxu0 0.0
        %3724 = vmatpush1.xpose.msra.mxu0 %v3369
        %3725 = vmatprep.subr.mxu0 0.0
        %3726 = vmatpush1.xpose.msra.mxu0 %v3366
        %3727 = vmatprep.subr.mxu0 0.0
        %3728 = vmatpush2.xpose.msra.mxu0 0.0
        %3729 = vmatprep.subr.mxu0 0.0
        %3730 = vmatpush2.xpose.msra.mxu0 0.0
        %3731 = vmatprep.subr.mxu0 0.0
        %3732 = vmatpush2.xpose.msra.mxu0 0.0
        %3733 = vmatprep.subr.mxu0 0.0
        %3734 = vmatpush2.xpose.msra.mxu0 0.0
        %3735 = vmatprep.subr.mxu0 0.0
        %3736 = vmatpush2.xpose.msra.mxu0 0.0
        %3737 = vmatprep.subr.mxu0 0.0
        %3738 = vmatpush2.xpose.msra.mxu0 0.0
        %3739 = vmatprep.subr.mxu0 0.0
        %3740 = vmatpush2.xpose.msra.mxu0 0.0
        %3741 = vmatprep.subr.mxu0 0.0
        %3742 = vmatpush2.xpose.msra.mxu0 0.0
        %3743 = vmatprep.subr.mxu0 0.0
        %3744 = vmatpush2.xpose.msra.mxu0 0.0
        %3745 = vmatprep.subr.mxu0 0.0
        %3746 = vmatpush2.xpose.msra.mxu0 0.0
        %3747 = vmatprep.subr.mxu0 0.0
        %3748 = vmatpush2.xpose.msra.mxu0 0.0
        %3749 = vmatprep.subr.mxu0 0.0
        %3750 = vmatpush2.xpose.msra.mxu0 0.0
        %3751 = vmatprep.subr.mxu0 0.0
        %3752 = vmatpush2.xpose.msra.mxu0 0.0
        %3753 = vmatprep.subr.mxu0 0.0
        %3754 = vmatpush2.xpose.msra.mxu0 0.0
        %3755 = vmatprep.subr.mxu0 0.0
        %3756 = vmatpush2.xpose.msra.mxu0 0.0
        %3757 = vmatprep.subr.mxu0 0.0
        %3758 = vmatpush2.xpose.msra.mxu0 0.0
        %3759 = vmatprep.mubr.f32.mxu0 0.0
        %3760 = vmatmul.mubr.f32.gmra.mxu0 %v3693
        %v3761 = vpop.f32.mrf.mxu0
        %v3762 = vadd.f32 0.0, %v3761
        %v3763 = vpop.f32.mrf.mxu0
        %3764 = vdwg.mxu0
        %v3765 = vmul.f32 %v3762, 0.35355338
        %v3766 = vadd.f32 %v3765, %v1219
        %v3767 = vsel %vm1223, %v3766, -inf
        %3768 = vmax.xlane.f32.xlu0 %v3767
        %v3769 = vpop.xlane.xlu0 %3768
        %v3770 = vsub.f32 %v3766, %v3769
        %v3771 = vmul.f32 %v3770, 1.442695
        %v3772 = vpow.pop %v3771
        %v3773 = vsel %vm1223, %v3772, 0.0
        %3774 = vadd.xlane.f32.xlu0 %v3773
        %v3775 = vpop.xlane.xlu0 %3774
        %v3776 = vrcp.pop %v3775
        %v3777 = vmul.f32 %v3772, %v3776
        %v3778 = vmul.f32 %v3355, %v864
        %v3779 = vmul.f32 %v3358, %v864
        %v3781 = vsel %vm1223, %v3777, 0
        %3783 = vmatprep.subr.mxu0 0.0
        %3784 = vmatpush1.msra.mxu0 0.0
        %3785 = vmatprep.subr.mxu0 0.0
        %3786 = vmatpush1.msra.mxu0 0.0
        %3787 = vmatprep.subr.mxu0 0.0
        %3788 = vmatpush1.msra.mxu0 0.0
        %3789 = vmatprep.subr.mxu0 0.0
        %3790 = vmatpush1.msra.mxu0 0.0
        %3791 = vmatprep.subr.mxu0 0.0
        %3792 = vmatpush1.msra.mxu0 0.0
        %3793 = vmatprep.subr.mxu0 0.0
        %3794 = vmatpush1.msra.mxu0 0.0
        %3795 = vmatprep.subr.mxu0 0.0
        %3796 = vmatpush1.msra.mxu0 0.0
        %3797 = vmatprep.subr.mxu0 0.0
        %3798 = vmatpush1.msra.mxu0 0.0
        %3799 = vmatprep.subr.mxu0 0.0
        %3800 = vmatpush1.msra.mxu0 0.0
        %3801 = vmatprep.subr.mxu0 0.0
        %3802 = vmatpush1.msra.mxu0 0.0
        %3803 = vmatprep.subr.mxu0 0.0
        %3804 = vmatpush1.msra.mxu0 0.0
        %3805 = vmatprep.subr.mxu0 0.0
        %3806 = vmatpush1.msra.mxu0 0.0
        %3807 = vmatprep.subr.mxu0 0.0
        %3808 = vmatpush1.msra.mxu0 0.0
        %3809 = vmatprep.subr.mxu0 0.0
        %3810 = vmatpush1.msra.mxu0 0.0
        %3811 = vmatprep.subr.mxu0 0.0
        %3812 = vmatpush1.msra.mxu0 %v3779
        %3813 = vmatprep.subr.mxu0 0.0
        %3814 = vmatpush1.msra.mxu0 %v3778
        %3815 = vmatprep.subr.mxu0 0.0
        %3816 = vmatpush2.msra.mxu0 0.0
        %3817 = vmatprep.subr.mxu0 0.0
        %3818 = vmatpush2.msra.mxu0 0.0
        %3819 = vmatprep.subr.mxu0 0.0
        %3820 = vmatpush2.msra.mxu0 0.0
        %3821 = vmatprep.subr.mxu0 0.0
        %3822 = vmatpush2.msra.mxu0 0.0
        %3823 = vmatprep.subr.mxu0 0.0
        %3824 = vmatpush2.msra.mxu0 0.0
        %3825 = vmatprep.subr.mxu0 0.0
        %3826 = vmatpush2.msra.mxu0 0.0
        %3827 = vmatprep.subr.mxu0 0.0
        %3828 = vmatpush2.msra.mxu0 0.0
        %3829 = vmatprep.subr.mxu0 0.0
        %3830 = vmatpush2.msra.mxu0 0.0
        %3831 = vmatprep.subr.mxu0 0.0
        %3832 = vmatpush2.msra.mxu0 0.0
        %3833 = vmatprep.subr.mxu0 0.0
        %3834 = vmatpush2.msra.mxu0 0.0
        %3835 = vmatprep.subr.mxu0 0.0
        %3836 = vmatpush2.msra.mxu0 0.0
        %3837 = vmatprep.subr.mxu0 0.0
        %3838 = vmatpush2.msra.mxu0 0.0
        %3839 = vmatprep.subr.mxu0 0.0
        %3840 = vmatpush2.msra.mxu0 0.0
        %3841 = vmatprep.subr.mxu0 0.0
        %3842 = vmatpush2.msra.mxu0 0.0
        %3843 = vmatprep.subr.mxu0 0.0
        %3844 = vmatpush2.msra.mxu0 0.0
        %3845 = vmatprep.subr.mxu0 0.0
        %3846 = vmatpush2.msra.mxu0 0.0
        %3847 = vmatprep.mubr.f32.mxu0 0.0
        %3848 = vmatmul.mubr.f32.gmra.mxu0 %v3781
        %v3849 = vpop.f32.mrf.mxu0
        %v3850 = vadd.f32 0.0, %v3849
        %v3851 = vpop.f32.mrf.mxu0
        %3852 = vdwg.mxu0
        %v3853 = vadd.f32 %v3688, %v3850
        %v3854 = vmul.f32 %v3239, %v869
        %v3856 = vsel %vm892, %v3854, 0
        %3858 = vmatprep.subr.mxu0 0.0
        %3859 = vmatpush1.xpose.msra.mxu0 0.0
        %3860 = vmatprep.subr.mxu0 0.0
        %3861 = vmatpush1.xpose.msra.mxu0 0.0
        %3862 = vmatprep.subr.mxu0 0.0
        %3863 = vmatpush1.xpose.msra.mxu0 0.0
        %3864 = vmatprep.subr.mxu0 0.0
        %3865 = vmatpush1.xpose.msra.mxu0 0.0
        %3866 = vmatprep.subr.mxu0 0.0
        %3867 = vmatpush1.xpose.msra.mxu0 0.0
        %3868 = vmatprep.subr.mxu0 0.0
        %3869 = vmatpush1.xpose.msra.mxu0 0.0
        %3870 = vmatprep.subr.mxu0 0.0
        %3871 = vmatpush1.xpose.msra.mxu0 0.0
        %3872 = vmatprep.subr.mxu0 0.0
        %3873 = vmatpush1.xpose.msra.mxu0 0.0
        %3874 = vmatprep.subr.mxu0 0.0
        %3875 = vmatpush1.xpose.msra.mxu0 0.0
        %3876 = vmatprep.subr.mxu0 0.0
        %3877 = vmatpush1.xpose.msra.mxu0 0.0
        %3878 = vmatprep.subr.mxu0 0.0
        %3879 = vmatpush1.xpose.msra.mxu0 0.0
        %3880 = vmatprep.subr.mxu0 0.0
        %3881 = vmatpush1.xpose.msra.mxu0 0.0
        %3882 = vmatprep.subr.mxu0 0.0
        %3883 = vmatpush1.xpose.msra.mxu0 0.0
        %3884 = vmatprep.subr.mxu0 0.0
        %3885 = vmatpush1.xpose.msra.mxu0 0.0
        %3886 = vmatprep.subr.mxu0 0.0
        %3887 = vmatpush1.xpose.msra.mxu0 %v3369
        %3888 = vmatprep.subr.mxu0 0.0
        %3889 = vmatpush1.xpose.msra.mxu0 %v3366
        %3890 = vmatprep.subr.mxu0 0.0
        %3891 = vmatpush2.xpose.msra.mxu0 0.0
        %3892 = vmatprep.subr.mxu0 0.0
        %3893 = vmatpush2.xpose.msra.mxu0 0.0
        %3894 = vmatprep.subr.mxu0 0.0
        %3895 = vmatpush2.xpose.msra.mxu0 0.0
        %3896 = vmatprep.subr.mxu0 0.0
        %3897 = vmatpush2.xpose.msra.mxu0 0.0
        %3898 = vmatprep.subr.mxu0 0.0
        %3899 = vmatpush2.xpose.msra.mxu0 0.0
        %3900 = vmatprep.subr.mxu0 0.0
        %3901 = vmatpush2.xpose.msra.mxu0 0.0
        %3902 = vmatprep.subr.mxu0 0.0
        %3903 = vmatpush2.xpose.msra.mxu0 0.0
        %3904 = vmatprep.subr.mxu0 0.0
        %3905 = vmatpush2.xpose.msra.mxu0 0.0
        %3906 = vmatprep.subr.mxu0 0.0
        %3907 = vmatpush2.xpose.msra.mxu0 0.0
        %3908 = vmatprep.subr.mxu0 0.0
        %3909 = vmatpush2.xpose.msra.mxu0 0.0
        %3910 = vmatprep.subr.mxu0 0.0
        %3911 = vmatpush2.xpose.msra.mxu0 0.0
        %3912 = vmatprep.subr.mxu0 0.0
        %3913 = vmatpush2.xpose.msra.mxu0 0.0
        %3914 = vmatprep.subr.mxu0 0.0
        %3915 = vmatpush2.xpose.msra.mxu0 0.0
        %3916 = vmatprep.subr.mxu0 0.0
        %3917 = vmatpush2.xpose.msra.mxu0 0.0
        %3918 = vmatprep.subr.mxu0 0.0
        %3919 = vmatpush2.xpose.msra.mxu0 0.0
        %3920 = vmatprep.subr.mxu0 0.0
        %3921 = vmatpush2.xpose.msra.mxu0 0.0
        %3922 = vmatprep.mubr.f32.mxu0 0.0
        %3923 = vmatmul.mubr.f32.gmra.mxu0 %v3856
        %v3924 = vpop.f32.mrf.mxu0
        %v3925 = vadd.f32 0.0, %v3924
        %v3926 = vpop.f32.mrf.mxu0
        %3927 = vdwg.mxu0
        %v3928 = vmul.f32 %v3925, 0.35355338
        %v3929 = vadd.f32 %v3928, %v1219
        %v3930 = vsel %vm1223, %v3929, -inf
        %3931 = vmax.xlane.f32.xlu0 %v3930
        %v3932 = vpop.xlane.xlu0 %3931
        %v3933 = vsub.f32 %v3929, %v3932
        %v3934 = vmul.f32 %v3933, 1.442695
        %v3935 = vpow.pop %v3934
        %v3936 = vsel %vm1223, %v3935, 0.0
        %3937 = vadd.xlane.f32.xlu0 %v3936
        %v3938 = vpop.xlane.xlu0 %3937
        %v3939 = vrcp.pop %v3938
        %v3940 = vmul.f32 %v3935, %v3939
        %v3941 = vmul.f32 %v3355, %v869
        %v3942 = vmul.f32 %v3358, %v869
        %v3944 = vsel %vm1223, %v3940, 0
        %3946 = vmatprep.subr.mxu0 0.0
        %3947 = vmatpush1.msra.mxu0 0.0
        %3948 = vmatprep.subr.mxu0 0.0
        %3949 = vmatpush1.msra.mxu0 0.0
        %3950 = vmatprep.subr.mxu0 0.0
        %3951 = vmatpush1.msra.mxu0 0.0
        %3952 = vmatprep.subr.mxu0 0.0
        %3953 = vmatpush1.msra.mxu0 0.0
        %3954 = vmatprep.subr.mxu0 0.0
        %3955 = vmatpush1.msra.mxu0 0.0
        %3956 = vmatprep.subr.mxu0 0.0
        %3957 = vmatpush1.msra.mxu0 0.0
        %3958 = vmatprep.subr.mxu0 0.0
        %3959 = vmatpush1.msra.mxu0 0.0
        %3960 = vmatprep.subr.mxu0 0.0
        %3961 = vmatpush1.msra.mxu0 0.0
        %3962 = vmatprep.subr.mxu0 0.0
        %3963 = vmatpush1.msra.mxu0 0.0
        %3964 = vmatprep.subr.mxu0 0.0
        %3965 = vmatpush1.msra.mxu0 0.0
        %3966 = vmatprep.subr.mxu0 0.0
        %3967 = vmatpush1.msra.mxu0 0.0
        %3968 = vmatprep.subr.mxu0 0.0
        %3969 = vmatpush1.msra.mxu0 0.0
        %3970 = vmatprep.subr.mxu0 0.0
        %3971 = vmatpush1.msra.mxu0 0.0
        %3972 = vmatprep.subr.mxu0 0.0
        %3973 = vmatpush1.msra.mxu0 0.0
        %3974 = vmatprep.subr.mxu0 0.0
        %3975 = vmatpush1.msra.mxu0 %v3942
        %3976 = vmatprep.subr.mxu0 0.0
        %3977 = vmatpush1.msra.mxu0 %v3941
        %3978 = vmatprep.subr.mxu0 0.0
        %3979 = vmatpush2.msra.mxu0 0.0
        %3980 = vmatprep.subr.mxu0 0.0
        %3981 = vmatpush2.msra.mxu0 0.0
        %3982 = vmatprep.subr.mxu0 0.0
        %3983 = vmatpush2.msra.mxu0 0.0
        %3984 = vmatprep.subr.mxu0 0.0
        %3985 = vmatpush2.msra.mxu0 0.0
        %3986 = vmatprep.subr.mxu0 0.0
        %3987 = vmatpush2.msra.mxu0 0.0
        %3988 = vmatprep.subr.mxu0 0.0
        %3989 = vmatpush2.msra.mxu0 0.0
        %3990 = vmatprep.subr.mxu0 0.0
        %3991 = vmatpush2.msra.mxu0 0.0
        %3992 = vmatprep.subr.mxu0 0.0
        %3993 = vmatpush2.msra.mxu0 0.0
        %3994 = vmatprep.subr.mxu0 0.0
        %3995 = vmatpush2.msra.mxu0 0.0
        %3996 = vmatprep.subr.mxu0 0.0
        %3997 = vmatpush2.msra.mxu0 0.0
        %3998 = vmatprep.subr.mxu0 0.0
        %3999 = vmatpush2.msra.mxu0 0.0
        %4000 = vmatprep.subr.mxu0 0.0
        %4001 = vmatpush2.msra.mxu0 0.0
        %4002 = vmatprep.subr.mxu0 0.0
        %4003 = vmatpush2.msra.mxu0 0.0
        %4004 = vmatprep.subr.mxu0 0.0
        %4005 = vmatpush2.msra.mxu0 0.0
        %4006 = vmatprep.subr.mxu0 0.0
        %4007 = vmatpush2.msra.mxu0 0.0
        %4008 = vmatprep.subr.mxu0 0.0
        %4009 = vmatpush2.msra.mxu0 0.0
        %4010 = vmatprep.mubr.f32.mxu0 0.0
        %4011 = vmatmul.mubr.f32.gmra.mxu0 %v3944
        %v4012 = vpop.f32.mrf.mxu0
        %v4013 = vadd.f32 0.0, %v4012
        %v4014 = vpop.f32.mrf.mxu0
        %4015 = vdwg.mxu0
        %v4016 = vadd.f32 %v3853, %v4013
        %v4017 = vpack.c.bf16 %v4016, %v4016
        %v4018 = vlaneseq
        %v4019 = vshrl.u32 %v4018, 7
        %v4020 = vsub.s32 3, %v4019
        %v4021 = vrot.slane %v3182, %v4020
        %v4026 = vunpack.c.l.b16 %v3178
        %v4027 = vunpack.c.l.b16 %v3179
        %v4028 = vunpack.c.l.b16 %v3180
        %v4029 = vunpack.c.l.b16 %v3181
        %v4030 = vpack.c.b16 %v4027, %v4026
        %v4031 = vpack.c.b16 %v4029, %v4028
        %v4035 = vsel %vm892, %v4017, 0
        %4037 = vmatprep.subr.bf16.mxu0 0
        %4038 = vmatpush1.bf16.msra.mxu0 0
        %4039 = vmatprep.subr.bf16.mxu0 0
        %4040 = vmatpush1.bf16.msra.mxu0 0
        %4041 = vmatprep.subr.bf16.mxu0 0
        %4042 = vmatpush1.bf16.msra.mxu0 0
        %4043 = vmatprep.subr.bf16.mxu0 0
        %4044 = vmatpush1.bf16.msra.mxu0 0
        %4045 = vmatprep.subr.bf16.mxu0 0
        %4046 = vmatpush1.bf16.msra.mxu0 0
        %4047 = vmatprep.subr.bf16.mxu0 0
        %4048 = vmatpush1.bf16.msra.mxu0 0
        %4049 = vmatprep.subr.bf16.mxu0 0
        %4050 = vmatpush1.bf16.msra.mxu0 %v4031
        %4051 = vmatprep.subr.bf16.mxu0 0
        %4052 = vmatpush1.bf16.msra.mxu0 %v4030
        %4053 = vmatprep.subr.bf16.mxu0 0
        %4054 = vmatpush2.bf16.msra.mxu0 0
        %4055 = vmatprep.subr.bf16.mxu0 0
        %4056 = vmatpush2.bf16.msra.mxu0 0
        %4057 = vmatprep.subr.bf16.mxu0 0
        %4058 = vmatpush2.bf16.msra.mxu0 0
        %4059 = vmatprep.subr.bf16.mxu0 0
        %4060 = vmatpush2.bf16.msra.mxu0 0
        %4061 = vmatprep.subr.bf16.mxu0 0
        %4062 = vmatpush2.bf16.msra.mxu0 0
        %4063 = vmatprep.subr.bf16.mxu0 0
        %4064 = vmatpush2.bf16.msra.mxu0 0
        %4065 = vmatprep.subr.bf16.mxu0 0
        %4066 = vmatpush2.bf16.msra.mxu0 0
        %4067 = vmatprep.subr.bf16.mxu0 0
        %4068 = vmatpush2.bf16.msra.mxu0 0
        %4069 = vmatprep.mubr.bf16.mxu0 0
        %4070 = vmatmul.mubr.bf16.gmra.mxu0 %v4035
        %v4071 = vpop.f32.mrf.mxu0
        %v4072 = vadd.f32 %v4021, %v4071
        %v4073 = vpop.f32.mrf.mxu0
        %v4074 = vpop.f32.mrf.mxu0
        %v4075 = vpop.f32.mrf.mxu0
        %4076 = vdwg.mxu0
        %v4077 = vadd.f32 %v3165, %v4072
        %v4078 = vsel %vm892, %v4077, 0.0
        %4079 = vadd.xlane.f32.xlu0 %v4078
        %v4080 = vpop.xlane.xlu0 %4079
        %v4081 = vmul.f32 %v4080, %v899
        %v4082 = vsub.f32 %v4077, %v4081
        %v4083 = vmul.f32 %v4082, %v4082
        %v4084 = vsel %vm892, %v4083, 0.0
        %4085 = vadd.xlane.f32.xlu0 %v4084
        %v4086 = vpop.xlane.xlu0 %4085
        %v4087 = vmul.f32 %v4086, %v899
        %v4088 = vadd.f32 %v4087, 1e-12
        %v4089 = vrsqrt.pop %v4088
        %v4090 = vmul.f32 %v4082, %v4089
        %v4091 = vlaneseq
        %v4092 = vshrl.u32 %v4091, 7
        %v4093 = vsub.s32 4, %v4092
        %v4094 = vrot.slane %v3182, %v4093
        %v4095 = vmul.f32 %v4090, %v4094
        %v4096 = vlaneseq
        %v4097 = vshrl.u32 %v4096, 7
        %v4098 = vsub.s32 5, %v4097
        %v4099 = vrot.slane %v3182, %v4098
        %v4100 = vadd.f32 %v4095, %v4099
        %v4101 = vld [vmem:[%s15] sm:$0xf]
        %v4102 = vld [vmem:[%s15 + $0x4] sm:$0xf]
        %v4103 = vld [vmem:[%s15 + $0x8] sm:$0xf]
        %v4104 = vld [vmem:[%s15 + $0xc] sm:$0xf]
        %v4105 = vld [vmem:[%s16] sm:$0x1]
        %v4106 = vld [vmem:[%s17] sm:$0xf]
        %v4107 = vld [vmem:[%s17 + $0x4] sm:$0xf]
        %v4108 = vld [vmem:[%s17 + $0x8] sm:$0xf]
        %v4109 = vld [vmem:[%s17 + $0xc] sm:$0xf]
        %v4110 = vld [vmem:[%s17 + $0x10] sm:$0xf]
        %v4111 = vld [vmem:[%s17 + $0x14] sm:$0xf]
        %v4112 = vld [vmem:[%s17 + $0x18] sm:$0xf]
        %v4113 = vld [vmem:[%s17 + $0x1c] sm:$0xf]
        %v4114 = vld [vmem:[%s18] sm:$0x7]
        %v4115 = vpack.c.bf16 %v4100, %v4100
        %v4117 = vlaneseq
        %v4118 = vshrl.u32 %v4117, 7
        %v4119 = vsub.s32 0, %v4118
        %v4120 = vrot.slane %v4105, %v4119
        %v4126 = vunpack.c.l.b16 %v4101
        %v4127 = vunpack.c.l.b16 %v4102
        %v4128 = vunpack.c.l.b16 %v4103
        %v4129 = vunpack.c.l.b16 %v4104
        %v4130 = vpack.c.b16 %v4127, %v4126
        %v4131 = vpack.c.b16 %v4129, %v4128
        %v4135 = vsel %vm892, %v4115, 0
        %4137 = vmatprep.subr.bf16.mxu0 0
        %4138 = vmatpush1.bf16.msra.mxu0 0
        %4139 = vmatprep.subr.bf16.mxu0 0
        %4140 = vmatpush1.bf16.msra.mxu0 0
        %4141 = vmatprep.subr.bf16.mxu0 0
        %4142 = vmatpush1.bf16.msra.mxu0 0
        %4143 = vmatprep.subr.bf16.mxu0 0
        %4144 = vmatpush1.bf16.msra.mxu0 0
        %4145 = vmatprep.subr.bf16.mxu0 0
        %4146 = vmatpush1.bf16.msra.mxu0 0
        %4147 = vmatprep.subr.bf16.mxu0 0
        %4148 = vmatpush1.bf16.msra.mxu0 0
        %4149 = vmatprep.subr.bf16.mxu0 0
        %4150 = vmatpush1.bf16.msra.mxu0 %v4131
        %4151 = vmatprep.subr.bf16.mxu0 0
        %4152 = vmatpush1.bf16.msra.mxu0 %v4130
        %4153 = vmatprep.subr.bf16.mxu0 0
        %4154 = vmatpush2.bf16.msra.mxu0 0
        %4155 = vmatprep.subr.bf16.mxu0 0
        %4156 = vmatpush2.bf16.msra.mxu0 0
        %4157 = vmatprep.subr.bf16.mxu0 0
        %4158 = vmatpush2.bf16.msra.mxu0 0
        %4159 = vmatprep.subr.bf16.mxu0 0
        %4160 = vmatpush2.bf16.msra.mxu0 0
        %4161 = vmatprep.subr.bf16.mxu0 0
        %4162 = vmatpush2.bf16.msra.mxu0 0
        %4163 = vmatprep.subr.bf16.mxu0 0
        %4164 = vmatpush2.bf16.msra.mxu0 0
        %4165 = vmatprep.subr.bf16.mxu0 0
        %4166 = vmatpush2.bf16.msra.mxu0 0
        %4167 = vmatprep.subr.bf16.mxu0 0
        %4168 = vmatpush2.bf16.msra.mxu0 0
        %4169 = vmatprep.mubr.bf16.mxu0 0
        %4170 = vmatmul.mubr.bf16.gmra.mxu0 %v4135
        %v4171 = vpop.f32.mrf.mxu0
        %v4172 = vadd.f32 %v4120, %v4171
        %v4173 = vpop.f32.mrf.mxu0
        %v4174 = vpop.f32.mrf.mxu0
        %v4175 = vpop.f32.mrf.mxu0
        %4176 = vdwg.mxu0
        %v4177 = vmul.f32 %v4172, %v4172
        %v4178 = vmul.f32 %v4172, %v4177
        %v4179 = vmul.f32 %v4178, 0.044715
        %v4180 = vadd.f32 %v4172, %v4179
        %v4181 = vmul.f32 %v4180, 0.7978846
        %v4182 = vtanh.pop %v4181
        %v4183 = vadd.f32 %v4182, 1.0
        %v4184 = vmul.f32 %v4183, 0.5
        %v4185 = vmul.f32 %v4172, %v4184
        %v4186 = vpack.c.bf16 %v4185, %v4185
        %v4187 = vlaneseq
        %v4188 = vshrl.u32 %v4187, 7
        %v4189 = vsub.s32 0, %v4188
        %v4190 = vrot.slane %v4114, %v4189
        %v4199 = vunpack.c.l.b16 %v4106
        %v4200 = vunpack.c.l.b16 %v4107
        %v4201 = vunpack.c.l.b16 %v4108
        %v4202 = vunpack.c.l.b16 %v4109
        %v4203 = vunpack.c.l.b16 %v4110
        %v4204 = vunpack.c.l.b16 %v4111
        %v4205 = vunpack.c.l.b16 %v4112
        %v4206 = vunpack.c.l.b16 %v4113
        %v4207 = vpack.c.b16 %v4200, %v4199
        %v4208 = vpack.c.b16 %v4202, %v4201
        %v4209 = vpack.c.b16 %v4204, %v4203
        %v4210 = vpack.c.b16 %v4206, %v4205
        %v4216 = vsel %vm2134, %v4186, 0
        %4218 = vmatprep.subr.bf16.mxu0 0
        %4219 = vmatpush1.bf16.msra.mxu0 0
        %4220 = vmatprep.subr.bf16.mxu0 0
        %4221 = vmatpush1.bf16.msra.mxu0 0
        %4222 = vmatprep.subr.bf16.mxu0 0
        %4223 = vmatpush1.bf16.msra.mxu0 0
        %4224 = vmatprep.subr.bf16.mxu0 0
        %4225 = vmatpush1.bf16.msra.mxu0 0
        %4226 = vmatprep.subr.bf16.mxu0 0
        %4227 = vmatpush1.bf16.msra.mxu0 %v4210
        %4228 = vmatprep.subr.bf16.mxu0 0
        %4229 = vmatpush1.bf16.msra.mxu0 %v4209
        %4230 = vmatprep.subr.bf16.mxu0 0
        %4231 = vmatpush1.bf16.msra.mxu0 %v4208
        %4232 = vmatprep.subr.bf16.mxu0 0
        %4233 = vmatpush1.bf16.msra.mxu0 %v4207
        %4234 = vmatprep.subr.bf16.mxu0 0
        %4235 = vmatpush2.bf16.msra.mxu0 0
        %4236 = vmatprep.subr.bf16.mxu0 0
        %4237 = vmatpush2.bf16.msra.mxu0 0
        %4238 = vmatprep.subr.bf16.mxu0 0
        %4239 = vmatpush2.bf16.msra.mxu0 0
        %4240 = vmatprep.subr.bf16.mxu0 0
        %4241 = vmatpush2.bf16.msra.mxu0 0
        %4242 = vmatprep.subr.bf16.mxu0 0
        %4243 = vmatpush2.bf16.msra.mxu0 0
        %4244 = vmatprep.subr.bf16.mxu0 0
        %4245 = vmatpush2.bf16.msra.mxu0 0
        %4246 = vmatprep.subr.bf16.mxu0 0
        %4247 = vmatpush2.bf16.msra.mxu0 0
        %4248 = vmatprep.subr.bf16.mxu0 0
        %4249 = vmatpush2.bf16.msra.mxu0 0
        %4250 = vmatprep.mubr.bf16.mxu0 0
        %4251 = vmatmul.mubr.bf16.gmra.mxu0 %v4216
        %v4252 = vpop.f32.mrf.mxu0
        %v4253 = vadd.f32 %v4190, %v4252
        %v4254 = vpop.f32.mrf.mxu0
        %v4255 = vpop.f32.mrf.mxu0
        %v4256 = vpop.f32.mrf.mxu0
        %4257 = vdwg.mxu0
        %v4258 = vadd.f32 %v4100, %v4253
        %v4259 = vsel %vm892, %v4258, 0.0
        %4260 = vadd.xlane.f32.xlu0 %v4259
        %v4261 = vpop.xlane.xlu0 %4260
        %v4262 = vmul.f32 %v4261, %v899
        %v4263 = vsub.f32 %v4258, %v4262
        %v4264 = vmul.f32 %v4263, %v4263
        %v4265 = vsel %vm892, %v4264, 0.0
        %4266 = vadd.xlane.f32.xlu0 %v4265
        %v4267 = vpop.xlane.xlu0 %4266
        %v4268 = vmul.f32 %v4267, %v899
        %v4269 = vadd.f32 %v4268, 1e-12
        %v4270 = vrsqrt.pop %v4269
        %v4271 = vmul.f32 %v4263, %v4270
        %v4272 = vlaneseq
        %v4273 = vshrl.u32 %v4272, 7
        %v4274 = vsub.s32 1, %v4273
        %v4275 = vrot.slane %v4114, %v4274
        %v4276 = vmul.f32 %v4271, %v4275
        %v4277 = vlaneseq
        %v4278 = vshrl.u32 %v4277, 7
        %v4279 = vsub.s32 2, %v4278
        %v4280 = vrot.slane %v4114, %v4279
        %v4281 = vadd.f32 %v4276, %v4280
        %v4282 = vpack.c.bf16 %v4281, %v4281
        %v4283 = vld [vmem:[#allocation16] sm:$0xf]
        %v4284 = vld [vmem:[#allocation16 + $0x4] sm:$0xf]
        %v4285 = vld [vmem:[#allocation16 + $0x8] sm:$0xf]
        %v4286 = vld [vmem:[#allocation16 + $0xc] sm:$0xf]
        %v4287 = vld [vmem:[%s20] sm:$0x1]
        %v4289 = vlaneseq
        %v4290 = vshrl.u32 %v4289, 7
        %v4291 = vsub.s32 0, %v4290
        %v4292 = vrot.slane %v4287, %v4291
        %v4298 = vunpack.c.l.b16 %v4283
        %v4299 = vunpack.c.l.b16 %v4284
        %v4300 = vunpack.c.l.b16 %v4285
        %v4301 = vunpack.c.l.b16 %v4286
        %v4302 = vpack.c.b16 %v4299, %v4298
        %v4303 = vpack.c.b16 %v4301, %v4300
        %v4307 = vsel %vm892, %v4282, 0
        %4309 = vmatprep.subr.bf16.mxu0 0
        %4310 = vmatpush1.bf16.msra.mxu0 0
        %4311 = vmatprep.subr.bf16.mxu0 0
        %4312 = vmatpush1.bf16.msra.mxu0 0
        %4313 = vmatprep.subr.bf16.mxu0 0
        %4314 = vmatpush1.bf16.msra.mxu0 0
        %4315 = vmatprep.subr.bf16.mxu0 0
        %4316 = vmatpush1.bf16.msra.mxu0 0
        %4317 = vmatprep.subr.bf16.mxu0 0
        %4318 = vmatpush1.bf16.msra.mxu0 0
        %4319 = vmatprep.subr.bf16.mxu0 0
        %4320 = vmatpush1.bf16.msra.mxu0 0
        %4321 = vmatprep.subr.bf16.mxu0 0
        %4322 = vmatpush1.bf16.msra.mxu0 %v4303
        %4323 = vmatprep.subr.bf16.mxu0 0
        %4324 = vmatpush1.bf16.msra.mxu0 %v4302
        %4325 = vmatprep.subr.bf16.mxu0 0
        %4326 = vmatpush2.bf16.msra.mxu0 0
        %4327 = vmatprep.subr.bf16.mxu0 0
        %4328 = vmatpush2.bf16.msra.mxu0 0
        %4329 = vmatprep.subr.bf16.mxu0 0
        %4330 = vmatpush2.bf16.msra.mxu0 0
        %4331 = vmatprep.subr.bf16.mxu0 0
        %4332 = vmatpush2.bf16.msra.mxu0 0
        %4333 = vmatprep.subr.bf16.mxu0 0
        %4334 = vmatpush2.bf16.msra.mxu0 0
        %4335 = vmatprep.subr.bf16.mxu0 0
        %4336 = vmatpush2.bf16.msra.mxu0 0
        %4337 = vmatprep.subr.bf16.mxu0 0
        %4338 = vmatpush2.bf16.msra.mxu0 0
        %4339 = vmatprep.subr.bf16.mxu0 0
        %4340 = vmatpush2.bf16.msra.mxu0 0
        %4341 = vmatprep.mubr.bf16.mxu0 0
        %4342 = vmatmul.mubr.bf16.gmra.mxu0 %v4307
        %v4343 = vpop.f32.mrf.mxu0
        %v4344 = vadd.f32 %v4292, %v4343
        %v4345 = vpop.f32.mrf.mxu0
        %v4346 = vpop.f32.mrf.mxu0
        %v4347 = vpop.f32.mrf.mxu0
        %4348 = vdwg.mxu0
        %4349 = vst [vmem:[%s846] sm:$0xff] %v4344
        %s4350 = sand.u32 %s515, 1
        %s4351 = scalar_lea.sflag [#allocation4], %s4350
        %s4352 = sand.u32 %s515, 1
        %s4353 = smul.addr %s4352, 8
        %s4354 = scalar_lea.vmem [#allocation17], %s4353
        // Predicated region
        $region141: #{tpu_custom_call.1} parent=103 // pred_check
          %p4355 = pneg %p525
        $region142: #{tpu_custom_call.1} parent=103 // pred_check_branch
          %4357 = sbr.rel (%p4355) target = $region144
        $region143: #{tpu_custom_call.1} parent=103 // pred_region
          %s4359 = ssub.s32 128, 128
          %4360 = vsyncadd %s4351, %s4359
          %s4361 = smul.addr %s46, 128
          %s4362 = scalar_lea.hbm %s21, %s4361
          %s4364 = sshll.u32 %s4354, 4
          %s4365 = int_to_ptr.vmem [resolvable:$true] %s4364
          %4367 = dma.vmem_to_hbm [thread:$0]  %s4365, 128, %s4362, %s4351
        $region144: #{tpu_custom_call.1} parent=103 // pred_fallthru
          _
      $region104: #{tpu_custom_call.1} parent=5 // pred_fallthru
        _
      %p4368 = scmp.le.s32.totalorder 2, %s41
      // Predicated region
      $region145: #{tpu_custom_call.1} parent=5 // pred_check
        %p4369 = pneg %p4368
      $region146: #{tpu_custom_call.1} parent=5 // pred_check_branch
        %4371 = sbr.rel (%p4369) target = $region148
      $region147: #{tpu_custom_call.1} parent=5 // pred_region
        %s4372 = ssub.s32 %s41, 2
        // Predicated region
        $region149: #{tpu_custom_call.1} parent=147 // pred_check
          %p4373 = pneg %p531
        $region150: #{tpu_custom_call.1} parent=147 // pred_check_branch
          %4375 = sbr.rel (%p4373) target = $region152
        $region151: #{tpu_custom_call.1} parent=147 // pred_region
          %s4376 = sand.u32 %s516, 1
          %s4377 = scalar_lea.sflag [#allocation4], %s4376
          %s4378 = sand.u32 %s516, 1
          %s4379 = smul.addr %s4378, 8
          %s4380 = scalar_lea.vmem [#allocation17], %s4379
          %4381 = dma.done %s4377, 128
        $region152: #{tpu_custom_call.1} parent=147 // pred_fallthru
          _
      $region148: #{tpu_custom_call.1} parent=5 // pred_fallthru
        _
    $region6: #{tpu_custom_call.1} parent=1 // loop_footer
      %s45 = sadd.s32 1, %s41
    $region7: #{tpu_custom_call.1} parent=1 // loop_footer_branch
      %40 = sbr.rel target = $region3
    $region8: #{tpu_custom_call.1} parent=1 // loop_exit
      _
    %4382 = vsyncpa [#allocation3], 1
    %s4383 = scalar_lea.sflag [#allocation3], 1
    %4384 = vsyncpa %s4383, 1
    %4385 = vsyncpa [#allocation6], 1
    %s4386 = scalar_lea.sflag [#allocation6], 1
    %4387 = vsyncpa %s4386, 1
    %4388 = vsyncpa [#allocation9], 1
    %s4389 = scalar_lea.sflag [#allocation9], 1
    %4390 = vsyncpa %s4389, 1
    %4391 = vsyncpa [#allocation12], 1
    %4392 = vsyncpa [#allocation15], 1
    %4393 = vsyncpa [#allocation4], 1
    %s4394 = scalar_lea.sflag [#allocation4], 1
    %4395 = vsyncpa %s4394, 1

</llo_original>
